<compile_context>
chip_gen: v7x
topology: tpu7x:2x2x1
jax: 0.10.0
libtpu: 0.0.40
codegen_flags: <defaults>
</compile_context>

<pallas_src>
import jax
import jax.numpy as jnp
from jax import lax
from jax.experimental import pallas as pl
from jax.experimental.pallas import tpu as pltpu

NUM_FEATURES = 16
EPS = 1e-5            # BatchNorm3d default eps
KSIZE = 5
PAD = 2
LANES = 128
GROUP = LANES // NUM_FEATURES   # 8 spatial positions packed per 128-lane dense row


def _round_up(x, m):
    return ((x + m - 1) // m) * m


def input_transition_forward(x_ncdhw, conv_w, conv_b, gamma, beta,
                             dense_tile_rows=4096):
    """x_ncdhw: (N, C, D, H, W) float32 (PyTorch layout). Returns (N, 16, D, H, W)."""
    del conv_b  # exactly cancelled by training-mode BatchNorm's batch-mean subtraction
    N, C, D, H, W = x_ncdhw.shape
    assert NUM_FEATURES % C == 0
    # TODO(synk): support W not a multiple of 8 (pad W inside the conv tile) and tile
    # H with an extra grid axis for large H*W volumes (v7x 64 MiB VMEM budget).
    assert W % 8 == 0
    HW = H * W
    M = N * D * HW
    KC = KSIZE * KSIZE * KSIZE * C          # full contraction length (kd folded in)
    KPAD = _round_up(KC, LANES)             # lane-aligned, zero-padded K

    x = jnp.transpose(x_ncdhw, (0, 2, 3, 4, 1)).astype(jnp.float32)          # NDHWC
    # TODO(synk): handle the halo in-kernel (clamped index_map + masked taps) to avoid
    # materializing this padded copy of the input in HBM.
    xpad = jnp.pad(x, ((0, 0), (PAD, PAD), (PAD, PAD), (PAD, PAD), (0, 0)))

    # Weight (O, C, KD, KH, KW) -> (KD, KH, KW, C, O) -> (KC, 16) -> zero-pad K.
    # Column order matches the in-kernel patch order: (kd, kh, kw, c) with c fastest.
    w_mat = jnp.transpose(conv_w, (2, 3, 4, 1, 0)).astype(jnp.float32)
    w_mat = w_mat.reshape(KC, NUM_FEATURES)
    w_mat = jnp.pad(w_mat, ((0, KPAD - KC), (0, 0)))

    # -------- pass 1: conv (kd folded, single long-K matmul) + fused BN partial stats --------
    def conv_stats_kernel(*refs):
        x_refs = refs[:KSIZE]                                  # 5 padded depth slabs
        w_ref, o_ref, ps_ref, pq_ref = refs[KSIZE:]
        # Build the (HW, KPAD) patch matrix in VMEM.
        # TODO(synk): lane-dense patch construction (flatten (W+4, C) onto lanes / use
        # pltpu.roll) -- with C in 1..4 these intermediate slices use only C lanes.
        cols = []
        for x_ref in x_refs:
            slab = x_ref[0, 0]                                 # (H+4, W+4, C)
            for kh in range(KSIZE):
                for kw in range(KSIZE):
                    cols.append(slab[kh:kh + H, kw:kw + W, :].reshape(HW, C))
        if KPAD > KC:
            cols.append(jnp.zeros((HW, KPAD - KC), jnp.float32))
        patches = jnp.concatenate(cols, axis=-1)               # (HW, KPAD)
        conv = jnp.dot(patches, w_ref[...],
                       preferred_element_type=jnp.float32)     # (HW, 16)
        # TODO(synk): repack to a (HW//8, 128) lane-dense output block once the
        # in-kernel relayout is validated; kept (HW, 16) here for robustness.
        o_ref[0, 0] = conv
        # BN partial sums fused so the feature map is touched exactly twice overall.
        ps_ref[0, 0] = jnp.sum(conv, axis=0, keepdims=True)
        pq_ref[0, 0] = jnp.sum(conv * conv, axis=0, keepdims=True)

    def slab_spec(kd):
        # Depth block size is 1, so the block index along depth is an element offset.
        return pl.BlockSpec((1, 1, H + 2 * PAD, W + 2 * PAD, C),
                            lambda n, d, kd=kd: (n, d + kd, 0, 0, 0))

    conv_out, psum, psq = pl.pallas_call(
        conv_stats_kernel,
        out_shape=(jax.ShapeDtypeStruct((N, D, HW, NUM_FEATURES), jnp.float32),
                   jax.ShapeDtypeStruct((N, D, 1, NUM_FEATURES), jnp.float32),
                   jax.ShapeDtypeStruct((N, D, 1, NUM_FEATURES), jnp.float32)),
        grid_spec=pltpu.PrefetchScalarGridSpec(
            num_scalar_prefetch=0,
            grid=(N, D),
            in_specs=[slab_spec(kd) for kd in range(KSIZE)] + [
                # Full-array weight block with a constant index_map -> resident in VMEM.
                pl.BlockSpec((KPAD, NUM_FEATURES), lambda n, d: (0, 0)),
            ],
            out_specs=(
                pl.BlockSpec((1, 1, HW, NUM_FEATURES), lambda n, d: (n, d, 0, 0)),
                pl.BlockSpec((1, 1, 1, NUM_FEATURES), lambda n, d: (n, d, 0, 0)),
                pl.BlockSpec((1, 1, 1, NUM_FEATURES), lambda n, d: (n, d, 0, 0)),
            )),
        compiler_params=pltpu.CompilerParams(
            dimension_semantics=("parallel", "parallel"),
            vmem_limit_bytes=32 * 1024 * 1024),
    )(*([xpad] * KSIZE), w_mat)

    # -------- BN statistics -> per-channel scale / shift (tiny XLA reduction) --------
    s = jnp.sum(psum, axis=(0, 1, 2))
    q = jnp.sum(psq, axis=(0, 1, 2))
    mean = s / float(M)
    # NOTE: single-pass E[x^2]-E[x]^2 (clamped at 0, biased var as PyTorch training BN
    # uses).  A centered two-term accumulation would be safer for ill-conditioned data.
    var = jnp.maximum(q / float(M) - mean * mean, 0.0)
    scale = gamma.astype(jnp.float32) * lax.rsqrt(var + EPS)
    shift = beta.astype(jnp.float32) - mean * scale
    scale_row = jnp.tile(scale, GROUP).reshape(1, LANES)
    shift_row = jnp.tile(shift, GROUP).reshape(1, LANES)

    # 0/1 block-diagonal selection matrix (8*C, 128): row g*C + c feeds lanes
    # g*16 + o whenever o % C == c, so the x16 channel-repeat becomes one MXU matmul.
    base = (jnp.arange(NUM_FEATURES)[None, :] % C ==
            jnp.arange(C)[:, None]).astype(jnp.float32)            # (C, 16)
    sel = jnp.kron(jnp.eye(GROUP, dtype=jnp.float32), base)        # (8*C, 128)

    # -------- pass 2: lane-dense fused scale/shift + residual repeat + ELU --------
    R = (M * NUM_FEATURES) // LANES                # = M // 8
    conv_dense = conv_out.reshape(R, LANES)        # free contiguous reshape
    x_rows = x.reshape(R, GROUP * C)               # free contiguous reshape of NDHWC

    # Bounded tile + cdiv grid (no full-R fallback that could blow VMEM).
    tr = min(dense_tile_rows, _round_up(R, 8))

    def bn_add_elu_kernel(c_ref, x_ref, s_ref, sc_ref, sh_ref, o_ref):
        # Channel-repeat residual via the selection matmul (MXU is idle otherwise).
        x16 = jnp.dot(x_ref[...], s_ref[...],
                      preferred_element_type=jnp.float32)          # (tr, 128)
        z = c_ref[...] * sc_ref[...] + sh_ref[...] + x16
        # ELU(alpha=1); clamp the exp argument so the untaken branch stays finite.
        o_ref[...] = jnp.where(z > 0, z, jnp.exp(jnp.minimum(z, 0.0)) - 1.0)

    y_dense = pl.pallas_call(
        bn_add_elu_kernel,
        out_shape=jax.ShapeDtypeStruct((R, LANES), jnp.float32),
        grid_spec=pltpu.PrefetchScalarGridSpec(
            num_scalar_prefetch=0,
            grid=(pl.cdiv(R, tr),),
            in_specs=[
                pl.BlockSpec((tr, LANES), lambda i: (i, 0)),
                pl.BlockSpec((tr, GROUP * C), lambda i: (i, 0)),
                pl.BlockSpec((GROUP * C, LANES), lambda i: (0, 0)),   # resident
                pl.BlockSpec((1, LANES), lambda i: (0, 0)),
                pl.BlockSpec((1, LANES), lambda i: (0, 0)),
            ],
            out_specs=pl.BlockSpec((tr, LANES), lambda i: (i, 0))),
        compiler_params=pltpu.CompilerParams(
            dimension_semantics=("parallel",),
            vmem_limit_bytes=32 * 1024 * 1024),
    )(conv_dense, x_rows, sel, scale_row, shift_row)

    # TODO(synk): bf16 conv_out intermediate (halves the HBM round-trip on v6e/v7x).
    y = y_dense.reshape(N, D, H, W, NUM_FEATURES)
    return jnp.transpose(y, (0, 4, 1, 2, 3))       # back to PyTorch NCDHW


# -------------------- pure-JAX reference (sanity check) --------------------

def reference_forward(x_ncdhw, conv_w, conv_b, gamma, beta):
    x = jnp.transpose(x_ncdhw, (0, 2, 3, 4, 1)).astype(jnp.float32)      # NDHWC
    w = jnp.transpose(conv_w, (2, 3, 4, 1, 0)).astype(jnp.float32)       # DHWIO
    out = lax.conv_general_dilated(
        x, w, window_strides=(1, 1, 1), padding=[(PAD, PAD)] * 3,
        dimension_numbers=("NDHWC", "DHWIO", "NDHWC")) + conv_b
    mean = jnp.mean(out, axis=(0, 1, 2, 3), keepdims=True)
    var = jnp.mean((out - mean) ** 2, axis=(0, 1, 2, 3), keepdims=True)
    norm = (out - mean) * lax.rsqrt(var + EPS) * gamma + beta
    r = NUM_FEATURES // x_ncdhw.shape[1]
    x16 = jnp.tile(x, (1, 1, 1, 1, r))
    z = norm + x16
    y = jnp.where(z > 0, z, jnp.exp(jnp.minimum(z, 0.0)) - 1.0)
    return jnp.transpose(y, (0, 4, 1, 2, 3))


# -------------------- main --------------------

if __name__ == "__main__":
    # Small shapes consistent with the module (in_channels must divide 16).
    N, C, D, H, W = 2, 4, 8, 8, 8

    key = jax.random.PRNGKey(0)
    k_x, k_w, k_b = jax.random.split(key, 3)

    x = jax.random.normal(k_x, (N, C, D, H, W), dtype=jnp.float32)

    conv_w = 0.05 * jax.random.normal(k_w, (NUM_FEATURES, C, KSIZE, KSIZE, KSIZE),
                                      dtype=jnp.float32)
    conv_b = 0.05 * jax.random.normal(k_b, (NUM_FEATURES,), dtype=jnp.float32)
    gamma = jnp.ones((NUM_FEATURES,), dtype=jnp.float32)   # BN weight default
    beta = jnp.zeros((NUM_FEATURES,), dtype=jnp.float32)   # BN bias default

    y = input_transition_forward(x, conv_w, conv_b, gamma, beta)
    y = jax.block_until_ready(y)

    y_ref = reference_forward(x, conv_w, conv_b, gamma, beta)
    assert y.shape == (N, NUM_FEATURES, D, H, W)
    assert jnp.allclose(y, y_ref, atol=2e-2, rtol=2e-2), "mismatch vs reference"

    print("KERNEL_OK")
</pallas_src>

<mosaic_0001>
module attributes {stable_mosaic.version = 11 : i64} {
  func.func @conv_stats_kernel(%arg0: i32, %arg1: i32, %arg2: memref<1x1x12x12x4xf32, #tpu.memory_space<vmem>>, %arg3: memref<1x1x12x12x4xf32, #tpu.memory_space<vmem>>, %arg4: memref<1x1x12x12x4xf32, #tpu.memory_space<vmem>>, %arg5: memref<1x1x12x12x4xf32, #tpu.memory_space<vmem>>, %arg6: memref<1x1x12x12x4xf32, #tpu.memory_space<vmem>>, %arg7: memref<512x16xf32, #tpu.memory_space<vmem>>, %arg8: memref<1x1x64x16xf32, #tpu.memory_space<vmem>>, %arg9: memref<1x1x1x16xf32, #tpu.memory_space<vmem>>, %arg10: memref<1x1x1x16xf32, #tpu.memory_space<vmem>>) attributes {dimension_semantics = [#tpu.dimension_semantics<parallel>, #tpu.dimension_semantics<parallel>], iteration_bounds = array<i64: 2, 8>, scalar_prefetch = 0 : i64, scratch_operands = 0 : i64, tpu.core_type = #tpu.core_type<tc>, window_params = [{transform_indices = @transform_0, window_bounds = array<i64: 1, 1, 12, 12, 4>}, {transform_indices = @transform_1, window_bounds = array<i64: 1, 1, 12, 12, 4>}, {transform_indices = @transform_2, window_bounds = array<i64: 1, 1, 12, 12, 4>}, {transform_indices = @transform_3, window_bounds = array<i64: 1, 1, 12, 12, 4>}, {transform_indices = @transform_4, window_bounds = array<i64: 1, 1, 12, 12, 4>}, {pipeline_mode = #tpu.pipeline_mode<synchronous>, transform_indices = @transform_5, window_bounds = array<i64: 512, 16>}, {transform_indices = @transform_6, window_bounds = array<i64: 1, 1, 64, 16>}, {transform_indices = @transform_7, window_bounds = array<i64: 1, 1, 1, 16>}, {transform_indices = @transform_8, window_bounds = array<i64: 1, 1, 1, 16>}]} {
    %c0 = arith.constant 0 : index
    %c0_0 = arith.constant 0 : index
    %c0_1 = arith.constant 0 : index
    %c0_2 = arith.constant 0 : index
    %c0_3 = arith.constant 0 : index
    %0 = vector.load %arg2[%c0, %c0_0, %c0_1, %c0_2, %c0_3] : memref<1x1x12x12x4xf32, #tpu.memory_space<vmem>>, vector<1x1x12x12x4xf32>
    %1 = vector.shape_cast %0 : vector<1x1x12x12x4xf32> to vector<12x12x4xf32>
    %2 = vector.extract_strided_slice %1 {offsets = [0, 0, 0], sizes = [8, 8, 4], strides = [1, 1, 1]} : vector<12x12x4xf32> to vector<8x8x4xf32>
    %3 = vector.shape_cast %2 : vector<8x8x4xf32> to vector<64x4xf32>
    %4 = vector.extract_strided_slice %1 {offsets = [0, 1, 0], sizes = [8, 8, 4], strides = [1, 1, 1]} : vector<12x12x4xf32> to vector<8x8x4xf32>
    %5 = vector.shape_cast %4 : vector<8x8x4xf32> to vector<64x4xf32>
    %6 = vector.extract_strided_slice %1 {offsets = [0, 2, 0], sizes = [8, 8, 4], strides = [1, 1, 1]} : vector<12x12x4xf32> to vector<8x8x4xf32>
    %7 = vector.shape_cast %6 : vector<8x8x4xf32> to vector<64x4xf32>
    %8 = vector.extract_strided_slice %1 {offsets = [0, 3, 0], sizes = [8, 8, 4], strides = [1, 1, 1]} : vector<12x12x4xf32> to vector<8x8x4xf32>
    %9 = vector.shape_cast %8 : vector<8x8x4xf32> to vector<64x4xf32>
    %10 = vector.extract_strided_slice %1 {offsets = [0, 4, 0], sizes = [8, 8, 4], strides = [1, 1, 1]} : vector<12x12x4xf32> to vector<8x8x4xf32>
    %11 = vector.shape_cast %10 : vector<8x8x4xf32> to vector<64x4xf32>
    %12 = vector.extract_strided_slice %1 {offsets = [1, 0, 0], sizes = [8, 8, 4], strides = [1, 1, 1]} : vector<12x12x4xf32> to vector<8x8x4xf32>
    %13 = vector.shape_cast %12 : vector<8x8x4xf32> to vector<64x4xf32>
    %14 = vector.extract_strided_slice %1 {offsets = [1, 1, 0], sizes = [8, 8, 4], strides = [1, 1, 1]} : vector<12x12x4xf32> to vector<8x8x4xf32>
    %15 = vector.shape_cast %14 : vector<8x8x4xf32> to vector<64x4xf32>
    %16 = vector.extract_strided_slice %1 {offsets = [1, 2, 0], sizes = [8, 8, 4], strides = [1, 1, 1]} : vector<12x12x4xf32> to vector<8x8x4xf32>
    %17 = vector.shape_cast %16 : vector<8x8x4xf32> to vector<64x4xf32>
    %18 = vector.extract_strided_slice %1 {offsets = [1, 3, 0], sizes = [8, 8, 4], strides = [1, 1, 1]} : vector<12x12x4xf32> to vector<8x8x4xf32>
    %19 = vector.shape_cast %18 : vector<8x8x4xf32> to vector<64x4xf32>
    %20 = vector.extract_strided_slice %1 {offsets = [1, 4, 0], sizes = [8, 8, 4], strides = [1, 1, 1]} : vector<12x12x4xf32> to vector<8x8x4xf32>
    %21 = vector.shape_cast %20 : vector<8x8x4xf32> to vector<64x4xf32>
    %22 = vector.extract_strided_slice %1 {offsets = [2, 0, 0], sizes = [8, 8, 4], strides = [1, 1, 1]} : vector<12x12x4xf32> to vector<8x8x4xf32>
    %23 = vector.shape_cast %22 : vector<8x8x4xf32> to vector<64x4xf32>
    %24 = vector.extract_strided_slice %1 {offsets = [2, 1, 0], sizes = [8, 8, 4], strides = [1, 1, 1]} : vector<12x12x4xf32> to vector<8x8x4xf32>
    %25 = vector.shape_cast %24 : vector<8x8x4xf32> to vector<64x4xf32>
    %26 = vector.extract_strided_slice %1 {offsets = [2, 2, 0], sizes = [8, 8, 4], strides = [1, 1, 1]} : vector<12x12x4xf32> to vector<8x8x4xf32>
    %27 = vector.shape_cast %26 : vector<8x8x4xf32> to vector<64x4xf32>
    %28 = vector.extract_strided_slice %1 {offsets = [2, 3, 0], sizes = [8, 8, 4], strides = [1, 1, 1]} : vector<12x12x4xf32> to vector<8x8x4xf32>
    %29 = vector.shape_cast %28 : vector<8x8x4xf32> to vector<64x4xf32>
    %30 = vector.extract_strided_slice %1 {offsets = [2, 4, 0], sizes = [8, 8, 4], strides = [1, 1, 1]} : vector<12x12x4xf32> to vector<8x8x4xf32>
    %31 = vector.shape_cast %30 : vector<8x8x4xf32> to vector<64x4xf32>
    %32 = vector.extract_strided_slice %1 {offsets = [3, 0, 0], sizes = [8, 8, 4], strides = [1, 1, 1]} : vector<12x12x4xf32> to vector<8x8x4xf32>
    %33 = vector.shape_cast %32 : vector<8x8x4xf32> to vector<64x4xf32>
    %34 = vector.extract_strided_slice %1 {offsets = [3, 1, 0], sizes = [8, 8, 4], strides = [1, 1, 1]} : vector<12x12x4xf32> to vector<8x8x4xf32>
    %35 = vector.shape_cast %34 : vector<8x8x4xf32> to vector<64x4xf32>
    %36 = vector.extract_strided_slice %1 {offsets = [3, 2, 0], sizes = [8, 8, 4], strides = [1, 1, 1]} : vector<12x12x4xf32> to vector<8x8x4xf32>
    %37 = vector.shape_cast %36 : vector<8x8x4xf32> to vector<64x4xf32>
    %38 = vector.extract_strided_slice %1 {offsets = [3, 3, 0], sizes = [8, 8, 4], strides = [1, 1, 1]} : vector<12x12x4xf32> to vector<8x8x4xf32>
    %39 = vector.shape_cast %38 : vector<8x8x4xf32> to vector<64x4xf32>
    %40 = vector.extract_strided_slice %1 {offsets = [3, 4, 0], sizes = [8, 8, 4], strides = [1, 1, 1]} : vector<12x12x4xf32> to vector<8x8x4xf32>
    %41 = vector.shape_cast %40 : vector<8x8x4xf32> to vector<64x4xf32>
    %42 = vector.extract_strided_slice %1 {offsets = [4, 0, 0], sizes = [8, 8, 4], strides = [1, 1, 1]} : vector<12x12x4xf32> to vector<8x8x4xf32>
    %43 = vector.shape_cast %42 : vector<8x8x4xf32> to vector<64x4xf32>
    %44 = vector.extract_strided_slice %1 {offsets = [4, 1, 0], sizes = [8, 8, 4], strides = [1, 1, 1]} : vector<12x12x4xf32> to vector<8x8x4xf32>
    %45 = vector.shape_cast %44 : vector<8x8x4xf32> to vector<64x4xf32>
    %46 = vector.extract_strided_slice %1 {offsets = [4, 2, 0], sizes = [8, 8, 4], strides = [1, 1, 1]} : vector<12x12x4xf32> to vector<8x8x4xf32>
    %47 = vector.shape_cast %46 : vector<8x8x4xf32> to vector<64x4xf32>
    %48 = vector.extract_strided_slice %1 {offsets = [4, 3, 0], sizes = [8, 8, 4], strides = [1, 1, 1]} : vector<12x12x4xf32> to vector<8x8x4xf32>
    %49 = vector.shape_cast %48 : vector<8x8x4xf32> to vector<64x4xf32>
    %50 = vector.extract_strided_slice %1 {offsets = [4, 4, 0], sizes = [8, 8, 4], strides = [1, 1, 1]} : vector<12x12x4xf32> to vector<8x8x4xf32>
    %51 = vector.shape_cast %50 : vector<8x8x4xf32> to vector<64x4xf32>
    %c0_4 = arith.constant 0 : index
    %c0_5 = arith.constant 0 : index
    %c0_6 = arith.constant 0 : index
    %c0_7 = arith.constant 0 : index
    %c0_8 = arith.constant 0 : index
    %52 = vector.load %arg3[%c0_4, %c0_5, %c0_6, %c0_7, %c0_8] : memref<1x1x12x12x4xf32, #tpu.memory_space<vmem>>, vector<1x1x12x12x4xf32>
    %53 = vector.shape_cast %52 : vector<1x1x12x12x4xf32> to vector<12x12x4xf32>
    %54 = vector.extract_strided_slice %53 {offsets = [0, 0, 0], sizes = [8, 8, 4], strides = [1, 1, 1]} : vector<12x12x4xf32> to vector<8x8x4xf32>
    %55 = vector.shape_cast %54 : vector<8x8x4xf32> to vector<64x4xf32>
    %56 = vector.extract_strided_slice %53 {offsets = [0, 1, 0], sizes = [8, 8, 4], strides = [1, 1, 1]} : vector<12x12x4xf32> to vector<8x8x4xf32>
    %57 = vector.shape_cast %56 : vector<8x8x4xf32> to vector<64x4xf32>
    %58 = vector.extract_strided_slice %53 {offsets = [0, 2, 0], sizes = [8, 8, 4], strides = [1, 1, 1]} : vector<12x12x4xf32> to vector<8x8x4xf32>
    %59 = vector.shape_cast %58 : vector<8x8x4xf32> to vector<64x4xf32>
    %60 = vector.extract_strided_slice %53 {offsets = [0, 3, 0], sizes = [8, 8, 4], strides = [1, 1, 1]} : vector<12x12x4xf32> to vector<8x8x4xf32>
    %61 = vector.shape_cast %60 : vector<8x8x4xf32> to vector<64x4xf32>
    %62 = vector.extract_strided_slice %53 {offsets = [0, 4, 0], sizes = [8, 8, 4], strides = [1, 1, 1]} : vector<12x12x4xf32> to vector<8x8x4xf32>
    %63 = vector.shape_cast %62 : vector<8x8x4xf32> to vector<64x4xf32>
    %64 = vector.extract_strided_slice %53 {offsets = [1, 0, 0], sizes = [8, 8, 4], strides = [1, 1, 1]} : vector<12x12x4xf32> to vector<8x8x4xf32>
    %65 = vector.shape_cast %64 : vector<8x8x4xf32> to vector<64x4xf32>
    %66 = vector.extract_strided_slice %53 {offsets = [1, 1, 0], sizes = [8, 8, 4], strides = [1, 1, 1]} : vector<12x12x4xf32> to vector<8x8x4xf32>
    %67 = vector.shape_cast %66 : vector<8x8x4xf32> to vector<64x4xf32>
    %68 = vector.extract_strided_slice %53 {offsets = [1, 2, 0], sizes = [8, 8, 4], strides = [1, 1, 1]} : vector<12x12x4xf32> to vector<8x8x4xf32>
    %69 = vector.shape_cast %68 : vector<8x8x4xf32> to vector<64x4xf32>
    %70 = vector.extract_strided_slice %53 {offsets = [1, 3, 0], sizes = [8, 8, 4], strides = [1, 1, 1]} : vector<12x12x4xf32> to vector<8x8x4xf32>
    %71 = vector.shape_cast %70 : vector<8x8x4xf32> to vector<64x4xf32>
    %72 = vector.extract_strided_slice %53 {offsets = [1, 4, 0], sizes = [8, 8, 4], strides = [1, 1, 1]} : vector<12x12x4xf32> to vector<8x8x4xf32>
    %73 = vector.shape_cast %72 : vector<8x8x4xf32> to vector<64x4xf32>
    %74 = vector.extract_strided_slice %53 {offsets = [2, 0, 0], sizes = [8, 8, 4], strides = [1, 1, 1]} : vector<12x12x4xf32> to vector<8x8x4xf32>
    %75 = vector.shape_cast %74 : vector<8x8x4xf32> to vector<64x4xf32>
    %76 = vector.extract_strided_slice %53 {offsets = [2, 1, 0], sizes = [8, 8, 4], strides = [1, 1, 1]} : vector<12x12x4xf32> to vector<8x8x4xf32>
    %77 = vector.shape_cast %76 : vector<8x8x4xf32> to vector<64x4xf32>
    %78 = vector.extract_strided_slice %53 {offsets = [2, 2, 0], sizes = [8, 8, 4], strides = [1, 1, 1]} : vector<12x12x4xf32> to vector<8x8x4xf32>
    %79 = vector.shape_cast %78 : vector<8x8x4xf32> to vector<64x4xf32>
    %80 = vector.extract_strided_slice %53 {offsets = [2, 3, 0], sizes = [8, 8, 4], strides = [1, 1, 1]} : vector<12x12x4xf32> to vector<8x8x4xf32>
    %81 = vector.shape_cast %80 : vector<8x8x4xf32> to vector<64x4xf32>
    %82 = vector.extract_strided_slice %53 {offsets = [2, 4, 0], sizes = [8, 8, 4], strides = [1, 1, 1]} : vector<12x12x4xf32> to vector<8x8x4xf32>
    %83 = vector.shape_cast %82 : vector<8x8x4xf32> to vector<64x4xf32>
    %84 = vector.extract_strided_slice %53 {offsets = [3, 0, 0], sizes = [8, 8, 4], strides = [1, 1, 1]} : vector<12x12x4xf32> to vector<8x8x4xf32>
    %85 = vector.shape_cast %84 : vector<8x8x4xf32> to vector<64x4xf32>
    %86 = vector.extract_strided_slice %53 {offsets = [3, 1, 0], sizes = [8, 8, 4], strides = [1, 1, 1]} : vector<12x12x4xf32> to vector<8x8x4xf32>
    %87 = vector.shape_cast %86 : vector<8x8x4xf32> to vector<64x4xf32>
    %88 = vector.extract_strided_slice %53 {offsets = [3, 2, 0], sizes = [8, 8, 4], strides = [1, 1, 1]} : vector<12x12x4xf32> to vector<8x8x4xf32>
    %89 = vector.shape_cast %88 : vector<8x8x4xf32> to vector<64x4xf32>
    %90 = vector.extract_strided_slice %53 {offsets = [3, 3, 0], sizes = [8, 8, 4], strides = [1, 1, 1]} : vector<12x12x4xf32> to vector<8x8x4xf32>
    %91 = vector.shape_cast %90 : vector<8x8x4xf32> to vector<64x4xf32>
    %92 = vector.extract_strided_slice %53 {offsets = [3, 4, 0], sizes = [8, 8, 4], strides = [1, 1, 1]} : vector<12x12x4xf32> to vector<8x8x4xf32>
    %93 = vector.shape_cast %92 : vector<8x8x4xf32> to vector<64x4xf32>
    %94 = vector.extract_strided_slice %53 {offsets = [4, 0, 0], sizes = [8, 8, 4], strides = [1, 1, 1]} : vector<12x12x4xf32> to vector<8x8x4xf32>
    %95 = vector.shape_cast %94 : vector<8x8x4xf32> to vector<64x4xf32>
    %96 = vector.extract_strided_slice %53 {offsets = [4, 1, 0], sizes = [8, 8, 4], strides = [1, 1, 1]} : vector<12x12x4xf32> to vector<8x8x4xf32>
    %97 = vector.shape_cast %96 : vector<8x8x4xf32> to vector<64x4xf32>
    %98 = vector.extract_strided_slice %53 {offsets = [4, 2, 0], sizes = [8, 8, 4], strides = [1, 1, 1]} : vector<12x12x4xf32> to vector<8x8x4xf32>
    %99 = vector.shape_cast %98 : vector<8x8x4xf32> to vector<64x4xf32>
    %100 = vector.extract_strided_slice %53 {offsets = [4, 3, 0], sizes = [8, 8, 4], strides = [1, 1, 1]} : vector<12x12x4xf32> to vector<8x8x4xf32>
    %101 = vector.shape_cast %100 : vector<8x8x4xf32> to vector<64x4xf32>
    %102 = vector.extract_strided_slice %53 {offsets = [4, 4, 0], sizes = [8, 8, 4], strides = [1, 1, 1]} : vector<12x12x4xf32> to vector<8x8x4xf32>
    %103 = vector.shape_cast %102 : vector<8x8x4xf32> to vector<64x4xf32>
    %c0_9 = arith.constant 0 : index
    %c0_10 = arith.constant 0 : index
    %c0_11 = arith.constant 0 : index
    %c0_12 = arith.constant 0 : index
    %c0_13 = arith.constant 0 : index
    %104 = vector.load %arg4[%c0_9, %c0_10, %c0_11, %c0_12, %c0_13] : memref<1x1x12x12x4xf32, #tpu.memory_space<vmem>>, vector<1x1x12x12x4xf32>
    %105 = vector.shape_cast %104 : vector<1x1x12x12x4xf32> to vector<12x12x4xf32>
    %106 = vector.extract_strided_slice %105 {offsets = [0, 0, 0], sizes = [8, 8, 4], strides = [1, 1, 1]} : vector<12x12x4xf32> to vector<8x8x4xf32>
    %107 = vector.shape_cast %106 : vector<8x8x4xf32> to vector<64x4xf32>
    %108 = vector.extract_strided_slice %105 {offsets = [0, 1, 0], sizes = [8, 8, 4], strides = [1, 1, 1]} : vector<12x12x4xf32> to vector<8x8x4xf32>
    %109 = vector.shape_cast %108 : vector<8x8x4xf32> to vector<64x4xf32>
    %110 = vector.extract_strided_slice %105 {offsets = [0, 2, 0], sizes = [8, 8, 4], strides = [1, 1, 1]} : vector<12x12x4xf32> to vector<8x8x4xf32>
    %111 = vector.shape_cast %110 : vector<8x8x4xf32> to vector<64x4xf32>
    %112 = vector.extract_strided_slice %105 {offsets = [0, 3, 0], sizes = [8, 8, 4], strides = [1, 1, 1]} : vector<12x12x4xf32> to vector<8x8x4xf32>
    %113 = vector.shape_cast %112 : vector<8x8x4xf32> to vector<64x4xf32>
    %114 = vector.extract_strided_slice %105 {offsets = [0, 4, 0], sizes = [8, 8, 4], strides = [1, 1, 1]} : vector<12x12x4xf32> to vector<8x8x4xf32>
    %115 = vector.shape_cast %114 : vector<8x8x4xf32> to vector<64x4xf32>
    %116 = vector.extract_strided_slice %105 {offsets = [1, 0, 0], sizes = [8, 8, 4], strides = [1, 1, 1]} : vector<12x12x4xf32> to vector<8x8x4xf32>
    %117 = vector.shape_cast %116 : vector<8x8x4xf32> to vector<64x4xf32>
    %118 = vector.extract_strided_slice %105 {offsets = [1, 1, 0], sizes = [8, 8, 4], strides = [1, 1, 1]} : vector<12x12x4xf32> to vector<8x8x4xf32>
    %119 = vector.shape_cast %118 : vector<8x8x4xf32> to vector<64x4xf32>
    %120 = vector.extract_strided_slice %105 {offsets = [1, 2, 0], sizes = [8, 8, 4], strides = [1, 1, 1]} : vector<12x12x4xf32> to vector<8x8x4xf32>
    %121 = vector.shape_cast %120 : vector<8x8x4xf32> to vector<64x4xf32>
    %122 = vector.extract_strided_slice %105 {offsets = [1, 3, 0], sizes = [8, 8, 4], strides = [1, 1, 1]} : vector<12x12x4xf32> to vector<8x8x4xf32>
    %123 = vector.shape_cast %122 : vector<8x8x4xf32> to vector<64x4xf32>
    %124 = vector.extract_strided_slice %105 {offsets = [1, 4, 0], sizes = [8, 8, 4], strides = [1, 1, 1]} : vector<12x12x4xf32> to vector<8x8x4xf32>
    %125 = vector.shape_cast %124 : vector<8x8x4xf32> to vector<64x4xf32>
    %126 = vector.extract_strided_slice %105 {offsets = [2, 0, 0], sizes = [8, 8, 4], strides = [1, 1, 1]} : vector<12x12x4xf32> to vector<8x8x4xf32>
    %127 = vector.shape_cast %126 : vector<8x8x4xf32> to vector<64x4xf32>
    %128 = vector.extract_strided_slice %105 {offsets = [2, 1, 0], sizes = [8, 8, 4], strides = [1, 1, 1]} : vector<12x12x4xf32> to vector<8x8x4xf32>
    %129 = vector.shape_cast %128 : vector<8x8x4xf32> to vector<64x4xf32>
    %130 = vector.extract_strided_slice %105 {offsets = [2, 2, 0], sizes = [8, 8, 4], strides = [1, 1, 1]} : vector<12x12x4xf32> to vector<8x8x4xf32>
    %131 = vector.shape_cast %130 : vector<8x8x4xf32> to vector<64x4xf32>
    %132 = vector.extract_strided_slice %105 {offsets = [2, 3, 0], sizes = [8, 8, 4], strides = [1, 1, 1]} : vector<12x12x4xf32> to vector<8x8x4xf32>
    %133 = vector.shape_cast %132 : vector<8x8x4xf32> to vector<64x4xf32>
    %134 = vector.extract_strided_slice %105 {offsets = [2, 4, 0], sizes = [8, 8, 4], strides = [1, 1, 1]} : vector<12x12x4xf32> to vector<8x8x4xf32>
    %135 = vector.shape_cast %134 : vector<8x8x4xf32> to vector<64x4xf32>
    %136 = vector.extract_strided_slice %105 {offsets = [3, 0, 0], sizes = [8, 8, 4], strides = [1, 1, 1]} : vector<12x12x4xf32> to vector<8x8x4xf32>
    %137 = vector.shape_cast %136 : vector<8x8x4xf32> to vector<64x4xf32>
    %138 = vector.extract_strided_slice %105 {offsets = [3, 1, 0], sizes = [8, 8, 4], strides = [1, 1, 1]} : vector<12x12x4xf32> to vector<8x8x4xf32>
    %139 = vector.shape_cast %138 : vector<8x8x4xf32> to vector<64x4xf32>
    %140 = vector.extract_strided_slice %105 {offsets = [3, 2, 0], sizes = [8, 8, 4], strides = [1, 1, 1]} : vector<12x12x4xf32> to vector<8x8x4xf32>
    %141 = vector.shape_cast %140 : vector<8x8x4xf32> to vector<64x4xf32>
    %142 = vector.extract_strided_slice %105 {offsets = [3, 3, 0], sizes = [8, 8, 4], strides = [1, 1, 1]} : vector<12x12x4xf32> to vector<8x8x4xf32>
    %143 = vector.shape_cast %142 : vector<8x8x4xf32> to vector<64x4xf32>
    %144 = vector.extract_strided_slice %105 {offsets = [3, 4, 0], sizes = [8, 8, 4], strides = [1, 1, 1]} : vector<12x12x4xf32> to vector<8x8x4xf32>
    %145 = vector.shape_cast %144 : vector<8x8x4xf32> to vector<64x4xf32>
    %146 = vector.extract_strided_slice %105 {offsets = [4, 0, 0], sizes = [8, 8, 4], strides = [1, 1, 1]} : vector<12x12x4xf32> to vector<8x8x4xf32>
    %147 = vector.shape_cast %146 : vector<8x8x4xf32> to vector<64x4xf32>
    %148 = vector.extract_strided_slice %105 {offsets = [4, 1, 0], sizes = [8, 8, 4], strides = [1, 1, 1]} : vector<12x12x4xf32> to vector<8x8x4xf32>
    %149 = vector.shape_cast %148 : vector<8x8x4xf32> to vector<64x4xf32>
    %150 = vector.extract_strided_slice %105 {offsets = [4, 2, 0], sizes = [8, 8, 4], strides = [1, 1, 1]} : vector<12x12x4xf32> to vector<8x8x4xf32>
    %151 = vector.shape_cast %150 : vector<8x8x4xf32> to vector<64x4xf32>
    %152 = vector.extract_strided_slice %105 {offsets = [4, 3, 0], sizes = [8, 8, 4], strides = [1, 1, 1]} : vector<12x12x4xf32> to vector<8x8x4xf32>
    %153 = vector.shape_cast %152 : vector<8x8x4xf32> to vector<64x4xf32>
    %154 = vector.extract_strided_slice %105 {offsets = [4, 4, 0], sizes = [8, 8, 4], strides = [1, 1, 1]} : vector<12x12x4xf32> to vector<8x8x4xf32>
    %155 = vector.shape_cast %154 : vector<8x8x4xf32> to vector<64x4xf32>
    %c0_14 = arith.constant 0 : index
    %c0_15 = arith.constant 0 : index
    %c0_16 = arith.constant 0 : index
    %c0_17 = arith.constant 0 : index
    %c0_18 = arith.constant 0 : index
    %156 = vector.load %arg5[%c0_14, %c0_15, %c0_16, %c0_17, %c0_18] : memref<1x1x12x12x4xf32, #tpu.memory_space<vmem>>, vector<1x1x12x12x4xf32>
    %157 = vector.shape_cast %156 : vector<1x1x12x12x4xf32> to vector<12x12x4xf32>
    %158 = vector.extract_strided_slice %157 {offsets = [0, 0, 0], sizes = [8, 8, 4], strides = [1, 1, 1]} : vector<12x12x4xf32> to vector<8x8x4xf32>
    %159 = vector.shape_cast %158 : vector<8x8x4xf32> to vector<64x4xf32>
    %160 = vector.extract_strided_slice %157 {offsets = [0, 1, 0], sizes = [8, 8, 4], strides = [1, 1, 1]} : vector<12x12x4xf32> to vector<8x8x4xf32>
    %161 = vector.shape_cast %160 : vector<8x8x4xf32> to vector<64x4xf32>
    %162 = vector.extract_strided_slice %157 {offsets = [0, 2, 0], sizes = [8, 8, 4], strides = [1, 1, 1]} : vector<12x12x4xf32> to vector<8x8x4xf32>
    %163 = vector.shape_cast %162 : vector<8x8x4xf32> to vector<64x4xf32>
    %164 = vector.extract_strided_slice %157 {offsets = [0, 3, 0], sizes = [8, 8, 4], strides = [1, 1, 1]} : vector<12x12x4xf32> to vector<8x8x4xf32>
    %165 = vector.shape_cast %164 : vector<8x8x4xf32> to vector<64x4xf32>
    %166 = vector.extract_strided_slice %157 {offsets = [0, 4, 0], sizes = [8, 8, 4], strides = [1, 1, 1]} : vector<12x12x4xf32> to vector<8x8x4xf32>
    %167 = vector.shape_cast %166 : vector<8x8x4xf32> to vector<64x4xf32>
    %168 = vector.extract_strided_slice %157 {offsets = [1, 0, 0], sizes = [8, 8, 4], strides = [1, 1, 1]} : vector<12x12x4xf32> to vector<8x8x4xf32>
    %169 = vector.shape_cast %168 : vector<8x8x4xf32> to vector<64x4xf32>
    %170 = vector.extract_strided_slice %157 {offsets = [1, 1, 0], sizes = [8, 8, 4], strides = [1, 1, 1]} : vector<12x12x4xf32> to vector<8x8x4xf32>
    %171 = vector.shape_cast %170 : vector<8x8x4xf32> to vector<64x4xf32>
    %172 = vector.extract_strided_slice %157 {offsets = [1, 2, 0], sizes = [8, 8, 4], strides = [1, 1, 1]} : vector<12x12x4xf32> to vector<8x8x4xf32>
    %173 = vector.shape_cast %172 : vector<8x8x4xf32> to vector<64x4xf32>
    %174 = vector.extract_strided_slice %157 {offsets = [1, 3, 0], sizes = [8, 8, 4], strides = [1, 1, 1]} : vector<12x12x4xf32> to vector<8x8x4xf32>
    %175 = vector.shape_cast %174 : vector<8x8x4xf32> to vector<64x4xf32>
    %176 = vector.extract_strided_slice %157 {offsets = [1, 4, 0], sizes = [8, 8, 4], strides = [1, 1, 1]} : vector<12x12x4xf32> to vector<8x8x4xf32>
    %177 = vector.shape_cast %176 : vector<8x8x4xf32> to vector<64x4xf32>
    %178 = vector.extract_strided_slice %157 {offsets = [2, 0, 0], sizes = [8, 8, 4], strides = [1, 1, 1]} : vector<12x12x4xf32> to vector<8x8x4xf32>
    %179 = vector.shape_cast %178 : vector<8x8x4xf32> to vector<64x4xf32>
    %180 = vector.extract_strided_slice %157 {offsets = [2, 1, 0], sizes = [8, 8, 4], strides = [1, 1, 1]} : vector<12x12x4xf32> to vector<8x8x4xf32>
    %181 = vector.shape_cast %180 : vector<8x8x4xf32> to vector<64x4xf32>
    %182 = vector.extract_strided_slice %157 {offsets = [2, 2, 0], sizes = [8, 8, 4], strides = [1, 1, 1]} : vector<12x12x4xf32> to vector<8x8x4xf32>
    %183 = vector.shape_cast %182 : vector<8x8x4xf32> to vector<64x4xf32>
    %184 = vector.extract_strided_slice %157 {offsets = [2, 3, 0], sizes = [8, 8, 4], strides = [1, 1, 1]} : vector<12x12x4xf32> to vector<8x8x4xf32>
    %185 = vector.shape_cast %184 : vector<8x8x4xf32> to vector<64x4xf32>
    %186 = vector.extract_strided_slice %157 {offsets = [2, 4, 0], sizes = [8, 8, 4], strides = [1, 1, 1]} : vector<12x12x4xf32> to vector<8x8x4xf32>
    %187 = vector.shape_cast %186 : vector<8x8x4xf32> to vector<64x4xf32>
    %188 = vector.extract_strided_slice %157 {offsets = [3, 0, 0], sizes = [8, 8, 4], strides = [1, 1, 1]} : vector<12x12x4xf32> to vector<8x8x4xf32>
    %189 = vector.shape_cast %188 : vector<8x8x4xf32> to vector<64x4xf32>
    %190 = vector.extract_strided_slice %157 {offsets = [3, 1, 0], sizes = [8, 8, 4], strides = [1, 1, 1]} : vector<12x12x4xf32> to vector<8x8x4xf32>
    %191 = vector.shape_cast %190 : vector<8x8x4xf32> to vector<64x4xf32>
    %192 = vector.extract_strided_slice %157 {offsets = [3, 2, 0], sizes = [8, 8, 4], strides = [1, 1, 1]} : vector<12x12x4xf32> to vector<8x8x4xf32>
    %193 = vector.shape_cast %192 : vector<8x8x4xf32> to vector<64x4xf32>
    %194 = vector.extract_strided_slice %157 {offsets = [3, 3, 0], sizes = [8, 8, 4], strides = [1, 1, 1]} : vector<12x12x4xf32> to vector<8x8x4xf32>
    %195 = vector.shape_cast %194 : vector<8x8x4xf32> to vector<64x4xf32>
    %196 = vector.extract_strided_slice %157 {offsets = [3, 4, 0], sizes = [8, 8, 4], strides = [1, 1, 1]} : vector<12x12x4xf32> to vector<8x8x4xf32>
    %197 = vector.shape_cast %196 : vector<8x8x4xf32> to vector<64x4xf32>
    %198 = vector.extract_strided_slice %157 {offsets = [4, 0, 0], sizes = [8, 8, 4], strides = [1, 1, 1]} : vector<12x12x4xf32> to vector<8x8x4xf32>
    %199 = vector.shape_cast %198 : vector<8x8x4xf32> to vector<64x4xf32>
    %200 = vector.extract_strided_slice %157 {offsets = [4, 1, 0], sizes = [8, 8, 4], strides = [1, 1, 1]} : vector<12x12x4xf32> to vector<8x8x4xf32>
    %201 = vector.shape_cast %200 : vector<8x8x4xf32> to vector<64x4xf32>
    %202 = vector.extract_strided_slice %157 {offsets = [4, 2, 0], sizes = [8, 8, 4], strides = [1, 1, 1]} : vector<12x12x4xf32> to vector<8x8x4xf32>
    %203 = vector.shape_cast %202 : vector<8x8x4xf32> to vector<64x4xf32>
    %204 = vector.extract_strided_slice %157 {offsets = [4, 3, 0], sizes = [8, 8, 4], strides = [1, 1, 1]} : vector<12x12x4xf32> to vector<8x8x4xf32>
    %205 = vector.shape_cast %204 : vector<8x8x4xf32> to vector<64x4xf32>
    %206 = vector.extract_strided_slice %157 {offsets = [4, 4, 0], sizes = [8, 8, 4], strides = [1, 1, 1]} : vector<12x12x4xf32> to vector<8x8x4xf32>
    %207 = vector.shape_cast %206 : vector<8x8x4xf32> to vector<64x4xf32>
    %c0_19 = arith.constant 0 : index
    %c0_20 = arith.constant 0 : index
    %c0_21 = arith.constant 0 : index
    %c0_22 = arith.constant 0 : index
    %c0_23 = arith.constant 0 : index
    %208 = vector.load %arg6[%c0_19, %c0_20, %c0_21, %c0_22, %c0_23] : memref<1x1x12x12x4xf32, #tpu.memory_space<vmem>>, vector<1x1x12x12x4xf32>
    %209 = vector.shape_cast %208 : vector<1x1x12x12x4xf32> to vector<12x12x4xf32>
    %210 = vector.extract_strided_slice %209 {offsets = [0, 0, 0], sizes = [8, 8, 4], strides = [1, 1, 1]} : vector<12x12x4xf32> to vector<8x8x4xf32>
    %211 = vector.shape_cast %210 : vector<8x8x4xf32> to vector<64x4xf32>
    %212 = vector.extract_strided_slice %209 {offsets = [0, 1, 0], sizes = [8, 8, 4], strides = [1, 1, 1]} : vector<12x12x4xf32> to vector<8x8x4xf32>
    %213 = vector.shape_cast %212 : vector<8x8x4xf32> to vector<64x4xf32>
    %214 = vector.extract_strided_slice %209 {offsets = [0, 2, 0], sizes = [8, 8, 4], strides = [1, 1, 1]} : vector<12x12x4xf32> to vector<8x8x4xf32>
    %215 = vector.shape_cast %214 : vector<8x8x4xf32> to vector<64x4xf32>
    %216 = vector.extract_strided_slice %209 {offsets = [0, 3, 0], sizes = [8, 8, 4], strides = [1, 1, 1]} : vector<12x12x4xf32> to vector<8x8x4xf32>
    %217 = vector.shape_cast %216 : vector<8x8x4xf32> to vector<64x4xf32>
    %218 = vector.extract_strided_slice %209 {offsets = [0, 4, 0], sizes = [8, 8, 4], strides = [1, 1, 1]} : vector<12x12x4xf32> to vector<8x8x4xf32>
    %219 = vector.shape_cast %218 : vector<8x8x4xf32> to vector<64x4xf32>
    %220 = vector.extract_strided_slice %209 {offsets = [1, 0, 0], sizes = [8, 8, 4], strides = [1, 1, 1]} : vector<12x12x4xf32> to vector<8x8x4xf32>
    %221 = vector.shape_cast %220 : vector<8x8x4xf32> to vector<64x4xf32>
    %222 = vector.extract_strided_slice %209 {offsets = [1, 1, 0], sizes = [8, 8, 4], strides = [1, 1, 1]} : vector<12x12x4xf32> to vector<8x8x4xf32>
    %223 = vector.shape_cast %222 : vector<8x8x4xf32> to vector<64x4xf32>
    %224 = vector.extract_strided_slice %209 {offsets = [1, 2, 0], sizes = [8, 8, 4], strides = [1, 1, 1]} : vector<12x12x4xf32> to vector<8x8x4xf32>
    %225 = vector.shape_cast %224 : vector<8x8x4xf32> to vector<64x4xf32>
    %226 = vector.extract_strided_slice %209 {offsets = [1, 3, 0], sizes = [8, 8, 4], strides = [1, 1, 1]} : vector<12x12x4xf32> to vector<8x8x4xf32>
    %227 = vector.shape_cast %226 : vector<8x8x4xf32> to vector<64x4xf32>
    %228 = vector.extract_strided_slice %209 {offsets = [1, 4, 0], sizes = [8, 8, 4], strides = [1, 1, 1]} : vector<12x12x4xf32> to vector<8x8x4xf32>
    %229 = vector.shape_cast %228 : vector<8x8x4xf32> to vector<64x4xf32>
    %230 = vector.extract_strided_slice %209 {offsets = [2, 0, 0], sizes = [8, 8, 4], strides = [1, 1, 1]} : vector<12x12x4xf32> to vector<8x8x4xf32>
    %231 = vector.shape_cast %230 : vector<8x8x4xf32> to vector<64x4xf32>
    %232 = vector.extract_strided_slice %209 {offsets = [2, 1, 0], sizes = [8, 8, 4], strides = [1, 1, 1]} : vector<12x12x4xf32> to vector<8x8x4xf32>
    %233 = vector.shape_cast %232 : vector<8x8x4xf32> to vector<64x4xf32>
    %234 = vector.extract_strided_slice %209 {offsets = [2, 2, 0], sizes = [8, 8, 4], strides = [1, 1, 1]} : vector<12x12x4xf32> to vector<8x8x4xf32>
    %235 = vector.shape_cast %234 : vector<8x8x4xf32> to vector<64x4xf32>
    %236 = vector.extract_strided_slice %209 {offsets = [2, 3, 0], sizes = [8, 8, 4], strides = [1, 1, 1]} : vector<12x12x4xf32> to vector<8x8x4xf32>
    %237 = vector.shape_cast %236 : vector<8x8x4xf32> to vector<64x4xf32>
    %238 = vector.extract_strided_slice %209 {offsets = [2, 4, 0], sizes = [8, 8, 4], strides = [1, 1, 1]} : vector<12x12x4xf32> to vector<8x8x4xf32>
    %239 = vector.shape_cast %238 : vector<8x8x4xf32> to vector<64x4xf32>
    %240 = vector.extract_strided_slice %209 {offsets = [3, 0, 0], sizes = [8, 8, 4], strides = [1, 1, 1]} : vector<12x12x4xf32> to vector<8x8x4xf32>
    %241 = vector.shape_cast %240 : vector<8x8x4xf32> to vector<64x4xf32>
    %242 = vector.extract_strided_slice %209 {offsets = [3, 1, 0], sizes = [8, 8, 4], strides = [1, 1, 1]} : vector<12x12x4xf32> to vector<8x8x4xf32>
    %243 = vector.shape_cast %242 : vector<8x8x4xf32> to vector<64x4xf32>
    %244 = vector.extract_strided_slice %209 {offsets = [3, 2, 0], sizes = [8, 8, 4], strides = [1, 1, 1]} : vector<12x12x4xf32> to vector<8x8x4xf32>
    %245 = vector.shape_cast %244 : vector<8x8x4xf32> to vector<64x4xf32>
    %246 = vector.extract_strided_slice %209 {offsets = [3, 3, 0], sizes = [8, 8, 4], strides = [1, 1, 1]} : vector<12x12x4xf32> to vector<8x8x4xf32>
    %247 = vector.shape_cast %246 : vector<8x8x4xf32> to vector<64x4xf32>
    %248 = vector.extract_strided_slice %209 {offsets = [3, 4, 0], sizes = [8, 8, 4], strides = [1, 1, 1]} : vector<12x12x4xf32> to vector<8x8x4xf32>
    %249 = vector.shape_cast %248 : vector<8x8x4xf32> to vector<64x4xf32>
    %250 = vector.extract_strided_slice %209 {offsets = [4, 0, 0], sizes = [8, 8, 4], strides = [1, 1, 1]} : vector<12x12x4xf32> to vector<8x8x4xf32>
    %251 = vector.shape_cast %250 : vector<8x8x4xf32> to vector<64x4xf32>
    %252 = vector.extract_strided_slice %209 {offsets = [4, 1, 0], sizes = [8, 8, 4], strides = [1, 1, 1]} : vector<12x12x4xf32> to vector<8x8x4xf32>
    %253 = vector.shape_cast %252 : vector<8x8x4xf32> to vector<64x4xf32>
    %254 = vector.extract_strided_slice %209 {offsets = [4, 2, 0], sizes = [8, 8, 4], strides = [1, 1, 1]} : vector<12x12x4xf32> to vector<8x8x4xf32>
    %255 = vector.shape_cast %254 : vector<8x8x4xf32> to vector<64x4xf32>
    %256 = vector.extract_strided_slice %209 {offsets = [4, 3, 0], sizes = [8, 8, 4], strides = [1, 1, 1]} : vector<12x12x4xf32> to vector<8x8x4xf32>
    %257 = vector.shape_cast %256 : vector<8x8x4xf32> to vector<64x4xf32>
    %258 = vector.extract_strided_slice %209 {offsets = [4, 4, 0], sizes = [8, 8, 4], strides = [1, 1, 1]} : vector<12x12x4xf32> to vector<8x8x4xf32>
    %259 = vector.shape_cast %258 : vector<8x8x4xf32> to vector<64x4xf32>
    %cst = arith.constant 0.000000e+00 : f32
    %260 = vector.broadcast %cst : f32 to vector<64x12xf32>
    %261 = tpu.concatenate %3, %5, %7, %9, %11, %13, %15, %17, %19, %21, %23, %25, %27, %29, %31, %33 in 1 : vector<64x4xf32>, vector<64x4xf32>, vector<64x4xf32>, vector<64x4xf32>, vector<64x4xf32>, vector<64x4xf32>, vector<64x4xf32>, vector<64x4xf32>, vector<64x4xf32>, vector<64x4xf32>, vector<64x4xf32>, vector<64x4xf32>, vector<64x4xf32>, vector<64x4xf32>, vector<64x4xf32>, vector<64x4xf32> -> vector<64x64xf32>
    %262 = tpu.concatenate %35, %37, %39, %41, %43, %45, %47, %49, %51, %55, %57, %59, %61, %63, %65, %67 in 1 : vector<64x4xf32>, vector<64x4xf32>, vector<64x4xf32>, vector<64x4xf32>, vector<64x4xf32>, vector<64x4xf32>, vector<64x4xf32>, vector<64x4xf32>, vector<64x4xf32>, vector<64x4xf32>, vector<64x4xf32>, vector<64x4xf32>, vector<64x4xf32>, vector<64x4xf32>, vector<64x4xf32>, vector<64x4xf32> -> vector<64x64xf32>
    %263 = tpu.concatenate %69, %71, %73, %75, %77, %79, %81, %83, %85, %87, %89, %91, %93, %95, %97, %99 in 1 : vector<64x4xf32>, vector<64x4xf32>, vector<64x4xf32>, vector<64x4xf32>, vector<64x4xf32>, vector<64x4xf32>, vector<64x4xf32>, vector<64x4xf32>, vector<64x4xf32>, vector<64x4xf32>, vector<64x4xf32>, vector<64x4xf32>, vector<64x4xf32>, vector<64x4xf32>, vector<64x4xf32>, vector<64x4xf32> -> vector<64x64xf32>
    %264 = tpu.concatenate %101, %103, %107, %109, %111, %113, %115, %117, %119, %121, %123, %125, %127, %129, %131, %133 in 1 : vector<64x4xf32>, vector<64x4xf32>, vector<64x4xf32>, vector<64x4xf32>, vector<64x4xf32>, vector<64x4xf32>, vector<64x4xf32>, vector<64x4xf32>, vector<64x4xf32>, vector<64x4xf32>, vector<64x4xf32>, vector<64x4xf32>, vector<64x4xf32>, vector<64x4xf32>, vector<64x4xf32>, vector<64x4xf32> -> vector<64x64xf32>
    %265 = tpu.concatenate %135, %137, %139, %141, %143, %145, %147, %149, %151, %153, %155, %159, %161, %163, %165, %167 in 1 : vector<64x4xf32>, vector<64x4xf32>, vector<64x4xf32>, vector<64x4xf32>, vector<64x4xf32>, vector<64x4xf32>, vector<64x4xf32>, vector<64x4xf32>, vector<64x4xf32>, vector<64x4xf32>, vector<64x4xf32>, vector<64x4xf32>, vector<64x4xf32>, vector<64x4xf32>, vector<64x4xf32>, vector<64x4xf32> -> vector<64x64xf32>
    %266 = tpu.concatenate %169, %171, %173, %175, %177, %179, %181, %183, %185, %187, %189, %191, %193, %195, %197, %199 in 1 : vector<64x4xf32>, vector<64x4xf32>, vector<64x4xf32>, vector<64x4xf32>, vector<64x4xf32>, vector<64x4xf32>, vector<64x4xf32>, vector<64x4xf32>, vector<64x4xf32>, vector<64x4xf32>, vector<64x4xf32>, vector<64x4xf32>, vector<64x4xf32>, vector<64x4xf32>, vector<64x4xf32>, vector<64x4xf32> -> vector<64x64xf32>
    %267 = tpu.concatenate %201, %203, %205, %207, %211, %213, %215, %217, %219, %221, %223, %225, %227, %229, %231, %233 in 1 : vector<64x4xf32>, vector<64x4xf32>, vector<64x4xf32>, vector<64x4xf32>, vector<64x4xf32>, vector<64x4xf32>, vector<64x4xf32>, vector<64x4xf32>, vector<64x4xf32>, vector<64x4xf32>, vector<64x4xf32>, vector<64x4xf32>, vector<64x4xf32>, vector<64x4xf32>, vector<64x4xf32>, vector<64x4xf32> -> vector<64x64xf32>
    %268 = tpu.concatenate %235, %237, %239, %241, %243, %245, %247, %249, %251, %253, %255, %257, %259, %260 in 1 : vector<64x4xf32>, vector<64x4xf32>, vector<64x4xf32>, vector<64x4xf32>, vector<64x4xf32>, vector<64x4xf32>, vector<64x4xf32>, vector<64x4xf32>, vector<64x4xf32>, vector<64x4xf32>, vector<64x4xf32>, vector<64x4xf32>, vector<64x4xf32>, vector<64x12xf32> -> vector<64x64xf32>
    %269 = tpu.concatenate %261, %262, %263, %264, %265, %266, %267, %268 in 1 : vector<64x64xf32>, vector<64x64xf32>, vector<64x64xf32>, vector<64x64xf32>, vector<64x64xf32>, vector<64x64xf32>, vector<64x64xf32>, vector<64x64xf32> -> vector<64x512xf32>
    %c0_24 = arith.constant 0 : index
    %c0_25 = arith.constant 0 : index
    %270 = vector.load %arg7[%c0_24, %c0_25] : memref<512x16xf32, #tpu.memory_space<vmem>>, vector<512x16xf32>
    %cst_26 = arith.constant dense<0.000000e+00> : vector<64x16xf32>
    %271 = tpu.matmul %269, %270, %cst_26 {dimension_numbers = #tpu.dot_dimension_numbers<[1], [0], [0], [1], [0, 0, 1, 1], [], []>} : vector<64x512xf32>, vector<512x16xf32>, vector<64x16xf32> -> vector<64x16xf32>
    %c0_27 = arith.constant 0 : index
    %c0_28 = arith.constant 0 : index
    %c0_29 = arith.constant 0 : index
    %c0_30 = arith.constant 0 : index
    %272 = vector.load %arg8[%c0_27, %c0_28, %c0_29, %c0_30] : memref<1x1x64x16xf32, #tpu.memory_space<vmem>>, vector<1x1x64x16xf32>
    %273 = vector.shape_cast %272 : vector<1x1x64x16xf32> to vector<64x16xf32>
    %274 = vector.shape_cast %271 : vector<64x16xf32> to vector<1x1x64x16xf32>
    tpu.vector_store %arg8[%c0_27, %c0_28, %c0_29, %c0_30], %274 {strides = array<i32>} : memref<1x1x64x16xf32, #tpu.memory_space<vmem>>, vector<1x1x64x16xf32>,
    %cst_31 = arith.constant dense<0.000000e+00> : vector<16xf32>
    %275 = vector.multi_reduction <add>, %271, %cst_31 [0] : vector<64x16xf32> to vector<16xf32>
    %276 = vector.shape_cast %275 : vector<16xf32> to vector<1x16xf32>
    %c0_32 = arith.constant 0 : index
    %c0_33 = arith.constant 0 : index
    %c0_34 = arith.constant 0 : index
    %c0_35 = arith.constant 0 : index
    %277 = vector.load %arg9[%c0_32, %c0_33, %c0_34, %c0_35] : memref<1x1x1x16xf32, #tpu.memory_space<vmem>>, vector<1x1x1x16xf32>
    %278 = vector.shape_cast %277 : vector<1x1x1x16xf32> to vector<1x16xf32>
    %279 = vector.shape_cast %276 : vector<1x16xf32> to vector<1x1x1x16xf32>
    tpu.vector_store %arg9[%c0_32, %c0_33, %c0_34, %c0_35], %279 {strides = array<i32>} : memref<1x1x1x16xf32, #tpu.memory_space<vmem>>, vector<1x1x1x16xf32>,
    %280 = arith.mulf %271, %271 : vector<64x16xf32>
    %cst_36 = arith.constant dense<0.000000e+00> : vector<16xf32>
    %281 = vector.multi_reduction <add>, %280, %cst_36 [0] : vector<64x16xf32> to vector<16xf32>
    %282 = vector.shape_cast %281 : vector<16xf32> to vector<1x16xf32>
    %c0_37 = arith.constant 0 : index
    %c0_38 = arith.constant 0 : index
    %c0_39 = arith.constant 0 : index
    %c0_40 = arith.constant 0 : index
    %283 = vector.load %arg10[%c0_37, %c0_38, %c0_39, %c0_40] : memref<1x1x1x16xf32, #tpu.memory_space<vmem>>, vector<1x1x1x16xf32>
    %284 = vector.shape_cast %283 : vector<1x1x1x16xf32> to vector<1x16xf32>
    %285 = vector.shape_cast %282 : vector<1x16xf32> to vector<1x1x1x16xf32>
    tpu.vector_store %arg10[%c0_37, %c0_38, %c0_39, %c0_40], %285 {strides = array<i32>} : memref<1x1x1x16xf32, #tpu.memory_space<vmem>>, vector<1x1x1x16xf32>,
    return
  }
  func.func @transform_0(%arg0: i32, %arg1: i32) -> (i32, i32, i32, i32, i32) {
    %c0_i32 = arith.constant 0 : i32
    %0 = arith.addi %arg1, %c0_i32 : i32
    %c0_i32_0 = arith.constant 0 : i32
    %c0_i32_1 = arith.constant 0 : i32
    %c0_i32_2 = arith.constant 0 : i32
    %c0_i32_3 = arith.constant 0 : i32
    return %arg0, %0, %c0_i32_0, %c0_i32_1, %c0_i32_2 : i32, i32, i32, i32, i32
  }
  func.func @transform_1(%arg0: i32, %arg1: i32) -> (i32, i32, i32, i32, i32) {
    %c1_i32 = arith.constant 1 : i32
    %0 = arith.addi %arg1, %c1_i32 : i32
    %c0_i32 = arith.constant 0 : i32
    %c0_i32_0 = arith.constant 0 : i32
    %c0_i32_1 = arith.constant 0 : i32
    %c0_i32_2 = arith.constant 0 : i32
    return %arg0, %0, %c0_i32, %c0_i32_0, %c0_i32_1 : i32, i32, i32, i32, i32
  }
  func.func @transform_2(%arg0: i32, %arg1: i32) -> (i32, i32, i32, i32, i32) {
    %c2_i32 = arith.constant 2 : i32
    %0 = arith.addi %arg1, %c2_i32 : i32
    %c0_i32 = arith.constant 0 : i32
    %c0_i32_0 = arith.constant 0 : i32
    %c0_i32_1 = arith.constant 0 : i32
    %c0_i32_2 = arith.constant 0 : i32
    return %arg0, %0, %c0_i32, %c0_i32_0, %c0_i32_1 : i32, i32, i32, i32, i32
  }
  func.func @transform_3(%arg0: i32, %arg1: i32) -> (i32, i32, i32, i32, i32) {
    %c3_i32 = arith.constant 3 : i32
    %0 = arith.addi %arg1, %c3_i32 : i32
    %c0_i32 = arith.constant 0 : i32
    %c0_i32_0 = arith.constant 0 : i32
    %c0_i32_1 = arith.constant 0 : i32
    %c0_i32_2 = arith.constant 0 : i32
    return %arg0, %0, %c0_i32, %c0_i32_0, %c0_i32_1 : i32, i32, i32, i32, i32
  }
  func.func @transform_4(%arg0: i32, %arg1: i32) -> (i32, i32, i32, i32, i32) {
    %c4_i32 = arith.constant 4 : i32
    %0 = arith.addi %arg1, %c4_i32 : i32
    %c0_i32 = arith.constant 0 : i32
    %c0_i32_0 = arith.constant 0 : i32
    %c0_i32_1 = arith.constant 0 : i32
    %c0_i32_2 = arith.constant 0 : i32
    return %arg0, %0, %c0_i32, %c0_i32_0, %c0_i32_1 : i32, i32, i32, i32, i32
  }
  func.func @transform_5(%arg0: i32, %arg1: i32) -> (i32, i32) {
    %c0_i32 = arith.constant 0 : i32
    %c0_i32_0 = arith.constant 0 : i32
    %c0_i32_1 = arith.constant 0 : i32
    return %c0_i32, %c0_i32_0 : i32, i32
  }
  func.func @transform_6(%arg0: i32, %arg1: i32) -> (i32, i32, i32, i32) {
    %c0_i32 = arith.constant 0 : i32
    %c0_i32_0 = arith.constant 0 : i32
    %c0_i32_1 = arith.constant 0 : i32
    return %arg0, %arg1, %c0_i32, %c0_i32_0 : i32, i32, i32, i32
  }
  func.func @transform_7(%arg0: i32, %arg1: i32) -> (i32, i32, i32, i32) {
    %c0_i32 = arith.constant 0 : i32
    %c0_i32_0 = arith.constant 0 : i32
    %c0_i32_1 = arith.constant 0 : i32
    return %arg0, %arg1, %c0_i32, %c0_i32_0 : i32, i32, i32, i32
  }
  func.func @transform_8(%arg0: i32, %arg1: i32) -> (i32, i32, i32, i32) {
    %c0_i32 = arith.constant 0 : i32
    %c0_i32_0 = arith.constant 0 : i32
    %c0_i32_1 = arith.constant 0 : i32
    return %arg0, %arg1, %c0_i32, %c0_i32_0 : i32, i32, i32, i32
  }
}

</mosaic_0001>

<llo_original>
// kernel: tpu_custom_call.1
$region0: #{tpu_custom_call.1}
  #allocation0 [shape = 'u32[]', space=smem, size = 0x4, offset = 0x4, fixed_abs, tag = 'smem constant byte address 0x4 - core index']
  #allocation1 [shape = 'u32[144,128]{1,0:T(1,128)}', space=vmem, size = 0x12000, scoped, tag = 'internal scratch']
  %s0 = inlined_call_operand.vmem [shape: f32[2,12,12,12,4], index: 0, kind: input, shape index: {}]
  %s1 = inlined_call_operand.vmem [shape: f32[2,12,12,12,4], index: 1, kind: input, shape index: {}]
  %s2 = inlined_call_operand.vmem [shape: f32[2,12,12,12,4], index: 2, kind: input, shape index: {}]
  %s3 = inlined_call_operand.vmem [shape: f32[2,12,12,12,4], index: 3, kind: input, shape index: {}]
  %s4 = inlined_call_operand.vmem [shape: f32[2,12,12,12,4], index: 4, kind: input, shape index: {}]
  %s5 = inlined_call_operand.vmem [shape: f32[512,16], index: 5, kind: input, shape index: {}]
  %s6 = inlined_call_operand.vmem [shape: f32[2,8,64,16], index: 6, kind: output, shape index: {0}]
  %s7 = inlined_call_operand.hbm [shape: f32[2,8,1,16], index: 7, kind: output, shape index: {1}]
  %s8 = inlined_call_operand.hbm [shape: f32[2,8,1,16], index: 8, kind: output, shape index: {2}]
  %9 = xla_tuple %s6, %s7, %s8
  %s10 = sld [smem:[#allocation0]]
  $region73: #{tpu_custom_call.1} parent=0
    _
  %s12 = ssub.s32 1, %s10
  %s13 = scalar_select 0, %s12, %s10
  $region1: #{tpu_custom_call.1} parent=0
    #allocation2 [shape = 'u8[1024]{0}', space=vmem, size = 0x400, scoped, tag = 'output window, operand 1']
    #allocation3 [shape = 's32[2]{0}', space=sflag, size = 0x8, scoped, tag = 'scoped memory for tpu_custom_call.1']
    #allocation4 [shape = 'u8[1024]{0}', space=vmem, size = 0x400, scoped, tag = 'output window, operand 2']
    #allocation5 [shape = 's32[2]{0}', space=sflag, size = 0x8, scoped, tag = 'scoped memory for tpu_custom_call.1']
    %14 = vsyncpa [#allocation3], 0
    %s15 = scalar_lea.sflag [#allocation3], 1
    %16 = vsyncpa %s15, 0
    %17 = vsyncpa [#allocation5], 0
    %s18 = scalar_lea.sflag [#allocation5], 1
    %19 = vsyncpa %s18, 0
    loop: start=0, step=1, limit=18
    $region2: #{tpu_custom_call.1} parent=1 // loop_pre_header
      _
    $region3: #{tpu_custom_call.1} parent=1 // loop_header
      %s21 = sphi 0, %s25
      %p22 = scmp.ge.s32.totalorder %s21, 18
      %s28 = sphi 0, %s40
      %s29 = sphi 0, %s36
      %s30 = sphi 0, %s28
      %s31 = sphi 0, %s29
      %s32 = sphi 0, %s30
      %s33 = sphi 0, %s31
      %s45 = sphi 0, %s47
      %s48 = sphi 0, %s45
      %s49 = sphi 0, %s48
      %s65 = sphi 0, %s49
      %s75 = sphi 0, %s77
      %s78 = sphi 0, %s75
      %s79 = sphi 0, %s78
      %s95 = sphi 0, %s79
      %s105 = sphi 0, %s107
      %s108 = sphi 0, %s105
      %s109 = sphi 0, %s108
      %s125 = sphi 0, %s109
      %s135 = sphi 0, %s137
      %s138 = sphi 0, %s135
      %s139 = sphi 0, %s138
      %s155 = sphi 0, %s139
      %s165 = sphi 0, %s167
      %s168 = sphi 0, %s165
      %s169 = sphi 0, %s168
      %s185 = sphi 0, %s169
      %s189 = sphi 0, %s189
      %s191 = sphi 0, %s189
      %s192 = sphi 0, %s191
      %s206 = sphi 0, %s192
      %s214 = sphi 0, %s216
      %s217 = sphi 0, %s214
      %s218 = sphi 0, %s217
      %s234 = sphi 0, %s218
      %s242 = sphi 0, %s244
      %s245 = sphi 0, %s242
      %s246 = sphi 0, %s245
      %s262 = sphi 0, %s246
      %s270 = sphi 0, %s272
      %s273 = sphi 0, %s270
      %s274 = sphi 0, %s273
      %s290 = sphi 0, %s274
    $region4: #{tpu_custom_call.1} parent=1 // loop_header_branch
      %24 = sbr.rel (%p22) target = $region8
    $region5: #{tpu_custom_call.1} parent=1 // loop_body
      %s26 = ssub.s32 %s21, 1
      %s27 = ssub.s32 %s21, 2
      %s34 = sadd.s32 1, %s29
      %p35 = scmp.ge.s32.totalorder %s34, 8
      %s36 = scalar_select %p35, 0, %s34
      %s37 = sadd.s32 1, %s28
      %s38 = scalar_select %p35, %s37, %s28
      %p39 = scmp.ge.s32.totalorder %s38, 2
      %s40 = scalar_select %p39, 0, %s38
      %s41 = ssub.s32 %s28, %s40
      %s42 = ssub.s32 %s29, %s36
      %s43 = sor.u32 %s41, %s42
      %p44 = scmp.eq.s32.totalorder %s43, 0
      %s46 = sadd.s32 %s45, 1
      %s47 = scalar_select %p44, %s45, %s46
      %p50 = pneg %p44
      %p51 = scmp.eq.s32.totalorder %s21, 15
      %p52 = por %p50, %p51
      %p53 = scmp.ne.s32.totalorder %s45, %s48
      %p54 = scmp.eq.s32.totalorder %s21, 0
      %p55 = por %p53, %p54
      %p56 = scmp.ne.s32.totalorder %s45, %s48
      %p57 = scmp.eq.s32.totalorder %s26, 15
      %p58 = por %p56, %p57
      %p59 = scmp.ne.s32.totalorder %s48, %s49
      %p60 = scmp.eq.s32.totalorder %s26, 0
      %p61 = por %p59, %p60
      %p62 = scmp.ne.s32.totalorder %s48, %s49
      %p63 = scmp.eq.s32.totalorder %s27, 15
      %p64 = por %p62, %p63
      %p66 = scmp.ne.s32.totalorder %s49, %s65
      %p67 = scmp.eq.s32.totalorder %s27, 0
      %p68 = por %p66, %p67
      %s69 = sadd.s32 %s29, 1
      %s70 = sadd.s32 %s36, 1
      %s71 = ssub.s32 %s28, %s40
      %s72 = ssub.s32 %s69, %s70
      %s73 = sor.u32 %s71, %s72
      %p74 = scmp.eq.s32.totalorder %s73, 0
      %s76 = sadd.s32 %s75, 1
      %s77 = scalar_select %p74, %s75, %s76
      %p80 = pneg %p74
      %p81 = scmp.eq.s32.totalorder %s21, 15
      %p82 = por %p80, %p81
      %p83 = scmp.ne.s32.totalorder %s75, %s78
      %p84 = scmp.eq.s32.totalorder %s21, 0
      %p85 = por %p83, %p84
      %p86 = scmp.ne.s32.totalorder %s75, %s78
      %p87 = scmp.eq.s32.totalorder %s26, 15
      %p88 = por %p86, %p87
      %p89 = scmp.ne.s32.totalorder %s78, %s79
      %p90 = scmp.eq.s32.totalorder %s26, 0
      %p91 = por %p89, %p90
      %p92 = scmp.ne.s32.totalorder %s78, %s79
      %p93 = scmp.eq.s32.totalorder %s27, 15
      %p94 = por %p92, %p93
      %p96 = scmp.ne.s32.totalorder %s79, %s95
      %p97 = scmp.eq.s32.totalorder %s27, 0
      %p98 = por %p96, %p97
      %s99 = sadd.s32 %s29, 2
      %s100 = sadd.s32 %s36, 2
      %s101 = ssub.s32 %s28, %s40
      %s102 = ssub.s32 %s99, %s100
      %s103 = sor.u32 %s101, %s102
      %p104 = scmp.eq.s32.totalorder %s103, 0
      %s106 = sadd.s32 %s105, 1
      %s107 = scalar_select %p104, %s105, %s106
      %p110 = pneg %p104
      %p111 = scmp.eq.s32.totalorder %s21, 15
      %p112 = por %p110, %p111
      %p113 = scmp.ne.s32.totalorder %s105, %s108
      %p114 = scmp.eq.s32.totalorder %s21, 0
      %p115 = por %p113, %p114
      %p116 = scmp.ne.s32.totalorder %s105, %s108
      %p117 = scmp.eq.s32.totalorder %s26, 15
      %p118 = por %p116, %p117
      %p119 = scmp.ne.s32.totalorder %s108, %s109
      %p120 = scmp.eq.s32.totalorder %s26, 0
      %p121 = por %p119, %p120
      %p122 = scmp.ne.s32.totalorder %s108, %s109
      %p123 = scmp.eq.s32.totalorder %s27, 15
      %p124 = por %p122, %p123
      %p126 = scmp.ne.s32.totalorder %s109, %s125
      %p127 = scmp.eq.s32.totalorder %s27, 0
      %p128 = por %p126, %p127
      %s129 = sadd.s32 %s29, 3
      %s130 = sadd.s32 %s36, 3
      %s131 = ssub.s32 %s28, %s40
      %s132 = ssub.s32 %s129, %s130
      %s133 = sor.u32 %s131, %s132
      %p134 = scmp.eq.s32.totalorder %s133, 0
      %s136 = sadd.s32 %s135, 1
      %s137 = scalar_select %p134, %s135, %s136
      %p140 = pneg %p134
      %p141 = scmp.eq.s32.totalorder %s21, 15
      %p142 = por %p140, %p141
      %p143 = scmp.ne.s32.totalorder %s135, %s138
      %p144 = scmp.eq.s32.totalorder %s21, 0
      %p145 = por %p143, %p144
      %p146 = scmp.ne.s32.totalorder %s135, %s138
      %p147 = scmp.eq.s32.totalorder %s26, 15
      %p148 = por %p146, %p147
      %p149 = scmp.ne.s32.totalorder %s138, %s139
      %p150 = scmp.eq.s32.totalorder %s26, 0
      %p151 = por %p149, %p150
      %p152 = scmp.ne.s32.totalorder %s138, %s139
      %p153 = scmp.eq.s32.totalorder %s27, 15
      %p154 = por %p152, %p153
      %p156 = scmp.ne.s32.totalorder %s139, %s155
      %p157 = scmp.eq.s32.totalorder %s27, 0
      %p158 = por %p156, %p157
      %s159 = sadd.s32 %s29, 4
      %s160 = sadd.s32 %s36, 4
      %s161 = ssub.s32 %s28, %s40
      %s162 = ssub.s32 %s159, %s160
      %s163 = sor.u32 %s161, %s162
      %p164 = scmp.eq.s32.totalorder %s163, 0
      %s166 = sadd.s32 %s165, 1
      %s167 = scalar_select %p164, %s165, %s166
      %p170 = pneg %p164
      %p171 = scmp.eq.s32.totalorder %s21, 15
      %p172 = por %p170, %p171
      %p173 = scmp.ne.s32.totalorder %s165, %s168
      %p174 = scmp.eq.s32.totalorder %s21, 0
      %p175 = por %p173, %p174
      %p176 = scmp.ne.s32.totalorder %s165, %s168
      %p177 = scmp.eq.s32.totalorder %s26, 15
      %p178 = por %p176, %p177
      %p179 = scmp.ne.s32.totalorder %s168, %s169
      %p180 = scmp.eq.s32.totalorder %s26, 0
      %p181 = por %p179, %p180
      %p182 = scmp.ne.s32.totalorder %s168, %s169
      %p183 = scmp.eq.s32.totalorder %s27, 15
      %p184 = por %p182, %p183
      %p186 = scmp.ne.s32.totalorder %s169, %s185
      %p187 = scmp.eq.s32.totalorder %s27, 0
      %p188 = por %p186, %p187
      %s190 = sadd.s32 %s189, 1
      %p193 = scmp.eq.s32.totalorder %s21, 15
      %p194 = scmp.ne.s32.totalorder %s189, %s191
      %p195 = scmp.eq.s32.totalorder %s21, 0
      %p196 = por %p194, %p195
      %p197 = scmp.ne.s32.totalorder %s189, %s191
      %p198 = scmp.eq.s32.totalorder %s26, 15
      %p199 = por %p197, %p198
      %p200 = scmp.ne.s32.totalorder %s191, %s192
      %p201 = scmp.eq.s32.totalorder %s26, 0
      %p202 = por %p200, %p201
      %p203 = scmp.ne.s32.totalorder %s191, %s192
      %p204 = scmp.eq.s32.totalorder %s27, 15
      %p205 = por %p203, %p204
      %p207 = scmp.ne.s32.totalorder %s192, %s206
      %p208 = scmp.eq.s32.totalorder %s27, 0
      %p209 = por %p207, %p208
      %s210 = ssub.s32 %s28, %s40
      %s211 = ssub.s32 %s29, %s36
      %s212 = sor.u32 %s210, %s211
      %p213 = scmp.eq.s32.totalorder %s212, 0
      %s215 = sadd.s32 %s214, 1
      %s216 = scalar_select %p213, %s214, %s215
      %p219 = pneg %p213
      %p220 = scmp.eq.s32.totalorder %s21, 15
      %p221 = por %p219, %p220
      %p222 = scmp.ne.s32.totalorder %s214, %s217
      %p223 = scmp.eq.s32.totalorder %s21, 0
      %p224 = por %p222, %p223
      %p225 = scmp.ne.s32.totalorder %s214, %s217
      %p226 = scmp.eq.s32.totalorder %s26, 15
      %p227 = por %p225, %p226
      %p228 = scmp.ne.s32.totalorder %s217, %s218
      %p229 = scmp.eq.s32.totalorder %s26, 0
      %p230 = por %p228, %p229
      %p231 = scmp.ne.s32.totalorder %s217, %s218
      %p232 = scmp.eq.s32.totalorder %s27, 15
      %p233 = por %p231, %p232
      %p235 = scmp.ne.s32.totalorder %s218, %s234
      %p236 = scmp.eq.s32.totalorder %s27, 0
      %p237 = por %p235, %p236
      %s238 = ssub.s32 %s28, %s40
      %s239 = ssub.s32 %s29, %s36
      %s240 = sor.u32 %s238, %s239
      %p241 = scmp.eq.s32.totalorder %s240, 0
      %s243 = sadd.s32 %s242, 1
      %s244 = scalar_select %p241, %s242, %s243
      %p247 = pneg %p241
      %p248 = scmp.eq.s32.totalorder %s21, 15
      %p249 = por %p247, %p248
      %p250 = scmp.ne.s32.totalorder %s242, %s245
      %p251 = scmp.eq.s32.totalorder %s21, 0
      %p252 = por %p250, %p251
      %p253 = scmp.ne.s32.totalorder %s242, %s245
      %p254 = scmp.eq.s32.totalorder %s26, 15
      %p255 = por %p253, %p254
      %p256 = scmp.ne.s32.totalorder %s245, %s246
      %p257 = scmp.eq.s32.totalorder %s26, 0
      %p258 = por %p256, %p257
      %p259 = scmp.ne.s32.totalorder %s245, %s246
      %p260 = scmp.eq.s32.totalorder %s27, 15
      %p261 = por %p259, %p260
      %p263 = scmp.ne.s32.totalorder %s246, %s262
      %p264 = scmp.eq.s32.totalorder %s27, 0
      %p265 = por %p263, %p264
      %s266 = ssub.s32 %s28, %s40
      %s267 = ssub.s32 %s29, %s36
      %s268 = sor.u32 %s266, %s267
      %p269 = scmp.eq.s32.totalorder %s268, 0
      %s271 = sadd.s32 %s270, 1
      %s272 = scalar_select %p269, %s270, %s271
      %p275 = pneg %p269
      %p276 = scmp.eq.s32.totalorder %s21, 15
      %p277 = por %p275, %p276
      %p278 = scmp.ne.s32.totalorder %s270, %s273
      %p279 = scmp.eq.s32.totalorder %s21, 0
      %p280 = por %p278, %p279
      %p281 = scmp.ne.s32.totalorder %s270, %s273
      %p282 = scmp.eq.s32.totalorder %s26, 15
      %p283 = por %p281, %p282
      %p284 = scmp.ne.s32.totalorder %s273, %s274
      %p285 = scmp.eq.s32.totalorder %s26, 0
      %p286 = por %p284, %p285
      %p287 = scmp.ne.s32.totalorder %s273, %s274
      %p288 = scmp.eq.s32.totalorder %s27, 15
      %p289 = por %p287, %p288
      %p291 = scmp.ne.s32.totalorder %s274, %s290
      %p292 = scmp.eq.s32.totalorder %s27, 0
      %p293 = por %p291, %p292
      %p294 = scmp.le.s32.totalorder 1, %s21
      %p295 = scmp.lt.s32.totalorder %s21, 17
      %p296 = pnand %p294, %p295
      %p297 = pneg %p296
      // Predicated region
      $region9: #{tpu_custom_call.1} parent=5 // pred_check
        _
      $region10: #{tpu_custom_call.1} parent=5 // pred_check_branch
        %299 = sbr.rel (%p296) target = $region12
      $region11: #{tpu_custom_call.1} parent=5 // pred_region
        %s300 = ssub.s32 %s21, 1
        // Predicated region
        $region13: #{tpu_custom_call.1} parent=11 // pred_check
          %p301 = pneg %p202
        $region14: #{tpu_custom_call.1} parent=11 // pred_check_branch
          %303 = sbr.rel (%p301) target = $region16
        $region15: #{tpu_custom_call.1} parent=11 // pred_region
          _
        $region16: #{tpu_custom_call.1} parent=11 // pred_fallthru
          _
      $region12: #{tpu_custom_call.1} parent=5 // pred_fallthru
        _
      %p304 = scmp.lt.s32.totalorder %s21, 16
      // Predicated region
      $region17: #{tpu_custom_call.1} parent=5 // pred_check
        %p305 = pneg %p304
      $region18: #{tpu_custom_call.1} parent=5 // pred_check_branch
        %307 = sbr.rel (%p305) target = $region20
      $region19: #{tpu_custom_call.1} parent=5 // pred_region
        // Predicated region
        $region21: #{tpu_custom_call.1} parent=19 // pred_check
          %p308 = pneg %p55
        $region22: #{tpu_custom_call.1} parent=19 // pred_check_branch
          %310 = sbr.rel (%p308) target = $region24
        $region23: #{tpu_custom_call.1} parent=19 // pred_region
          %p311 = scmp.lt.s32.totalorder %s28, 1
          %s312 = scalar_select %p311, %s28, 1
          %p313 = scmp.lt.s32.totalorder %s29, 11
          %s314 = scalar_select %p313, %s29, 11
          %s315 = smul.addr %s314, 24
          %s316 = smul.addr %s312, 288
          %s317 = sadd.s32 %s315, %s316
          %s318 = smul.addr %s317, 8
          %s319 = scalar_lea.vmem %s0, %s318
        $region24: #{tpu_custom_call.1} parent=19 // pred_fallthru
          _
        // Predicated region
        $region25: #{tpu_custom_call.1} parent=19 // pred_check
          %p320 = pneg %p85
        $region26: #{tpu_custom_call.1} parent=19 // pred_check_branch
          %322 = sbr.rel (%p320) target = $region28
        $region27: #{tpu_custom_call.1} parent=19 // pred_region
          %s323 = sadd.s32 %s29, 1
          %p324 = scmp.lt.s32.totalorder %s28, 1
          %s325 = scalar_select %p324, %s28, 1
          %p326 = scmp.lt.s32.totalorder %s323, 11
          %s327 = scalar_select %p326, %s323, 11
          %s328 = smul.addr %s327, 24
          %s329 = smul.addr %s325, 288
          %s330 = sadd.s32 %s328, %s329
          %s331 = smul.addr %s330, 8
          %s332 = scalar_lea.vmem %s1, %s331
          %s333 = sadd.s32 %s29, 1
        $region28: #{tpu_custom_call.1} parent=19 // pred_fallthru
          _
        // Predicated region
        $region29: #{tpu_custom_call.1} parent=19 // pred_check
          %p334 = pneg %p115
        $region30: #{tpu_custom_call.1} parent=19 // pred_check_branch
          %336 = sbr.rel (%p334) target = $region32
        $region31: #{tpu_custom_call.1} parent=19 // pred_region
          %s337 = sadd.s32 %s29, 2
          %p338 = scmp.lt.s32.totalorder %s28, 1
          %s339 = scalar_select %p338, %s28, 1
          %p340 = scmp.lt.s32.totalorder %s337, 11
          %s341 = scalar_select %p340, %s337, 11
          %s342 = smul.addr %s341, 24
          %s343 = smul.addr %s339, 288
          %s344 = sadd.s32 %s342, %s343
          %s345 = smul.addr %s344, 8
          %s346 = scalar_lea.vmem %s2, %s345
          %s347 = sadd.s32 %s29, 2
        $region32: #{tpu_custom_call.1} parent=19 // pred_fallthru
          _
        // Predicated region
        $region33: #{tpu_custom_call.1} parent=19 // pred_check
          %p348 = pneg %p145
        $region34: #{tpu_custom_call.1} parent=19 // pred_check_branch
          %350 = sbr.rel (%p348) target = $region36
        $region35: #{tpu_custom_call.1} parent=19 // pred_region
          %s351 = sadd.s32 %s29, 3
          %p352 = scmp.lt.s32.totalorder %s28, 1
          %s353 = scalar_select %p352, %s28, 1
          %p354 = scmp.lt.s32.totalorder %s351, 11
          %s355 = scalar_select %p354, %s351, 11
          %s356 = smul.addr %s355, 24
          %s357 = smul.addr %s353, 288
          %s358 = sadd.s32 %s356, %s357
          %s359 = smul.addr %s358, 8
          %s360 = scalar_lea.vmem %s3, %s359
          %s361 = sadd.s32 %s29, 3
        $region36: #{tpu_custom_call.1} parent=19 // pred_fallthru
          _
        // Predicated region
        $region37: #{tpu_custom_call.1} parent=19 // pred_check
          %p362 = pneg %p175
        $region38: #{tpu_custom_call.1} parent=19 // pred_check_branch
          %364 = sbr.rel (%p362) target = $region40
        $region39: #{tpu_custom_call.1} parent=19 // pred_region
          %s365 = sadd.s32 %s29, 4
          %p366 = scmp.lt.s32.totalorder %s28, 1
          %s367 = scalar_select %p366, %s28, 1
          %p368 = scmp.lt.s32.totalorder %s365, 11
          %s369 = scalar_select %p368, %s365, 11
          %s370 = smul.addr %s369, 24
          %s371 = smul.addr %s367, 288
          %s372 = sadd.s32 %s370, %s371
          %s373 = smul.addr %s372, 8
          %s374 = scalar_lea.vmem %s4, %s373
          %s375 = sadd.s32 %s29, 4
        $region40: #{tpu_custom_call.1} parent=19 // pred_fallthru
          _
      $region20: #{tpu_custom_call.1} parent=5 // pred_fallthru
        _
      %p376 = scmp.le.s32.totalorder 1, %s21
      %p377 = scmp.lt.s32.totalorder %s21, 17
      %p378 = pnand %p376, %p377
      %p379 = pneg %p378
      // Predicated region
      $region41: #{tpu_custom_call.1} parent=5 // pred_check
        _
      $region42: #{tpu_custom_call.1} parent=5 // pred_check_branch
        %381 = sbr.rel (%p378) target = $region44
      $region43: #{tpu_custom_call.1} parent=5 // pred_region
        %s382 = ssub.s32 %s21, 1
        %p383 = scmp.lt.s32.totalorder %s30, 1
        %s384 = scalar_select %p383, %s30, 1
        %p385 = scmp.lt.s32.totalorder %s31, 11
        %s386 = scalar_select %p385, %s31, 11
        %s387 = smul.addr %s386, 24
        %s388 = smul.addr %s384, 288
        %s389 = sadd.s32 %s387, %s388
        %s390 = smul.addr %s389, 8
        %s391 = scalar_lea.vmem %s0, %s390
        %p392 = pneg %p61
        %p393 = pneg %p58
        %s394 = sadd.s32 %s31, 1
        %p395 = scmp.lt.s32.totalorder %s30, 1
        %s396 = scalar_select %p395, %s30, 1
        %p397 = scmp.lt.s32.totalorder %s394, 11
        %s398 = scalar_select %p397, %s394, 11
        %s399 = smul.addr %s398, 24
        %s400 = smul.addr %s396, 288
        %s401 = sadd.s32 %s399, %s400
        %s402 = smul.addr %s401, 8
        %s403 = scalar_lea.vmem %s1, %s402
        %p404 = pneg %p91
        %p405 = pneg %p88
        %s406 = sadd.s32 %s31, 2
        %p407 = scmp.lt.s32.totalorder %s30, 1
        %s408 = scalar_select %p407, %s30, 1
        %p409 = scmp.lt.s32.totalorder %s406, 11
        %s410 = scalar_select %p409, %s406, 11
        %s411 = smul.addr %s410, 24
        %s412 = smul.addr %s408, 288
        %s413 = sadd.s32 %s411, %s412
        %s414 = smul.addr %s413, 8
        %s415 = scalar_lea.vmem %s2, %s414
        %p416 = pneg %p121
        %p417 = pneg %p118
        %s418 = sadd.s32 %s31, 3
        %p419 = scmp.lt.s32.totalorder %s30, 1
        %s420 = scalar_select %p419, %s30, 1
        %p421 = scmp.lt.s32.totalorder %s418, 11
        %s422 = scalar_select %p421, %s418, 11
        %s423 = smul.addr %s422, 24
        %s424 = smul.addr %s420, 288
        %s425 = sadd.s32 %s423, %s424
        %s426 = smul.addr %s425, 8
        %s427 = scalar_lea.vmem %s3, %s426
        %p428 = pneg %p151
        %p429 = pneg %p148
        %s430 = sadd.s32 %s31, 4
        %p431 = scmp.lt.s32.totalorder %s30, 1
        %s432 = scalar_select %p431, %s30, 1
        %p433 = scmp.lt.s32.totalorder %s430, 11
        %s434 = scalar_select %p433, %s430, 11
        %s435 = smul.addr %s434, 24
        %s436 = smul.addr %s432, 288
        %s437 = sadd.s32 %s435, %s436
        %s438 = smul.addr %s437, 8
        %s439 = scalar_lea.vmem %s4, %s438
        %p440 = pneg %p181
        %p441 = pneg %p178
        %p442 = pneg %p202
        %p443 = pneg %p199
        %p444 = pneg %p230
        %p445 = pneg %p227
        %p446 = scmp.lt.s32.totalorder %s30, 1
        %s447 = scalar_select %p446, %s30, 1
        %p448 = scmp.lt.s32.totalorder %s31, 7
        %s449 = scalar_select %p448, %s31, 7
        %s450 = smul.addr %s449, 8
        %s451 = smul.addr %s447, 64
        %s452 = sadd.s32 %s450, %s451
        %s453 = smul.addr %s452, 8
        %s454 = scalar_lea.vmem %s6, %s453
        %p455 = pneg %p258
        %p456 = pneg %p255
        %s457 = sand.u32 %s245, 1
        %s458 = scalar_lea.sflag [#allocation3], %s457
        %s459 = sand.u32 %s245, 1
        %s460 = scalar_lea.vmem [#allocation2], %s459
        %p461 = pneg %p286
        %p462 = pneg %p283
        %s463 = sand.u32 %s273, 1
        %s464 = scalar_lea.sflag [#allocation5], %s463
        %s465 = sand.u32 %s273, 1
        %s466 = scalar_lea.vmem [#allocation4], %s465
        %p467 = scmp.lt.s32.totalorder %s30, 1
        %s468 = scalar_select %p467, %s30, 1
        %p469 = scmp.lt.s32.totalorder %s31, 11
        %s470 = scalar_select %p469, %s31, 11
        %s471 = smul.addr %s470, 24
        %s472 = smul.addr %s468, 288
        %s473 = sadd.s32 %s471, %s472
        %s474 = smul.addr %s473, 8
        %s475 = scalar_lea.vmem %s0, %s474
        %s476 = sadd.s32 %s31, 1
        %p477 = scmp.lt.s32.totalorder %s30, 1
        %s478 = scalar_select %p477, %s30, 1
        %p479 = scmp.lt.s32.totalorder %s476, 11
        %s480 = scalar_select %p479, %s476, 11
        %s481 = smul.addr %s480, 24
        %s482 = smul.addr %s478, 288
        %s483 = sadd.s32 %s481, %s482
        %s484 = smul.addr %s483, 8
        %s485 = scalar_lea.vmem %s1, %s484
        %s486 = sadd.s32 %s31, 1
        %s487 = sadd.s32 %s31, 2
        %p488 = scmp.lt.s32.totalorder %s30, 1
        %s489 = scalar_select %p488, %s30, 1
        %p490 = scmp.lt.s32.totalorder %s487, 11
        %s491 = scalar_select %p490, %s487, 11
        %s492 = smul.addr %s491, 24
        %s493 = smul.addr %s489, 288
        %s494 = sadd.s32 %s492, %s493
        %s495 = smul.addr %s494, 8
        %s496 = scalar_lea.vmem %s2, %s495
        %s497 = sadd.s32 %s31, 2
        %s498 = sadd.s32 %s31, 3
        %p499 = scmp.lt.s32.totalorder %s30, 1
        %s500 = scalar_select %p499, %s30, 1
        %p501 = scmp.lt.s32.totalorder %s498, 11
        %s502 = scalar_select %p501, %s498, 11
        %s503 = smul.addr %s502, 24
        %s504 = smul.addr %s500, 288
        %s505 = sadd.s32 %s503, %s504
        %s506 = smul.addr %s505, 8
        %s507 = scalar_lea.vmem %s3, %s506
        %s508 = sadd.s32 %s31, 3
        %s509 = sadd.s32 %s31, 4
        %p510 = scmp.lt.s32.totalorder %s30, 1
        %s511 = scalar_select %p510, %s30, 1
        %p512 = scmp.lt.s32.totalorder %s509, 11
        %s513 = scalar_select %p512, %s509, 11
        %s514 = smul.addr %s513, 24
        %s515 = smul.addr %s511, 288
        %s516 = sadd.s32 %s514, %s515
        %s517 = smul.addr %s516, 8
        %s518 = scalar_lea.vmem %s4, %s517
        %s519 = sadd.s32 %s31, 4
        %p520 = scmp.lt.s32.totalorder %s30, 1
        %s521 = scalar_select %p520, %s30, 1
        %p522 = scmp.lt.s32.totalorder %s31, 7
        %s523 = scalar_select %p522, %s31, 7
        %s524 = smul.addr %s523, 8
        %s525 = smul.addr %s521, 64
        %s526 = sadd.s32 %s524, %s525
        %s527 = smul.addr %s526, 8
        %s528 = scalar_lea.vmem %s6, %s527
        %v529 = vld [vmem:[%s475] sm:$0xff]
        %v530 = vld [vmem:[%s475 + $0x8] sm:$0xf]
        %v531 = vld [vmem:[%s475 + $0x10] sm:$0xff]
        %v532 = vld [vmem:[%s475 + $0x18] sm:$0xf]
        %v533 = vld [vmem:[%s475 + $0x20] sm:$0xff]
        %v534 = vld [vmem:[%s475 + $0x28] sm:$0xf]
        %v535 = vld [vmem:[%s475 + $0x30] sm:$0xff]
        %v536 = vld [vmem:[%s475 + $0x38] sm:$0xf]
        %v537 = vld [vmem:[%s475 + $0x40] sm:$0xff]
        %v538 = vld [vmem:[%s475 + $0x48] sm:$0xf]
        %v539 = vld [vmem:[%s475 + $0x50] sm:$0xff]
        %v540 = vld [vmem:[%s475 + $0x58] sm:$0xf]
        %v541 = vld [vmem:[%s475 + $0x60] sm:$0xff]
        %v542 = vld [vmem:[%s475 + $0x68] sm:$0xf]
        %v543 = vld [vmem:[%s475 + $0x70] sm:$0xff]
        %v544 = vld [vmem:[%s475 + $0x78] sm:$0xf]
        %v545 = vld [vmem:[%s475 + $0x80] sm:$0xff]
        %v546 = vld [vmem:[%s475 + $0x88] sm:$0xf]
        %v547 = vld [vmem:[%s475 + $0x90] sm:$0xff]
        %v548 = vld [vmem:[%s475 + $0x98] sm:$0xf]
        %v549 = vld [vmem:[%s475 + $0xa0] sm:$0xff]
        %v550 = vld [vmem:[%s475 + $0xa8] sm:$0xf]
        %v551 = vld [vmem:[%s475 + $0xb0] sm:$0xff]
        %v552 = vld [vmem:[%s475 + $0xb8] sm:$0xf]
        %vm569 = vcmask 1046528
        %v570 = vrot.slane %v529, 1
        %v571 = vrot.slane %v530, 1
        %v572 = vsel %vm569, %v570, %v571
        %v573 = vrot.slane %v531, 1
        %v574 = vrot.slane %v532, 1
        %v575 = vsel %vm569, %v573, %v574
        %v576 = vrot.slane %v533, 1
        %v577 = vrot.slane %v534, 1
        %v578 = vsel %vm569, %v576, %v577
        %v579 = vrot.slane %v535, 1
        %v580 = vrot.slane %v536, 1
        %v581 = vsel %vm569, %v579, %v580
        %v582 = vrot.slane %v537, 1
        %v583 = vrot.slane %v538, 1
        %v584 = vsel %vm569, %v582, %v583
        %v585 = vrot.slane %v539, 1
        %v586 = vrot.slane %v540, 1
        %v587 = vsel %vm569, %v585, %v586
        %v588 = vrot.slane %v541, 1
        %v589 = vrot.slane %v542, 1
        %v590 = vsel %vm569, %v588, %v589
        %v591 = vrot.slane %v543, 1
        %v592 = vrot.slane %v544, 1
        %v593 = vsel %vm569, %v591, %v592
        %vm594 = vcmask 1045504
        %v595 = vrot.slane %v529, 2
        %v596 = vrot.slane %v530, 2
        %v597 = vsel %vm594, %v595, %v596
        %v598 = vrot.slane %v531, 2
        %v599 = vrot.slane %v532, 2
        %v600 = vsel %vm594, %v598, %v599
        %v601 = vrot.slane %v533, 2
        %v602 = vrot.slane %v534, 2
        %v603 = vsel %vm594, %v601, %v602
        %v604 = vrot.slane %v535, 2
        %v605 = vrot.slane %v536, 2
        %v606 = vsel %vm594, %v604, %v605
        %v607 = vrot.slane %v537, 2
        %v608 = vrot.slane %v538, 2
        %v609 = vsel %vm594, %v607, %v608
        %v610 = vrot.slane %v539, 2
        %v611 = vrot.slane %v540, 2
        %v612 = vsel %vm594, %v610, %v611
        %v613 = vrot.slane %v541, 2
        %v614 = vrot.slane %v542, 2
        %v615 = vsel %vm594, %v613, %v614
        %v616 = vrot.slane %v543, 2
        %v617 = vrot.slane %v544, 2
        %v618 = vsel %vm594, %v616, %v617
        %vm619 = vcmask 1044480
        %v620 = vrot.slane %v529, 3
        %v621 = vrot.slane %v530, 3
        %v622 = vsel %vm619, %v620, %v621
        %v623 = vrot.slane %v531, 3
        %v624 = vrot.slane %v532, 3
        %v625 = vsel %vm619, %v623, %v624
        %v626 = vrot.slane %v533, 3
        %v627 = vrot.slane %v534, 3
        %v628 = vsel %vm619, %v626, %v627
        %v629 = vrot.slane %v535, 3
        %v630 = vrot.slane %v536, 3
        %v631 = vsel %vm619, %v629, %v630
        %v632 = vrot.slane %v537, 3
        %v633 = vrot.slane %v538, 3
        %v634 = vsel %vm619, %v632, %v633
        %v635 = vrot.slane %v539, 3
        %v636 = vrot.slane %v540, 3
        %v637 = vsel %vm619, %v635, %v636
        %v638 = vrot.slane %v541, 3
        %v639 = vrot.slane %v542, 3
        %v640 = vsel %vm619, %v638, %v639
        %v641 = vrot.slane %v543, 3
        %v642 = vrot.slane %v544, 3
        %v643 = vsel %vm619, %v641, %v642
        %vm644 = vcmask 1043456
        %v645 = vrot.slane %v529, 4
        %v646 = vrot.slane %v530, 4
        %v647 = vsel %vm644, %v645, %v646
        %v648 = vrot.slane %v531, 4
        %v649 = vrot.slane %v532, 4
        %v650 = vsel %vm644, %v648, %v649
        %v651 = vrot.slane %v533, 4
        %v652 = vrot.slane %v534, 4
        %v653 = vsel %vm644, %v651, %v652
        %v654 = vrot.slane %v535, 4
        %v655 = vrot.slane %v536, 4
        %v656 = vsel %vm644, %v654, %v655
        %v657 = vrot.slane %v537, 4
        %v658 = vrot.slane %v538, 4
        %v659 = vsel %vm644, %v657, %v658
        %v660 = vrot.slane %v539, 4
        %v661 = vrot.slane %v540, 4
        %v662 = vsel %vm644, %v660, %v661
        %v663 = vrot.slane %v541, 4
        %v664 = vrot.slane %v542, 4
        %v665 = vsel %vm644, %v663, %v664
        %v666 = vrot.slane %v543, 4
        %v667 = vrot.slane %v544, 4
        %v668 = vsel %vm644, %v666, %v667
        %v671 = vrot.slane %v545, 1
        %v672 = vrot.slane %v546, 1
        %v673 = vsel %vm569, %v671, %v672
        %v674 = vrot.slane %v545, 2
        %v675 = vrot.slane %v546, 2
        %v676 = vsel %vm594, %v674, %v675
        %v677 = vrot.slane %v545, 3
        %v678 = vrot.slane %v546, 3
        %v679 = vsel %vm619, %v677, %v678
        %v680 = vrot.slane %v545, 4
        %v681 = vrot.slane %v546, 4
        %v682 = vsel %vm644, %v680, %v681
        %v685 = vrot.slane %v547, 1
        %v686 = vrot.slane %v548, 1
        %v687 = vsel %vm569, %v685, %v686
        %v688 = vrot.slane %v547, 2
        %v689 = vrot.slane %v548, 2
        %v690 = vsel %vm594, %v688, %v689
        %v691 = vrot.slane %v547, 3
        %v692 = vrot.slane %v548, 3
        %v693 = vsel %vm619, %v691, %v692
        %v694 = vrot.slane %v547, 4
        %v695 = vrot.slane %v548, 4
        %v696 = vsel %vm644, %v694, %v695
        %v699 = vrot.slane %v549, 1
        %v700 = vrot.slane %v550, 1
        %v701 = vsel %vm569, %v699, %v700
        %v710 = vrot.slane %v549, 2
        %v711 = vrot.slane %v550, 2
        %v712 = vsel %vm594, %v710, %v711
        %v713 = vrot.slane %v549, 3
        %v714 = vrot.slane %v550, 3
        %v715 = vsel %vm619, %v713, %v714
        %v716 = vrot.slane %v549, 4
        %v717 = vrot.slane %v550, 4
        %v718 = vsel %vm644, %v716, %v717
        %v721 = vrot.slane %v551, 1
        %v722 = vrot.slane %v552, 1
        %v723 = vsel %vm569, %v721, %v722
        %v724 = vrot.slane %v551, 2
        %v725 = vrot.slane %v552, 2
        %v726 = vsel %vm594, %v724, %v725
        %v727 = vrot.slane %v551, 3
        %v728 = vrot.slane %v552, 3
        %v729 = vsel %vm619, %v727, %v728
        %v730 = vrot.slane %v551, 4
        %v731 = vrot.slane %v552, 4
        %v732 = vsel %vm644, %v730, %v731
        %v733 = vld [vmem:[%s485] sm:$0xff]
        %v734 = vld [vmem:[%s485 + $0x8] sm:$0xf]
        %v735 = vld [vmem:[%s485 + $0x10] sm:$0xff]
        %v736 = vld [vmem:[%s485 + $0x18] sm:$0xf]
        %v737 = vld [vmem:[%s485 + $0x20] sm:$0xff]
        %v738 = vld [vmem:[%s485 + $0x28] sm:$0xf]
        %v739 = vld [vmem:[%s485 + $0x30] sm:$0xff]
        %v740 = vld [vmem:[%s485 + $0x38] sm:$0xf]
        %v741 = vld [vmem:[%s485 + $0x40] sm:$0xff]
        %v742 = vld [vmem:[%s485 + $0x48] sm:$0xf]
        %v743 = vld [vmem:[%s485 + $0x50] sm:$0xff]
        %v744 = vld [vmem:[%s485 + $0x58] sm:$0xf]
        %v745 = vld [vmem:[%s485 + $0x60] sm:$0xff]
        %v746 = vld [vmem:[%s485 + $0x68] sm:$0xf]
        %v747 = vld [vmem:[%s485 + $0x70] sm:$0xff]
        %v748 = vld [vmem:[%s485 + $0x78] sm:$0xf]
        %v749 = vld [vmem:[%s485 + $0x80] sm:$0xff]
        %v750 = vld [vmem:[%s485 + $0x88] sm:$0xf]
        %v751 = vld [vmem:[%s485 + $0x90] sm:$0xff]
        %v752 = vld [vmem:[%s485 + $0x98] sm:$0xf]
        %v753 = vld [vmem:[%s485 + $0xa0] sm:$0xff]
        %v754 = vld [vmem:[%s485 + $0xa8] sm:$0xf]
        %v755 = vld [vmem:[%s485 + $0xb0] sm:$0xff]
        %v756 = vld [vmem:[%s485 + $0xb8] sm:$0xf]
        %v773 = vrot.slane %v733, 1
        %v774 = vrot.slane %v734, 1
        %v775 = vsel %vm569, %v773, %v774
        %v776 = vrot.slane %v735, 1
        %v777 = vrot.slane %v736, 1
        %v778 = vsel %vm569, %v776, %v777
        %v779 = vrot.slane %v737, 1
        %v780 = vrot.slane %v738, 1
        %v781 = vsel %vm569, %v779, %v780
        %v782 = vrot.slane %v739, 1
        %v783 = vrot.slane %v740, 1
        %v784 = vsel %vm569, %v782, %v783
        %v785 = vrot.slane %v741, 1
        %v786 = vrot.slane %v742, 1
        %v787 = vsel %vm569, %v785, %v786
        %v788 = vrot.slane %v743, 1
        %v789 = vrot.slane %v744, 1
        %v790 = vsel %vm569, %v788, %v789
        %v791 = vrot.slane %v745, 1
        %v792 = vrot.slane %v746, 1
        %v793 = vsel %vm569, %v791, %v792
        %v794 = vrot.slane %v747, 1
        %v795 = vrot.slane %v748, 1
        %v796 = vsel %vm569, %v794, %v795
        %v797 = vrot.slane %v733, 2
        %v798 = vrot.slane %v734, 2
        %v799 = vsel %vm594, %v797, %v798
        %v800 = vrot.slane %v735, 2
        %v801 = vrot.slane %v736, 2
        %v802 = vsel %vm594, %v800, %v801
        %v803 = vrot.slane %v737, 2
        %v804 = vrot.slane %v738, 2
        %v805 = vsel %vm594, %v803, %v804
        %v806 = vrot.slane %v739, 2
        %v807 = vrot.slane %v740, 2
        %v808 = vsel %vm594, %v806, %v807
        %v809 = vrot.slane %v741, 2
        %v810 = vrot.slane %v742, 2
        %v811 = vsel %vm594, %v809, %v810
        %v812 = vrot.slane %v743, 2
        %v813 = vrot.slane %v744, 2
        %v814 = vsel %vm594, %v812, %v813
        %v815 = vrot.slane %v745, 2
        %v816 = vrot.slane %v746, 2
        %v817 = vsel %vm594, %v815, %v816
        %v818 = vrot.slane %v747, 2
        %v819 = vrot.slane %v748, 2
        %v820 = vsel %vm594, %v818, %v819
        %v821 = vrot.slane %v733, 3
        %v822 = vrot.slane %v734, 3
        %v823 = vsel %vm619, %v821, %v822
        %v824 = vrot.slane %v735, 3
        %v825 = vrot.slane %v736, 3
        %v826 = vsel %vm619, %v824, %v825
        %v827 = vrot.slane %v737, 3
        %v828 = vrot.slane %v738, 3
        %v829 = vsel %vm619, %v827, %v828
        %v830 = vrot.slane %v739, 3
        %v831 = vrot.slane %v740, 3
        %v832 = vsel %vm619, %v830, %v831
        %v833 = vrot.slane %v741, 3
        %v834 = vrot.slane %v742, 3
        %v835 = vsel %vm619, %v833, %v834
        %v836 = vrot.slane %v743, 3
        %v837 = vrot.slane %v744, 3
        %v838 = vsel %vm619, %v836, %v837
        %v839 = vrot.slane %v745, 3
        %v840 = vrot.slane %v746, 3
        %v841 = vsel %vm619, %v839, %v840
        %v842 = vrot.slane %v747, 3
        %v843 = vrot.slane %v748, 3
        %v844 = vsel %vm619, %v842, %v843
        %v845 = vrot.slane %v733, 4
        %v846 = vrot.slane %v734, 4
        %v847 = vsel %vm644, %v845, %v846
        %v848 = vrot.slane %v735, 4
        %v849 = vrot.slane %v736, 4
        %v850 = vsel %vm644, %v848, %v849
        %v851 = vrot.slane %v737, 4
        %v852 = vrot.slane %v738, 4
        %v853 = vsel %vm644, %v851, %v852
        %v854 = vrot.slane %v739, 4
        %v855 = vrot.slane %v740, 4
        %v856 = vsel %vm644, %v854, %v855
        %v857 = vrot.slane %v741, 4
        %v858 = vrot.slane %v742, 4
        %v859 = vsel %vm644, %v857, %v858
        %v860 = vrot.slane %v743, 4
        %v861 = vrot.slane %v744, 4
        %v862 = vsel %vm644, %v860, %v861
        %v863 = vrot.slane %v745, 4
        %v864 = vrot.slane %v746, 4
        %v865 = vsel %vm644, %v863, %v864
        %v866 = vrot.slane %v747, 4
        %v867 = vrot.slane %v748, 4
        %v868 = vsel %vm644, %v866, %v867
        %v871 = vrot.slane %v749, 1
        %v872 = vrot.slane %v750, 1
        %v873 = vsel %vm569, %v871, %v872
        %v874 = vrot.slane %v749, 2
        %v875 = vrot.slane %v750, 2
        %v876 = vsel %vm594, %v874, %v875
        %v885 = vrot.slane %v749, 3
        %v886 = vrot.slane %v750, 3
        %v887 = vsel %vm619, %v885, %v886
        %v888 = vrot.slane %v749, 4
        %v889 = vrot.slane %v750, 4
        %v890 = vsel %vm644, %v888, %v889
        %v893 = vrot.slane %v751, 1
        %v894 = vrot.slane %v752, 1
        %v895 = vsel %vm569, %v893, %v894
        %v896 = vrot.slane %v751, 2
        %v897 = vrot.slane %v752, 2
        %v898 = vsel %vm594, %v896, %v897
        %v899 = vrot.slane %v751, 3
        %v900 = vrot.slane %v752, 3
        %v901 = vsel %vm619, %v899, %v900
        %v902 = vrot.slane %v751, 4
        %v903 = vrot.slane %v752, 4
        %v904 = vsel %vm644, %v902, %v903
        %v907 = vrot.slane %v753, 1
        %v908 = vrot.slane %v754, 1
        %v909 = vsel %vm569, %v907, %v908
        %v910 = vrot.slane %v753, 2
        %v911 = vrot.slane %v754, 2
        %v912 = vsel %vm594, %v910, %v911
        %v913 = vrot.slane %v753, 3
        %v914 = vrot.slane %v754, 3
        %v915 = vsel %vm619, %v913, %v914
        %v916 = vrot.slane %v753, 4
        %v917 = vrot.slane %v754, 4
        %v918 = vsel %vm644, %v916, %v917
        %v921 = vrot.slane %v755, 1
        %v922 = vrot.slane %v756, 1
        %v923 = vsel %vm569, %v921, %v922
        %v924 = vrot.slane %v755, 2
        %v925 = vrot.slane %v756, 2
        %v926 = vsel %vm594, %v924, %v925
        %v927 = vrot.slane %v755, 3
        %v928 = vrot.slane %v756, 3
        %v929 = vsel %vm619, %v927, %v928
        %v938 = vrot.slane %v755, 4
        %v939 = vrot.slane %v756, 4
        %v940 = vsel %vm644, %v938, %v939
        %v941 = vld [vmem:[%s496] sm:$0xff]
        %v942 = vld [vmem:[%s496 + $0x8] sm:$0xf]
        %v943 = vld [vmem:[%s496 + $0x10] sm:$0xff]
        %v944 = vld [vmem:[%s496 + $0x18] sm:$0xf]
        %v945 = vld [vmem:[%s496 + $0x20] sm:$0xff]
        %v946 = vld [vmem:[%s496 + $0x28] sm:$0xf]
        %v947 = vld [vmem:[%s496 + $0x30] sm:$0xff]
        %v948 = vld [vmem:[%s496 + $0x38] sm:$0xf]
        %v949 = vld [vmem:[%s496 + $0x40] sm:$0xff]
        %v950 = vld [vmem:[%s496 + $0x48] sm:$0xf]
        %v951 = vld [vmem:[%s496 + $0x50] sm:$0xff]
        %v952 = vld [vmem:[%s496 + $0x58] sm:$0xf]
        %v953 = vld [vmem:[%s496 + $0x60] sm:$0xff]
        %v954 = vld [vmem:[%s496 + $0x68] sm:$0xf]
        %v955 = vld [vmem:[%s496 + $0x70] sm:$0xff]
        %v956 = vld [vmem:[%s496 + $0x78] sm:$0xf]
        %v957 = vld [vmem:[%s496 + $0x80] sm:$0xff]
        %v958 = vld [vmem:[%s496 + $0x88] sm:$0xf]
        %v959 = vld [vmem:[%s496 + $0x90] sm:$0xff]
        %v960 = vld [vmem:[%s496 + $0x98] sm:$0xf]
        %v961 = vld [vmem:[%s496 + $0xa0] sm:$0xff]
        %v962 = vld [vmem:[%s496 + $0xa8] sm:$0xf]
        %v963 = vld [vmem:[%s496 + $0xb0] sm:$0xff]
        %v964 = vld [vmem:[%s496 + $0xb8] sm:$0xf]
        %v981 = vrot.slane %v941, 1
        %v982 = vrot.slane %v942, 1
        %v983 = vsel %vm569, %v981, %v982
        %v984 = vrot.slane %v943, 1
        %v985 = vrot.slane %v944, 1
        %v986 = vsel %vm569, %v984, %v985
        %v987 = vrot.slane %v945, 1
        %v988 = vrot.slane %v946, 1
        %v989 = vsel %vm569, %v987, %v988
        %v990 = vrot.slane %v947, 1
        %v991 = vrot.slane %v948, 1
        %v992 = vsel %vm569, %v990, %v991
        %v993 = vrot.slane %v949, 1
        %v994 = vrot.slane %v950, 1
        %v995 = vsel %vm569, %v993, %v994
        %v996 = vrot.slane %v951, 1
        %v997 = vrot.slane %v952, 1
        %v998 = vsel %vm569, %v996, %v997
        %v999 = vrot.slane %v953, 1
        %v1000 = vrot.slane %v954, 1
        %v1001 = vsel %vm569, %v999, %v1000
        %v1002 = vrot.slane %v955, 1
        %v1003 = vrot.slane %v956, 1
        %v1004 = vsel %vm569, %v1002, %v1003
        %v1005 = vrot.slane %v941, 2
        %v1006 = vrot.slane %v942, 2
        %v1007 = vsel %vm594, %v1005, %v1006
        %v1008 = vrot.slane %v943, 2
        %v1009 = vrot.slane %v944, 2
        %v1010 = vsel %vm594, %v1008, %v1009
        %v1011 = vrot.slane %v945, 2
        %v1012 = vrot.slane %v946, 2
        %v1013 = vsel %vm594, %v1011, %v1012
        %v1014 = vrot.slane %v947, 2
        %v1015 = vrot.slane %v948, 2
        %v1016 = vsel %vm594, %v1014, %v1015
        %v1017 = vrot.slane %v949, 2
        %v1018 = vrot.slane %v950, 2
        %v1019 = vsel %vm594, %v1017, %v1018
        %v1020 = vrot.slane %v951, 2
        %v1021 = vrot.slane %v952, 2
        %v1022 = vsel %vm594, %v1020, %v1021
        %v1023 = vrot.slane %v953, 2
        %v1024 = vrot.slane %v954, 2
        %v1025 = vsel %vm594, %v1023, %v1024
        %v1026 = vrot.slane %v955, 2
        %v1027 = vrot.slane %v956, 2
        %v1028 = vsel %vm594, %v1026, %v1027
        %v1029 = vrot.slane %v941, 3
        %v1030 = vrot.slane %v942, 3
        %v1031 = vsel %vm619, %v1029, %v1030
        %v1032 = vrot.slane %v943, 3
        %v1033 = vrot.slane %v944, 3
        %v1034 = vsel %vm619, %v1032, %v1033
        %v1035 = vrot.slane %v945, 3
        %v1036 = vrot.slane %v946, 3
        %v1037 = vsel %vm619, %v1035, %v1036
        %v1038 = vrot.slane %v947, 3
        %v1039 = vrot.slane %v948, 3
        %v1040 = vsel %vm619, %v1038, %v1039
        %v1041 = vrot.slane %v949, 3
        %v1042 = vrot.slane %v950, 3
        %v1043 = vsel %vm619, %v1041, %v1042
        %v1044 = vrot.slane %v951, 3
        %v1045 = vrot.slane %v952, 3
        %v1046 = vsel %vm619, %v1044, %v1045
        %v1047 = vrot.slane %v953, 3
        %v1048 = vrot.slane %v954, 3
        %v1049 = vsel %vm619, %v1047, %v1048
        %v1050 = vrot.slane %v955, 3
        %v1051 = vrot.slane %v956, 3
        %v1052 = vsel %vm619, %v1050, %v1051
        %v1053 = vrot.slane %v941, 4
        %v1054 = vrot.slane %v942, 4
        %v1055 = vsel %vm644, %v1053, %v1054
        %v1056 = vrot.slane %v943, 4
        %v1057 = vrot.slane %v944, 4
        %v1058 = vsel %vm644, %v1056, %v1057
        %v1059 = vrot.slane %v945, 4
        %v1060 = vrot.slane %v946, 4
        %v1061 = vsel %vm644, %v1059, %v1060
        %v1062 = vrot.slane %v947, 4
        %v1063 = vrot.slane %v948, 4
        %v1064 = vsel %vm644, %v1062, %v1063
        %v1065 = vrot.slane %v949, 4
        %v1066 = vrot.slane %v950, 4
        %v1067 = vsel %vm644, %v1065, %v1066
        %v1068 = vrot.slane %v951, 4
        %v1069 = vrot.slane %v952, 4
        %v1070 = vsel %vm644, %v1068, %v1069
        %v1071 = vrot.slane %v953, 4
        %v1072 = vrot.slane %v954, 4
        %v1073 = vsel %vm644, %v1071, %v1072
        %v1074 = vrot.slane %v955, 4
        %v1075 = vrot.slane %v956, 4
        %v1076 = vsel %vm644, %v1074, %v1075
        %v1079 = vrot.slane %v957, 1
        %v1080 = vrot.slane %v958, 1
        %v1081 = vsel %vm569, %v1079, %v1080
        %v1082 = vrot.slane %v957, 2
        %v1083 = vrot.slane %v958, 2
        %v1084 = vsel %vm594, %v1082, %v1083
        %v1085 = vrot.slane %v957, 3
        %v1086 = vrot.slane %v958, 3
        %v1087 = vsel %vm619, %v1085, %v1086
        %v1088 = vrot.slane %v957, 4
        %v1089 = vrot.slane %v958, 4
        %v1090 = vsel %vm644, %v1088, %v1089
        %v1093 = vrot.slane %v959, 1
        %v1094 = vrot.slane %v960, 1
        %v1095 = vsel %vm569, %v1093, %v1094
        %v1096 = vrot.slane %v959, 2
        %v1097 = vrot.slane %v960, 2
        %v1098 = vsel %vm594, %v1096, %v1097
        %v1099 = vrot.slane %v959, 3
        %v1100 = vrot.slane %v960, 3
        %v1101 = vsel %vm619, %v1099, %v1100
        %v1102 = vrot.slane %v959, 4
        %v1103 = vrot.slane %v960, 4
        %v1104 = vsel %vm644, %v1102, %v1103
        %v1115 = vrot.slane %v961, 1
        %v1116 = vrot.slane %v962, 1
        %v1117 = vsel %vm569, %v1115, %v1116
        %v1118 = vrot.slane %v961, 2
        %v1119 = vrot.slane %v962, 2
        %v1120 = vsel %vm594, %v1118, %v1119
        %v1121 = vrot.slane %v961, 3
        %v1122 = vrot.slane %v962, 3
        %v1123 = vsel %vm619, %v1121, %v1122
        %v1124 = vrot.slane %v961, 4
        %v1125 = vrot.slane %v962, 4
        %v1126 = vsel %vm644, %v1124, %v1125
        %v1129 = vrot.slane %v963, 1
        %v1130 = vrot.slane %v964, 1
        %v1131 = vsel %vm569, %v1129, %v1130
        %v1132 = vrot.slane %v963, 2
        %v1133 = vrot.slane %v964, 2
        %v1134 = vsel %vm594, %v1132, %v1133
        %v1135 = vrot.slane %v963, 3
        %v1136 = vrot.slane %v964, 3
        %v1137 = vsel %vm619, %v1135, %v1136
        %v1138 = vrot.slane %v963, 4
        %v1139 = vrot.slane %v964, 4
        %v1140 = vsel %vm644, %v1138, %v1139
        %v1141 = vld [vmem:[%s507] sm:$0xff]
        %v1142 = vld [vmem:[%s507 + $0x8] sm:$0xf]
        %v1143 = vld [vmem:[%s507 + $0x10] sm:$0xff]
        %v1144 = vld [vmem:[%s507 + $0x18] sm:$0xf]
        %v1145 = vld [vmem:[%s507 + $0x20] sm:$0xff]
        %v1146 = vld [vmem:[%s507 + $0x28] sm:$0xf]
        %v1147 = vld [vmem:[%s507 + $0x30] sm:$0xff]
        %v1148 = vld [vmem:[%s507 + $0x38] sm:$0xf]
        %v1149 = vld [vmem:[%s507 + $0x40] sm:$0xff]
        %v1150 = vld [vmem:[%s507 + $0x48] sm:$0xf]
        %v1151 = vld [vmem:[%s507 + $0x50] sm:$0xff]
        %v1152 = vld [vmem:[%s507 + $0x58] sm:$0xf]
        %v1153 = vld [vmem:[%s507 + $0x60] sm:$0xff]
        %v1154 = vld [vmem:[%s507 + $0x68] sm:$0xf]
        %v1155 = vld [vmem:[%s507 + $0x70] sm:$0xff]
        %v1156 = vld [vmem:[%s507 + $0x78] sm:$0xf]
        %v1157 = vld [vmem:[%s507 + $0x80] sm:$0xff]
        %v1158 = vld [vmem:[%s507 + $0x88] sm:$0xf]
        %v1159 = vld [vmem:[%s507 + $0x90] sm:$0xff]
        %v1160 = vld [vmem:[%s507 + $0x98] sm:$0xf]
        %v1161 = vld [vmem:[%s507 + $0xa0] sm:$0xff]
        %v1162 = vld [vmem:[%s507 + $0xa8] sm:$0xf]
        %v1163 = vld [vmem:[%s507 + $0xb0] sm:$0xff]
        %v1164 = vld [vmem:[%s507 + $0xb8] sm:$0xf]
        %v1181 = vrot.slane %v1141, 1
        %v1182 = vrot.slane %v1142, 1
        %v1183 = vsel %vm569, %v1181, %v1182
        %v1184 = vrot.slane %v1143, 1
        %v1185 = vrot.slane %v1144, 1
        %v1186 = vsel %vm569, %v1184, %v1185
        %v1187 = vrot.slane %v1145, 1
        %v1188 = vrot.slane %v1146, 1
        %v1189 = vsel %vm569, %v1187, %v1188
        %v1190 = vrot.slane %v1147, 1
        %v1191 = vrot.slane %v1148, 1
        %v1192 = vsel %vm569, %v1190, %v1191
        %v1193 = vrot.slane %v1149, 1
        %v1194 = vrot.slane %v1150, 1
        %v1195 = vsel %vm569, %v1193, %v1194
        %v1196 = vrot.slane %v1151, 1
        %v1197 = vrot.slane %v1152, 1
        %v1198 = vsel %vm569, %v1196, %v1197
        %v1199 = vrot.slane %v1153, 1
        %v1200 = vrot.slane %v1154, 1
        %v1201 = vsel %vm569, %v1199, %v1200
        %v1202 = vrot.slane %v1155, 1
        %v1203 = vrot.slane %v1156, 1
        %v1204 = vsel %vm569, %v1202, %v1203
        %v1205 = vrot.slane %v1141, 2
        %v1206 = vrot.slane %v1142, 2
        %v1207 = vsel %vm594, %v1205, %v1206
        %v1208 = vrot.slane %v1143, 2
        %v1209 = vrot.slane %v1144, 2
        %v1210 = vsel %vm594, %v1208, %v1209
        %v1211 = vrot.slane %v1145, 2
        %v1212 = vrot.slane %v1146, 2
        %v1213 = vsel %vm594, %v1211, %v1212
        %v1214 = vrot.slane %v1147, 2
        %v1215 = vrot.slane %v1148, 2
        %v1216 = vsel %vm594, %v1214, %v1215
        %v1217 = vrot.slane %v1149, 2
        %v1218 = vrot.slane %v1150, 2
        %v1219 = vsel %vm594, %v1217, %v1218
        %v1220 = vrot.slane %v1151, 2
        %v1221 = vrot.slane %v1152, 2
        %v1222 = vsel %vm594, %v1220, %v1221
        %v1223 = vrot.slane %v1153, 2
        %v1224 = vrot.slane %v1154, 2
        %v1225 = vsel %vm594, %v1223, %v1224
        %v1226 = vrot.slane %v1155, 2
        %v1227 = vrot.slane %v1156, 2
        %v1228 = vsel %vm594, %v1226, %v1227
        %v1229 = vrot.slane %v1141, 3
        %v1230 = vrot.slane %v1142, 3
        %v1231 = vsel %vm619, %v1229, %v1230
        %v1232 = vrot.slane %v1143, 3
        %v1233 = vrot.slane %v1144, 3
        %v1234 = vsel %vm619, %v1232, %v1233
        %v1235 = vrot.slane %v1145, 3
        %v1236 = vrot.slane %v1146, 3
        %v1237 = vsel %vm619, %v1235, %v1236
        %v1238 = vrot.slane %v1147, 3
        %v1239 = vrot.slane %v1148, 3
        %v1240 = vsel %vm619, %v1238, %v1239
        %v1241 = vrot.slane %v1149, 3
        %v1242 = vrot.slane %v1150, 3
        %v1243 = vsel %vm619, %v1241, %v1242
        %v1244 = vrot.slane %v1151, 3
        %v1245 = vrot.slane %v1152, 3
        %v1246 = vsel %vm619, %v1244, %v1245
        %v1247 = vrot.slane %v1153, 3
        %v1248 = vrot.slane %v1154, 3
        %v1249 = vsel %vm619, %v1247, %v1248
        %v1250 = vrot.slane %v1155, 3
        %v1251 = vrot.slane %v1156, 3
        %v1252 = vsel %vm619, %v1250, %v1251
        %v1253 = vrot.slane %v1141, 4
        %v1254 = vrot.slane %v1142, 4
        %v1255 = vsel %vm644, %v1253, %v1254
        %v1256 = vrot.slane %v1143, 4
        %v1257 = vrot.slane %v1144, 4
        %v1258 = vsel %vm644, %v1256, %v1257
        %v1259 = vrot.slane %v1145, 4
        %v1260 = vrot.slane %v1146, 4
        %v1261 = vsel %vm644, %v1259, %v1260
        %v1262 = vrot.slane %v1147, 4
        %v1263 = vrot.slane %v1148, 4
        %v1264 = vsel %vm644, %v1262, %v1263
        %v1265 = vrot.slane %v1149, 4
        %v1266 = vrot.slane %v1150, 4
        %v1267 = vsel %vm644, %v1265, %v1266
        %v1268 = vrot.slane %v1151, 4
        %v1269 = vrot.slane %v1152, 4
        %v1270 = vsel %vm644, %v1268, %v1269
        %v1271 = vrot.slane %v1153, 4
        %v1272 = vrot.slane %v1154, 4
        %v1273 = vsel %vm644, %v1271, %v1272
        %v1274 = vrot.slane %v1155, 4
        %v1275 = vrot.slane %v1156, 4
        %v1276 = vsel %vm644, %v1274, %v1275
        %v1279 = vrot.slane %v1157, 1
        %v1280 = vrot.slane %v1158, 1
        %v1281 = vsel %vm569, %v1279, %v1280
        %v1282 = vrot.slane %v1157, 2
        %v1283 = vrot.slane %v1158, 2
        %v1284 = vsel %vm594, %v1282, %v1283
        %v1285 = vrot.slane %v1157, 3
        %v1286 = vrot.slane %v1158, 3
        %v1287 = vsel %vm619, %v1285, %v1286
        %v1288 = vrot.slane %v1157, 4
        %v1289 = vrot.slane %v1158, 4
        %v1290 = vsel %vm644, %v1288, %v1289
        %v1293 = vrot.slane %v1159, 1
        %v1294 = vrot.slane %v1160, 1
        %v1295 = vsel %vm569, %v1293, %v1294
        %v1296 = vrot.slane %v1159, 2
        %v1297 = vrot.slane %v1160, 2
        %v1298 = vsel %vm594, %v1296, %v1297
        %v1299 = vrot.slane %v1159, 3
        %v1300 = vrot.slane %v1160, 3
        %v1301 = vsel %vm619, %v1299, %v1300
        %v1302 = vrot.slane %v1159, 4
        %v1303 = vrot.slane %v1160, 4
        %v1304 = vsel %vm644, %v1302, %v1303
        %v1307 = vrot.slane %v1161, 1
        %v1308 = vrot.slane %v1162, 1
        %v1309 = vsel %vm569, %v1307, %v1308
        %v1310 = vrot.slane %v1161, 2
        %v1311 = vrot.slane %v1162, 2
        %v1312 = vsel %vm594, %v1310, %v1311
        %v1313 = vrot.slane %v1161, 3
        %v1314 = vrot.slane %v1162, 3
        %v1315 = vsel %vm619, %v1313, %v1314
        %v1316 = vrot.slane %v1161, 4
        %v1317 = vrot.slane %v1162, 4
        %v1318 = vsel %vm644, %v1316, %v1317
        %v1321 = vrot.slane %v1163, 1
        %v1322 = vrot.slane %v1164, 1
        %v1323 = vsel %vm569, %v1321, %v1322
        %v1332 = vrot.slane %v1163, 2
        %v1333 = vrot.slane %v1164, 2
        %v1334 = vsel %vm594, %v1332, %v1333
        %v1335 = vrot.slane %v1163, 3
        %v1336 = vrot.slane %v1164, 3
        %v1337 = vsel %vm619, %v1335, %v1336
        %v1338 = vrot.slane %v1163, 4
        %v1339 = vrot.slane %v1164, 4
        %v1340 = vsel %vm644, %v1338, %v1339
        %v1341 = vld [vmem:[%s518] sm:$0xff]
        %v1342 = vld [vmem:[%s518 + $0x8] sm:$0xf]
        %v1343 = vld [vmem:[%s518 + $0x10] sm:$0xff]
        %v1344 = vld [vmem:[%s518 + $0x18] sm:$0xf]
        %v1345 = vld [vmem:[%s518 + $0x20] sm:$0xff]
        %v1346 = vld [vmem:[%s518 + $0x28] sm:$0xf]
        %v1347 = vld [vmem:[%s518 + $0x30] sm:$0xff]
        %v1348 = vld [vmem:[%s518 + $0x38] sm:$0xf]
        %v1349 = vld [vmem:[%s518 + $0x40] sm:$0xff]
        %v1350 = vld [vmem:[%s518 + $0x48] sm:$0xf]
        %v1351 = vld [vmem:[%s518 + $0x50] sm:$0xff]
        %v1352 = vld [vmem:[%s518 + $0x58] sm:$0xf]
        %v1353 = vld [vmem:[%s518 + $0x60] sm:$0xff]
        %v1354 = vld [vmem:[%s518 + $0x68] sm:$0xf]
        %v1355 = vld [vmem:[%s518 + $0x70] sm:$0xff]
        %v1356 = vld [vmem:[%s518 + $0x78] sm:$0xf]
        %v1357 = vld [vmem:[%s518 + $0x80] sm:$0xff]
        %v1358 = vld [vmem:[%s518 + $0x88] sm:$0xf]
        %v1359 = vld [vmem:[%s518 + $0x90] sm:$0xff]
        %v1360 = vld [vmem:[%s518 + $0x98] sm:$0xf]
        %v1361 = vld [vmem:[%s518 + $0xa0] sm:$0xff]
        %v1362 = vld [vmem:[%s518 + $0xa8] sm:$0xf]
        %v1363 = vld [vmem:[%s518 + $0xb0] sm:$0xff]
        %v1364 = vld [vmem:[%s518 + $0xb8] sm:$0xf]
        %v1381 = vrot.slane %v1341, 1
        %v1382 = vrot.slane %v1342, 1
        %v1383 = vsel %vm569, %v1381, %v1382
        %v1384 = vrot.slane %v1343, 1
        %v1385 = vrot.slane %v1344, 1
        %v1386 = vsel %vm569, %v1384, %v1385
        %v1387 = vrot.slane %v1345, 1
        %v1388 = vrot.slane %v1346, 1
        %v1389 = vsel %vm569, %v1387, %v1388
        %v1390 = vrot.slane %v1347, 1
        %v1391 = vrot.slane %v1348, 1
        %v1392 = vsel %vm569, %v1390, %v1391
        %v1393 = vrot.slane %v1349, 1
        %v1394 = vrot.slane %v1350, 1
        %v1395 = vsel %vm569, %v1393, %v1394
        %v1396 = vrot.slane %v1351, 1
        %v1397 = vrot.slane %v1352, 1
        %v1398 = vsel %vm569, %v1396, %v1397
        %v1399 = vrot.slane %v1353, 1
        %v1400 = vrot.slane %v1354, 1
        %v1401 = vsel %vm569, %v1399, %v1400
        %v1402 = vrot.slane %v1355, 1
        %v1403 = vrot.slane %v1356, 1
        %v1404 = vsel %vm569, %v1402, %v1403
        %v1405 = vrot.slane %v1341, 2
        %v1406 = vrot.slane %v1342, 2
        %v1407 = vsel %vm594, %v1405, %v1406
        %v1408 = vrot.slane %v1343, 2
        %v1409 = vrot.slane %v1344, 2
        %v1410 = vsel %vm594, %v1408, %v1409
        %v1411 = vrot.slane %v1345, 2
        %v1412 = vrot.slane %v1346, 2
        %v1413 = vsel %vm594, %v1411, %v1412
        %v1414 = vrot.slane %v1347, 2
        %v1415 = vrot.slane %v1348, 2
        %v1416 = vsel %vm594, %v1414, %v1415
        %v1417 = vrot.slane %v1349, 2
        %v1418 = vrot.slane %v1350, 2
        %v1419 = vsel %vm594, %v1417, %v1418
        %v1420 = vrot.slane %v1351, 2
        %v1421 = vrot.slane %v1352, 2
        %v1422 = vsel %vm594, %v1420, %v1421
        %v1423 = vrot.slane %v1353, 2
        %v1424 = vrot.slane %v1354, 2
        %v1425 = vsel %vm594, %v1423, %v1424
        %v1426 = vrot.slane %v1355, 2
        %v1427 = vrot.slane %v1356, 2
        %v1428 = vsel %vm594, %v1426, %v1427
        %v1429 = vrot.slane %v1341, 3
        %v1430 = vrot.slane %v1342, 3
        %v1431 = vsel %vm619, %v1429, %v1430
        %v1432 = vrot.slane %v1343, 3
        %v1433 = vrot.slane %v1344, 3
        %v1434 = vsel %vm619, %v1432, %v1433
        %v1435 = vrot.slane %v1345, 3
        %v1436 = vrot.slane %v1346, 3
        %v1437 = vsel %vm619, %v1435, %v1436
        %v1438 = vrot.slane %v1347, 3
        %v1439 = vrot.slane %v1348, 3
        %v1440 = vsel %vm619, %v1438, %v1439
        %v1441 = vrot.slane %v1349, 3
        %v1442 = vrot.slane %v1350, 3
        %v1443 = vsel %vm619, %v1441, %v1442
        %v1444 = vrot.slane %v1351, 3
        %v1445 = vrot.slane %v1352, 3
        %v1446 = vsel %vm619, %v1444, %v1445
        %v1447 = vrot.slane %v1353, 3
        %v1448 = vrot.slane %v1354, 3
        %v1449 = vsel %vm619, %v1447, %v1448
        %v1450 = vrot.slane %v1355, 3
        %v1451 = vrot.slane %v1356, 3
        %v1452 = vsel %vm619, %v1450, %v1451
        %v1453 = vrot.slane %v1341, 4
        %v1454 = vrot.slane %v1342, 4
        %v1455 = vsel %vm644, %v1453, %v1454
        %v1456 = vrot.slane %v1343, 4
        %v1457 = vrot.slane %v1344, 4
        %v1458 = vsel %vm644, %v1456, %v1457
        %v1459 = vrot.slane %v1345, 4
        %v1460 = vrot.slane %v1346, 4
        %v1461 = vsel %vm644, %v1459, %v1460
        %v1462 = vrot.slane %v1347, 4
        %v1463 = vrot.slane %v1348, 4
        %v1464 = vsel %vm644, %v1462, %v1463
        %v1465 = vrot.slane %v1349, 4
        %v1466 = vrot.slane %v1350, 4
        %v1467 = vsel %vm644, %v1465, %v1466
        %v1468 = vrot.slane %v1351, 4
        %v1469 = vrot.slane %v1352, 4
        %v1470 = vsel %vm644, %v1468, %v1469
        %v1471 = vrot.slane %v1353, 4
        %v1472 = vrot.slane %v1354, 4
        %v1473 = vsel %vm644, %v1471, %v1472
        %v1474 = vrot.slane %v1355, 4
        %v1475 = vrot.slane %v1356, 4
        %v1476 = vsel %vm644, %v1474, %v1475
        %v1479 = vrot.slane %v1357, 1
        %v1480 = vrot.slane %v1358, 1
        %v1481 = vsel %vm569, %v1479, %v1480
        %v1482 = vrot.slane %v1357, 2
        %v1483 = vrot.slane %v1358, 2
        %v1484 = vsel %vm594, %v1482, %v1483
        %v1485 = vrot.slane %v1357, 3
        %v1486 = vrot.slane %v1358, 3
        %v1487 = vsel %vm619, %v1485, %v1486
        %v1488 = vrot.slane %v1357, 4
        %v1489 = vrot.slane %v1358, 4
        %v1490 = vsel %vm644, %v1488, %v1489
        %v1493 = vrot.slane %v1359, 1
        %v1494 = vrot.slane %v1360, 1
        %v1495 = vsel %vm569, %v1493, %v1494
        %v1496 = vrot.slane %v1359, 2
        %v1497 = vrot.slane %v1360, 2
        %v1498 = vsel %vm594, %v1496, %v1497
        %v1507 = vrot.slane %v1359, 3
        %v1508 = vrot.slane %v1360, 3
        %v1509 = vsel %vm619, %v1507, %v1508
        %v1510 = vrot.slane %v1359, 4
        %v1511 = vrot.slane %v1360, 4
        %v1512 = vsel %vm644, %v1510, %v1511
        %v1515 = vrot.slane %v1361, 1
        %v1516 = vrot.slane %v1362, 1
        %v1517 = vsel %vm569, %v1515, %v1516
        %v1518 = vrot.slane %v1361, 2
        %v1519 = vrot.slane %v1362, 2
        %v1520 = vsel %vm594, %v1518, %v1519
        %v1521 = vrot.slane %v1361, 3
        %v1522 = vrot.slane %v1362, 3
        %v1523 = vsel %vm619, %v1521, %v1522
        %v1524 = vrot.slane %v1361, 4
        %v1525 = vrot.slane %v1362, 4
        %v1526 = vsel %vm644, %v1524, %v1525
        %v1529 = vrot.slane %v1363, 1
        %v1530 = vrot.slane %v1364, 1
        %v1531 = vsel %vm569, %v1529, %v1530
        %v1532 = vrot.slane %v1363, 2
        %v1533 = vrot.slane %v1364, 2
        %v1534 = vsel %vm594, %v1532, %v1533
        %v1535 = vrot.slane %v1363, 3
        %v1536 = vrot.slane %v1364, 3
        %v1537 = vsel %vm619, %v1535, %v1536
        %v1538 = vrot.slane %v1363, 4
        %v1539 = vrot.slane %v1364, 4
        %v1540 = vsel %vm644, %v1538, %v1539
        %1541 = vrot.lane.b32.xlu0 %v572, 4
        %v1542 = vpop.permute.xlu0 %1541
        %1543 = vrot.lane.b32.xlu0 %v575, 4
        %v1544 = vpop.permute.xlu0 %1543
        %1545 = vrot.lane.b32.xlu0 %v578, 4
        %v1546 = vpop.permute.xlu0 %1545
        %1547 = vrot.lane.b32.xlu0 %v581, 4
        %v1548 = vpop.permute.xlu0 %1547
        %1549 = vrot.lane.b32.xlu0 %v584, 4
        %v1550 = vpop.permute.xlu0 %1549
        %1551 = vrot.lane.b32.xlu0 %v587, 4
        %v1552 = vpop.permute.xlu0 %1551
        %1553 = vrot.lane.b32.xlu0 %v590, 4
        %v1554 = vpop.permute.xlu0 %1553
        %1555 = vrot.lane.b32.xlu0 %v593, 4
        %v1556 = vpop.permute.xlu0 %1555
        %1565 = vrot.lane.b32.xlu0 %v597, 8
        %v1566 = vpop.permute.xlu0 %1565
        %1567 = vrot.lane.b32.xlu0 %v600, 8
        %v1568 = vpop.permute.xlu0 %1567
        %1569 = vrot.lane.b32.xlu0 %v603, 8
        %v1570 = vpop.permute.xlu0 %1569
        %1571 = vrot.lane.b32.xlu0 %v606, 8
        %v1572 = vpop.permute.xlu0 %1571
        %1573 = vrot.lane.b32.xlu0 %v609, 8
        %v1574 = vpop.permute.xlu0 %1573
        %1575 = vrot.lane.b32.xlu0 %v612, 8
        %v1576 = vpop.permute.xlu0 %1575
        %1577 = vrot.lane.b32.xlu0 %v615, 8
        %v1578 = vpop.permute.xlu0 %1577
        %1579 = vrot.lane.b32.xlu0 %v618, 8
        %v1580 = vpop.permute.xlu0 %1579
        %1589 = vrot.lane.b32.xlu0 %v622, 12
        %v1590 = vpop.permute.xlu0 %1589
        %1591 = vrot.lane.b32.xlu0 %v625, 12
        %v1592 = vpop.permute.xlu0 %1591
        %1593 = vrot.lane.b32.xlu0 %v628, 12
        %v1594 = vpop.permute.xlu0 %1593
        %1595 = vrot.lane.b32.xlu0 %v631, 12
        %v1596 = vpop.permute.xlu0 %1595
        %1597 = vrot.lane.b32.xlu0 %v634, 12
        %v1598 = vpop.permute.xlu0 %1597
        %1599 = vrot.lane.b32.xlu0 %v637, 12
        %v1600 = vpop.permute.xlu0 %1599
        %1601 = vrot.lane.b32.xlu0 %v640, 12
        %v1602 = vpop.permute.xlu0 %1601
        %1603 = vrot.lane.b32.xlu0 %v643, 12
        %v1604 = vpop.permute.xlu0 %1603
        %1613 = vrot.lane.b32.xlu0 %v647, 16
        %v1614 = vpop.permute.xlu0 %1613
        %1615 = vrot.lane.b32.xlu0 %v650, 16
        %v1616 = vpop.permute.xlu0 %1615
        %1617 = vrot.lane.b32.xlu0 %v653, 16
        %v1618 = vpop.permute.xlu0 %1617
        %1619 = vrot.lane.b32.xlu0 %v656, 16
        %v1620 = vpop.permute.xlu0 %1619
        %1621 = vrot.lane.b32.xlu0 %v659, 16
        %v1622 = vpop.permute.xlu0 %1621
        %1623 = vrot.lane.b32.xlu0 %v662, 16
        %v1624 = vpop.permute.xlu0 %1623
        %1625 = vrot.lane.b32.xlu0 %v665, 16
        %v1626 = vpop.permute.xlu0 %1625
        %1627 = vrot.lane.b32.xlu0 %v668, 16
        %v1628 = vpop.permute.xlu0 %1627
        %1637 = vrot.lane.b32.xlu0 %v531, 20
        %v1638 = vpop.permute.xlu0 %1637
        %1639 = vrot.lane.b32.xlu0 %v533, 20
        %v1640 = vpop.permute.xlu0 %1639
        %1641 = vrot.lane.b32.xlu0 %v535, 20
        %v1642 = vpop.permute.xlu0 %1641
        %1643 = vrot.lane.b32.xlu0 %v537, 20
        %v1644 = vpop.permute.xlu0 %1643
        %1645 = vrot.lane.b32.xlu0 %v539, 20
        %v1646 = vpop.permute.xlu0 %1645
        %1647 = vrot.lane.b32.xlu0 %v541, 20
        %v1648 = vpop.permute.xlu0 %1647
        %1649 = vrot.lane.b32.xlu0 %v543, 20
        %v1650 = vpop.permute.xlu0 %1649
        %1651 = vrot.lane.b32.xlu0 %v545, 20
        %v1652 = vpop.permute.xlu0 %1651
        %1661 = vrot.lane.b32.xlu0 %v575, 24
        %v1662 = vpop.permute.xlu0 %1661
        %1663 = vrot.lane.b32.xlu0 %v578, 24
        %v1664 = vpop.permute.xlu0 %1663
        %1665 = vrot.lane.b32.xlu0 %v581, 24
        %v1666 = vpop.permute.xlu0 %1665
        %1667 = vrot.lane.b32.xlu0 %v584, 24
        %v1668 = vpop.permute.xlu0 %1667
        %1669 = vrot.lane.b32.xlu0 %v587, 24
        %v1670 = vpop.permute.xlu0 %1669
        %1671 = vrot.lane.b32.xlu0 %v590, 24
        %v1672 = vpop.permute.xlu0 %1671
        %1673 = vrot.lane.b32.xlu0 %v593, 24
        %v1674 = vpop.permute.xlu0 %1673
        %1675 = vrot.lane.b32.xlu0 %v673, 24
        %v1676 = vpop.permute.xlu0 %1675
        %1685 = vrot.lane.b32.xlu0 %v600, 28
        %v1686 = vpop.permute.xlu0 %1685
        %1687 = vrot.lane.b32.xlu0 %v603, 28
        %v1688 = vpop.permute.xlu0 %1687
        %1689 = vrot.lane.b32.xlu0 %v606, 28
        %v1690 = vpop.permute.xlu0 %1689
        %1691 = vrot.lane.b32.xlu0 %v609, 28
        %v1692 = vpop.permute.xlu0 %1691
        %1693 = vrot.lane.b32.xlu0 %v612, 28
        %v1694 = vpop.permute.xlu0 %1693
        %1695 = vrot.lane.b32.xlu0 %v615, 28
        %v1696 = vpop.permute.xlu0 %1695
        %1697 = vrot.lane.b32.xlu0 %v618, 28
        %v1698 = vpop.permute.xlu0 %1697
        %1699 = vrot.lane.b32.xlu0 %v676, 28
        %v1700 = vpop.permute.xlu0 %1699
        %1709 = vrot.lane.b32.xlu0 %v625, 32
        %v1710 = vpop.permute.xlu0 %1709
        %1711 = vrot.lane.b32.xlu0 %v628, 32
        %v1712 = vpop.permute.xlu0 %1711
        %1713 = vrot.lane.b32.xlu0 %v631, 32
        %v1714 = vpop.permute.xlu0 %1713
        %1715 = vrot.lane.b32.xlu0 %v634, 32
        %v1716 = vpop.permute.xlu0 %1715
        %1717 = vrot.lane.b32.xlu0 %v637, 32
        %v1718 = vpop.permute.xlu0 %1717
        %1719 = vrot.lane.b32.xlu0 %v640, 32
        %v1720 = vpop.permute.xlu0 %1719
        %1721 = vrot.lane.b32.xlu0 %v643, 32
        %v1722 = vpop.permute.xlu0 %1721
        %1723 = vrot.lane.b32.xlu0 %v679, 32
        %v1724 = vpop.permute.xlu0 %1723
        %1733 = vrot.lane.b32.xlu0 %v650, 36
        %v1734 = vpop.permute.xlu0 %1733
        %1735 = vrot.lane.b32.xlu0 %v653, 36
        %v1736 = vpop.permute.xlu0 %1735
        %1737 = vrot.lane.b32.xlu0 %v656, 36
        %v1738 = vpop.permute.xlu0 %1737
        %1739 = vrot.lane.b32.xlu0 %v659, 36
        %v1740 = vpop.permute.xlu0 %1739
        %1741 = vrot.lane.b32.xlu0 %v662, 36
        %v1742 = vpop.permute.xlu0 %1741
        %1743 = vrot.lane.b32.xlu0 %v665, 36
        %v1744 = vpop.permute.xlu0 %1743
        %1745 = vrot.lane.b32.xlu0 %v668, 36
        %v1746 = vpop.permute.xlu0 %1745
        %1747 = vrot.lane.b32.xlu0 %v682, 36
        %v1748 = vpop.permute.xlu0 %1747
        %1757 = vrot.lane.b32.xlu0 %v533, 40
        %v1758 = vpop.permute.xlu0 %1757
        %1759 = vrot.lane.b32.xlu0 %v535, 40
        %v1760 = vpop.permute.xlu0 %1759
        %1761 = vrot.lane.b32.xlu0 %v537, 40
        %v1762 = vpop.permute.xlu0 %1761
        %1763 = vrot.lane.b32.xlu0 %v539, 40
        %v1764 = vpop.permute.xlu0 %1763
        %1765 = vrot.lane.b32.xlu0 %v541, 40
        %v1766 = vpop.permute.xlu0 %1765
        %1767 = vrot.lane.b32.xlu0 %v543, 40
        %v1768 = vpop.permute.xlu0 %1767
        %1769 = vrot.lane.b32.xlu0 %v545, 40
        %v1770 = vpop.permute.xlu0 %1769
        %1771 = vrot.lane.b32.xlu0 %v547, 40
        %v1772 = vpop.permute.xlu0 %1771
        %1781 = vrot.lane.b32.xlu0 %v578, 44
        %v1782 = vpop.permute.xlu0 %1781
        %1783 = vrot.lane.b32.xlu0 %v581, 44
        %v1784 = vpop.permute.xlu0 %1783
        %1785 = vrot.lane.b32.xlu0 %v584, 44
        %v1786 = vpop.permute.xlu0 %1785
        %1787 = vrot.lane.b32.xlu0 %v587, 44
        %v1788 = vpop.permute.xlu0 %1787
        %1789 = vrot.lane.b32.xlu0 %v590, 44
        %v1790 = vpop.permute.xlu0 %1789
        %1791 = vrot.lane.b32.xlu0 %v593, 44
        %v1792 = vpop.permute.xlu0 %1791
        %1793 = vrot.lane.b32.xlu0 %v673, 44
        %v1794 = vpop.permute.xlu0 %1793
        %1795 = vrot.lane.b32.xlu0 %v687, 44
        %v1796 = vpop.permute.xlu0 %1795
        %1805 = vrot.lane.b32.xlu0 %v603, 48
        %v1806 = vpop.permute.xlu0 %1805
        %1807 = vrot.lane.b32.xlu0 %v606, 48
        %v1808 = vpop.permute.xlu0 %1807
        %1809 = vrot.lane.b32.xlu0 %v609, 48
        %v1810 = vpop.permute.xlu0 %1809
        %1811 = vrot.lane.b32.xlu0 %v612, 48
        %v1812 = vpop.permute.xlu0 %1811
        %1813 = vrot.lane.b32.xlu0 %v615, 48
        %v1814 = vpop.permute.xlu0 %1813
        %1815 = vrot.lane.b32.xlu0 %v618, 48
        %v1816 = vpop.permute.xlu0 %1815
        %1817 = vrot.lane.b32.xlu0 %v676, 48
        %v1818 = vpop.permute.xlu0 %1817
        %1819 = vrot.lane.b32.xlu0 %v690, 48
        %v1820 = vpop.permute.xlu0 %1819
        %1829 = vrot.lane.b32.xlu0 %v628, 52
        %v1830 = vpop.permute.xlu0 %1829
        %1831 = vrot.lane.b32.xlu0 %v631, 52
        %v1832 = vpop.permute.xlu0 %1831
        %1833 = vrot.lane.b32.xlu0 %v634, 52
        %v1834 = vpop.permute.xlu0 %1833
        %1835 = vrot.lane.b32.xlu0 %v637, 52
        %v1836 = vpop.permute.xlu0 %1835
        %1837 = vrot.lane.b32.xlu0 %v640, 52
        %v1838 = vpop.permute.xlu0 %1837
        %1839 = vrot.lane.b32.xlu0 %v643, 52
        %v1840 = vpop.permute.xlu0 %1839
        %1841 = vrot.lane.b32.xlu0 %v679, 52
        %v1842 = vpop.permute.xlu0 %1841
        %1843 = vrot.lane.b32.xlu0 %v693, 52
        %v1844 = vpop.permute.xlu0 %1843
        %1853 = vrot.lane.b32.xlu0 %v653, 56
        %v1854 = vpop.permute.xlu0 %1853
        %1855 = vrot.lane.b32.xlu0 %v656, 56
        %v1856 = vpop.permute.xlu0 %1855
        %1857 = vrot.lane.b32.xlu0 %v659, 56
        %v1858 = vpop.permute.xlu0 %1857
        %1859 = vrot.lane.b32.xlu0 %v662, 56
        %v1860 = vpop.permute.xlu0 %1859
        %1861 = vrot.lane.b32.xlu0 %v665, 56
        %v1862 = vpop.permute.xlu0 %1861
        %1863 = vrot.lane.b32.xlu0 %v668, 56
        %v1864 = vpop.permute.xlu0 %1863
        %1865 = vrot.lane.b32.xlu0 %v682, 56
        %v1866 = vpop.permute.xlu0 %1865
        %1867 = vrot.lane.b32.xlu0 %v696, 56
        %v1868 = vpop.permute.xlu0 %1867
        %1877 = vrot.lane.b32.xlu0 %v535, 60
        %v1878 = vpop.permute.xlu0 %1877
        %1879 = vrot.lane.b32.xlu0 %v537, 60
        %v1880 = vpop.permute.xlu0 %1879
        %1881 = vrot.lane.b32.xlu0 %v539, 60
        %v1882 = vpop.permute.xlu0 %1881
        %1883 = vrot.lane.b32.xlu0 %v541, 60
        %v1884 = vpop.permute.xlu0 %1883
        %1885 = vrot.lane.b32.xlu0 %v543, 60
        %v1886 = vpop.permute.xlu0 %1885
        %1887 = vrot.lane.b32.xlu0 %v545, 60
        %v1888 = vpop.permute.xlu0 %1887
        %1889 = vrot.lane.b32.xlu0 %v547, 60
        %v1890 = vpop.permute.xlu0 %1889
        %1891 = vrot.lane.b32.xlu0 %v549, 60
        %v1892 = vpop.permute.xlu0 %1891
        %vm1901 = vcmask 31744
        %v1902 = vsel %vm1901, %v529, %v1542
        %v1903 = vsel %vm1901, %v531, %v1544
        %v1904 = vsel %vm1901, %v533, %v1546
        %v1905 = vsel %vm1901, %v535, %v1548
        %v1906 = vsel %vm1901, %v537, %v1550
        %v1907 = vsel %vm1901, %v539, %v1552
        %v1908 = vsel %vm1901, %v541, %v1554
        %v1909 = vsel %vm1901, %v543, %v1556
        %vm1910 = vcmask 64512
        %v1911 = vsel %vm1910, %v1902, %v1566
        %v1912 = vsel %vm1910, %v1903, %v1568
        %v1913 = vsel %vm1910, %v1904, %v1570
        %v1914 = vsel %vm1910, %v1905, %v1572
        %v1915 = vsel %vm1910, %v1906, %v1574
        %v1916 = vsel %vm1910, %v1907, %v1576
        %v1917 = vsel %vm1910, %v1908, %v1578
        %v1918 = vsel %vm1910, %v1909, %v1580
        %vm1919 = vcmask 97280
        %v1920 = vsel %vm1919, %v1911, %v1590
        %v1921 = vsel %vm1919, %v1912, %v1592
        %v1922 = vsel %vm1919, %v1913, %v1594
        %v1923 = vsel %vm1919, %v1914, %v1596
        %v1924 = vsel %vm1919, %v1915, %v1598
        %v1925 = vsel %vm1919, %v1916, %v1600
        %v1926 = vsel %vm1919, %v1917, %v1602
        %v1927 = vsel %vm1919, %v1918, %v1604
        %vm1928 = vcmask 130048
        %v1929 = vsel %vm1928, %v1920, %v1614
        %v1930 = vsel %vm1928, %v1921, %v1616
        %v1931 = vsel %vm1928, %v1922, %v1618
        %v1932 = vsel %vm1928, %v1923, %v1620
        %v1933 = vsel %vm1928, %v1924, %v1622
        %v1934 = vsel %vm1928, %v1925, %v1624
        %v1935 = vsel %vm1928, %v1926, %v1626
        %v1936 = vsel %vm1928, %v1927, %v1628
        %vm1937 = vcmask 162816
        %v1938 = vsel %vm1937, %v1929, %v1638
        %v1939 = vsel %vm1937, %v1930, %v1640
        %v1940 = vsel %vm1937, %v1931, %v1642
        %v1941 = vsel %vm1937, %v1932, %v1644
        %v1942 = vsel %vm1937, %v1933, %v1646
        %v1943 = vsel %vm1937, %v1934, %v1648
        %v1944 = vsel %vm1937, %v1935, %v1650
        %v1945 = vsel %vm1937, %v1936, %v1652
        %vm1946 = vcmask 195584
        %v1947 = vsel %vm1946, %v1938, %v1662
        %v1948 = vsel %vm1946, %v1939, %v1664
        %v1949 = vsel %vm1946, %v1940, %v1666
        %v1950 = vsel %vm1946, %v1941, %v1668
        %v1951 = vsel %vm1946, %v1942, %v1670
        %v1952 = vsel %vm1946, %v1943, %v1672
        %v1953 = vsel %vm1946, %v1944, %v1674
        %v1954 = vsel %vm1946, %v1945, %v1676
        %vm1955 = vcmask 228352
        %v1956 = vsel %vm1955, %v1947, %v1686
        %v1957 = vsel %vm1955, %v1948, %v1688
        %v1958 = vsel %vm1955, %v1949, %v1690
        %v1959 = vsel %vm1955, %v1950, %v1692
        %v1960 = vsel %vm1955, %v1951, %v1694
        %v1961 = vsel %vm1955, %v1952, %v1696
        %v1962 = vsel %vm1955, %v1953, %v1698
        %v1963 = vsel %vm1955, %v1954, %v1700
        %vm1964 = vcmask 261120
        %v1965 = vsel %vm1964, %v1956, %v1710
        %v1966 = vsel %vm1964, %v1957, %v1712
        %v1967 = vsel %vm1964, %v1958, %v1714
        %v1968 = vsel %vm1964, %v1959, %v1716
        %v1969 = vsel %vm1964, %v1960, %v1718
        %v1970 = vsel %vm1964, %v1961, %v1720
        %v1971 = vsel %vm1964, %v1962, %v1722
        %v1972 = vsel %vm1964, %v1963, %v1724
        %vm1973 = vcmask 293888
        %v1974 = vsel %vm1973, %v1965, %v1734
        %v1975 = vsel %vm1973, %v1966, %v1736
        %v1976 = vsel %vm1973, %v1967, %v1738
        %v1977 = vsel %vm1973, %v1968, %v1740
        %v1978 = vsel %vm1973, %v1969, %v1742
        %v1979 = vsel %vm1973, %v1970, %v1744
        %v1980 = vsel %vm1973, %v1971, %v1746
        %v1981 = vsel %vm1973, %v1972, %v1748
        %vm1982 = vcmask 326656
        %v1983 = vsel %vm1982, %v1974, %v1758
        %v1984 = vsel %vm1982, %v1975, %v1760
        %v1985 = vsel %vm1982, %v1976, %v1762
        %v1986 = vsel %vm1982, %v1977, %v1764
        %v1987 = vsel %vm1982, %v1978, %v1766
        %v1988 = vsel %vm1982, %v1979, %v1768
        %v1989 = vsel %vm1982, %v1980, %v1770
        %v1990 = vsel %vm1982, %v1981, %v1772
        %vm1991 = vcmask 359424
        %v1992 = vsel %vm1991, %v1983, %v1782
        %v1993 = vsel %vm1991, %v1984, %v1784
        %v1994 = vsel %vm1991, %v1985, %v1786
        %v1995 = vsel %vm1991, %v1986, %v1788
        %v1996 = vsel %vm1991, %v1987, %v1790
        %v1997 = vsel %vm1991, %v1988, %v1792
        %v1998 = vsel %vm1991, %v1989, %v1794
        %v1999 = vsel %vm1991, %v1990, %v1796
        %vm2000 = vcmask 392192
        %v2001 = vsel %vm2000, %v1992, %v1806
        %v2002 = vsel %vm2000, %v1993, %v1808
        %v2003 = vsel %vm2000, %v1994, %v1810
        %v2004 = vsel %vm2000, %v1995, %v1812
        %v2005 = vsel %vm2000, %v1996, %v1814
        %v2006 = vsel %vm2000, %v1997, %v1816
        %v2007 = vsel %vm2000, %v1998, %v1818
        %v2008 = vsel %vm2000, %v1999, %v1820
        %vm2009 = vcmask 424960
        %v2010 = vsel %vm2009, %v2001, %v1830
        %v2011 = vsel %vm2009, %v2002, %v1832
        %v2012 = vsel %vm2009, %v2003, %v1834
        %v2013 = vsel %vm2009, %v2004, %v1836
        %v2014 = vsel %vm2009, %v2005, %v1838
        %v2015 = vsel %vm2009, %v2006, %v1840
        %v2016 = vsel %vm2009, %v2007, %v1842
        %v2017 = vsel %vm2009, %v2008, %v1844
        %vm2018 = vcmask 457728
        %v2019 = vsel %vm2018, %v2010, %v1854
        %v2020 = vsel %vm2018, %v2011, %v1856
        %v2021 = vsel %vm2018, %v2012, %v1858
        %v2022 = vsel %vm2018, %v2013, %v1860
        %v2023 = vsel %vm2018, %v2014, %v1862
        %v2024 = vsel %vm2018, %v2015, %v1864
        %v2025 = vsel %vm2018, %v2016, %v1866
        %v2026 = vsel %vm2018, %v2017, %v1868
        %vm2027 = vcmask 490496
        %v2028 = vsel %vm2027, %v2019, %v1878
        %v2029 = vsel %vm2027, %v2020, %v1880
        %v2030 = vsel %vm2027, %v2021, %v1882
        %v2031 = vsel %vm2027, %v2022, %v1884
        %v2032 = vsel %vm2027, %v2023, %v1886
        %v2033 = vsel %vm2027, %v2024, %v1888
        %v2034 = vsel %vm2027, %v2025, %v1890
        %v2035 = vsel %vm2027, %v2026, %v1892
        %2036 = vrot.lane.b32.xlu0 %v606, 4
        %v2037 = vpop.permute.xlu0 %2036
        %2038 = vrot.lane.b32.xlu0 %v609, 4
        %v2039 = vpop.permute.xlu0 %2038
        %2040 = vrot.lane.b32.xlu0 %v612, 4
        %v2041 = vpop.permute.xlu0 %2040
        %2042 = vrot.lane.b32.xlu0 %v615, 4
        %v2043 = vpop.permute.xlu0 %2042
        %2044 = vrot.lane.b32.xlu0 %v618, 4
        %v2045 = vpop.permute.xlu0 %2044
        %2046 = vrot.lane.b32.xlu0 %v676, 4
        %v2047 = vpop.permute.xlu0 %2046
        %2048 = vrot.lane.b32.xlu0 %v690, 4
        %v2049 = vpop.permute.xlu0 %2048
        %2050 = vrot.lane.b32.xlu0 %v712, 4
        %v2051 = vpop.permute.xlu0 %2050
        %2060 = vrot.lane.b32.xlu0 %v631, 8
        %v2061 = vpop.permute.xlu0 %2060
        %2062 = vrot.lane.b32.xlu0 %v634, 8
        %v2063 = vpop.permute.xlu0 %2062
        %2064 = vrot.lane.b32.xlu0 %v637, 8
        %v2065 = vpop.permute.xlu0 %2064
        %2066 = vrot.lane.b32.xlu0 %v640, 8
        %v2067 = vpop.permute.xlu0 %2066
        %2068 = vrot.lane.b32.xlu0 %v643, 8
        %v2069 = vpop.permute.xlu0 %2068
        %2070 = vrot.lane.b32.xlu0 %v679, 8
        %v2071 = vpop.permute.xlu0 %2070
        %2072 = vrot.lane.b32.xlu0 %v693, 8
        %v2073 = vpop.permute.xlu0 %2072
        %2074 = vrot.lane.b32.xlu0 %v715, 8
        %v2075 = vpop.permute.xlu0 %2074
        %2084 = vrot.lane.b32.xlu0 %v656, 12
        %v2085 = vpop.permute.xlu0 %2084
        %2086 = vrot.lane.b32.xlu0 %v659, 12
        %v2087 = vpop.permute.xlu0 %2086
        %2088 = vrot.lane.b32.xlu0 %v662, 12
        %v2089 = vpop.permute.xlu0 %2088
        %2090 = vrot.lane.b32.xlu0 %v665, 12
        %v2091 = vpop.permute.xlu0 %2090
        %2092 = vrot.lane.b32.xlu0 %v668, 12
        %v2093 = vpop.permute.xlu0 %2092
        %2094 = vrot.lane.b32.xlu0 %v682, 12
        %v2095 = vpop.permute.xlu0 %2094
        %2096 = vrot.lane.b32.xlu0 %v696, 12
        %v2097 = vpop.permute.xlu0 %2096
        %2098 = vrot.lane.b32.xlu0 %v718, 12
        %v2099 = vpop.permute.xlu0 %2098
        %2108 = vrot.lane.b32.xlu0 %v537, 16
        %v2109 = vpop.permute.xlu0 %2108
        %2110 = vrot.lane.b32.xlu0 %v539, 16
        %v2111 = vpop.permute.xlu0 %2110
        %2112 = vrot.lane.b32.xlu0 %v541, 16
        %v2113 = vpop.permute.xlu0 %2112
        %2114 = vrot.lane.b32.xlu0 %v543, 16
        %v2115 = vpop.permute.xlu0 %2114
        %2116 = vrot.lane.b32.xlu0 %v545, 16
        %v2117 = vpop.permute.xlu0 %2116
        %2118 = vrot.lane.b32.xlu0 %v547, 16
        %v2119 = vpop.permute.xlu0 %2118
        %2120 = vrot.lane.b32.xlu0 %v549, 16
        %v2121 = vpop.permute.xlu0 %2120
        %2122 = vrot.lane.b32.xlu0 %v551, 16
        %v2123 = vpop.permute.xlu0 %2122
        %2132 = vrot.lane.b32.xlu0 %v584, 20
        %v2133 = vpop.permute.xlu0 %2132
        %2134 = vrot.lane.b32.xlu0 %v587, 20
        %v2135 = vpop.permute.xlu0 %2134
        %2136 = vrot.lane.b32.xlu0 %v590, 20
        %v2137 = vpop.permute.xlu0 %2136
        %2138 = vrot.lane.b32.xlu0 %v593, 20
        %v2139 = vpop.permute.xlu0 %2138
        %2140 = vrot.lane.b32.xlu0 %v673, 20
        %v2141 = vpop.permute.xlu0 %2140
        %2142 = vrot.lane.b32.xlu0 %v687, 20
        %v2143 = vpop.permute.xlu0 %2142
        %2144 = vrot.lane.b32.xlu0 %v701, 20
        %v2145 = vpop.permute.xlu0 %2144
        %2146 = vrot.lane.b32.xlu0 %v723, 20
        %v2147 = vpop.permute.xlu0 %2146
        %2156 = vrot.lane.b32.xlu0 %v609, 24
        %v2157 = vpop.permute.xlu0 %2156
        %2158 = vrot.lane.b32.xlu0 %v612, 24
        %v2159 = vpop.permute.xlu0 %2158
        %2160 = vrot.lane.b32.xlu0 %v615, 24
        %v2161 = vpop.permute.xlu0 %2160
        %2162 = vrot.lane.b32.xlu0 %v618, 24
        %v2163 = vpop.permute.xlu0 %2162
        %2164 = vrot.lane.b32.xlu0 %v676, 24
        %v2165 = vpop.permute.xlu0 %2164
        %2166 = vrot.lane.b32.xlu0 %v690, 24
        %v2167 = vpop.permute.xlu0 %2166
        %2168 = vrot.lane.b32.xlu0 %v712, 24
        %v2169 = vpop.permute.xlu0 %2168
        %2170 = vrot.lane.b32.xlu0 %v726, 24
        %v2171 = vpop.permute.xlu0 %2170
        %2180 = vrot.lane.b32.xlu0 %v634, 28
        %v2181 = vpop.permute.xlu0 %2180
        %2182 = vrot.lane.b32.xlu0 %v637, 28
        %v2183 = vpop.permute.xlu0 %2182
        %2184 = vrot.lane.b32.xlu0 %v640, 28
        %v2185 = vpop.permute.xlu0 %2184
        %2186 = vrot.lane.b32.xlu0 %v643, 28
        %v2187 = vpop.permute.xlu0 %2186
        %2188 = vrot.lane.b32.xlu0 %v679, 28
        %v2189 = vpop.permute.xlu0 %2188
        %2190 = vrot.lane.b32.xlu0 %v693, 28
        %v2191 = vpop.permute.xlu0 %2190
        %2192 = vrot.lane.b32.xlu0 %v715, 28
        %v2193 = vpop.permute.xlu0 %2192
        %2194 = vrot.lane.b32.xlu0 %v729, 28
        %v2195 = vpop.permute.xlu0 %2194
        %2204 = vrot.lane.b32.xlu0 %v659, 32
        %v2205 = vpop.permute.xlu0 %2204
        %2206 = vrot.lane.b32.xlu0 %v662, 32
        %v2207 = vpop.permute.xlu0 %2206
        %2208 = vrot.lane.b32.xlu0 %v665, 32
        %v2209 = vpop.permute.xlu0 %2208
        %2210 = vrot.lane.b32.xlu0 %v668, 32
        %v2211 = vpop.permute.xlu0 %2210
        %2212 = vrot.lane.b32.xlu0 %v682, 32
        %v2213 = vpop.permute.xlu0 %2212
        %2214 = vrot.lane.b32.xlu0 %v696, 32
        %v2215 = vpop.permute.xlu0 %2214
        %2216 = vrot.lane.b32.xlu0 %v718, 32
        %v2217 = vpop.permute.xlu0 %2216
        %2218 = vrot.lane.b32.xlu0 %v732, 32
        %v2219 = vpop.permute.xlu0 %2218
        %2228 = vrot.lane.b32.xlu0 %v733, 36
        %v2229 = vpop.permute.xlu0 %2228
        %2230 = vrot.lane.b32.xlu0 %v735, 36
        %v2231 = vpop.permute.xlu0 %2230
        %2232 = vrot.lane.b32.xlu0 %v737, 36
        %v2233 = vpop.permute.xlu0 %2232
        %2234 = vrot.lane.b32.xlu0 %v739, 36
        %v2235 = vpop.permute.xlu0 %2234
        %2236 = vrot.lane.b32.xlu0 %v741, 36
        %v2237 = vpop.permute.xlu0 %2236
        %2238 = vrot.lane.b32.xlu0 %v743, 36
        %v2239 = vpop.permute.xlu0 %2238
        %2240 = vrot.lane.b32.xlu0 %v745, 36
        %v2241 = vpop.permute.xlu0 %2240
        %2242 = vrot.lane.b32.xlu0 %v747, 36
        %v2243 = vpop.permute.xlu0 %2242
        %2252 = vrot.lane.b32.xlu0 %v775, 40
        %v2253 = vpop.permute.xlu0 %2252
        %2254 = vrot.lane.b32.xlu0 %v778, 40
        %v2255 = vpop.permute.xlu0 %2254
        %2256 = vrot.lane.b32.xlu0 %v781, 40
        %v2257 = vpop.permute.xlu0 %2256
        %2258 = vrot.lane.b32.xlu0 %v784, 40
        %v2259 = vpop.permute.xlu0 %2258
        %2260 = vrot.lane.b32.xlu0 %v787, 40
        %v2261 = vpop.permute.xlu0 %2260
        %2262 = vrot.lane.b32.xlu0 %v790, 40
        %v2263 = vpop.permute.xlu0 %2262
        %2264 = vrot.lane.b32.xlu0 %v793, 40
        %v2265 = vpop.permute.xlu0 %2264
        %2266 = vrot.lane.b32.xlu0 %v796, 40
        %v2267 = vpop.permute.xlu0 %2266
        %2276 = vrot.lane.b32.xlu0 %v799, 44
        %v2277 = vpop.permute.xlu0 %2276
        %2278 = vrot.lane.b32.xlu0 %v802, 44
        %v2279 = vpop.permute.xlu0 %2278
        %2280 = vrot.lane.b32.xlu0 %v805, 44
        %v2281 = vpop.permute.xlu0 %2280
        %2282 = vrot.lane.b32.xlu0 %v808, 44
        %v2283 = vpop.permute.xlu0 %2282
        %2284 = vrot.lane.b32.xlu0 %v811, 44
        %v2285 = vpop.permute.xlu0 %2284
        %2286 = vrot.lane.b32.xlu0 %v814, 44
        %v2287 = vpop.permute.xlu0 %2286
        %2288 = vrot.lane.b32.xlu0 %v817, 44
        %v2289 = vpop.permute.xlu0 %2288
        %2290 = vrot.lane.b32.xlu0 %v820, 44
        %v2291 = vpop.permute.xlu0 %2290
        %2300 = vrot.lane.b32.xlu0 %v823, 48
        %v2301 = vpop.permute.xlu0 %2300
        %2302 = vrot.lane.b32.xlu0 %v826, 48
        %v2303 = vpop.permute.xlu0 %2302
        %2304 = vrot.lane.b32.xlu0 %v829, 48
        %v2305 = vpop.permute.xlu0 %2304
        %2306 = vrot.lane.b32.xlu0 %v832, 48
        %v2307 = vpop.permute.xlu0 %2306
        %2308 = vrot.lane.b32.xlu0 %v835, 48
        %v2309 = vpop.permute.xlu0 %2308
        %2310 = vrot.lane.b32.xlu0 %v838, 48
        %v2311 = vpop.permute.xlu0 %2310
        %2312 = vrot.lane.b32.xlu0 %v841, 48
        %v2313 = vpop.permute.xlu0 %2312
        %2314 = vrot.lane.b32.xlu0 %v844, 48
        %v2315 = vpop.permute.xlu0 %2314
        %2324 = vrot.lane.b32.xlu0 %v847, 52
        %v2325 = vpop.permute.xlu0 %2324
        %2326 = vrot.lane.b32.xlu0 %v850, 52
        %v2327 = vpop.permute.xlu0 %2326
        %2328 = vrot.lane.b32.xlu0 %v853, 52
        %v2329 = vpop.permute.xlu0 %2328
        %2330 = vrot.lane.b32.xlu0 %v856, 52
        %v2331 = vpop.permute.xlu0 %2330
        %2332 = vrot.lane.b32.xlu0 %v859, 52
        %v2333 = vpop.permute.xlu0 %2332
        %2334 = vrot.lane.b32.xlu0 %v862, 52
        %v2335 = vpop.permute.xlu0 %2334
        %2336 = vrot.lane.b32.xlu0 %v865, 52
        %v2337 = vpop.permute.xlu0 %2336
        %2338 = vrot.lane.b32.xlu0 %v868, 52
        %v2339 = vpop.permute.xlu0 %2338
        %2348 = vrot.lane.b32.xlu0 %v735, 56
        %v2349 = vpop.permute.xlu0 %2348
        %2350 = vrot.lane.b32.xlu0 %v737, 56
        %v2351 = vpop.permute.xlu0 %2350
        %2352 = vrot.lane.b32.xlu0 %v739, 56
        %v2353 = vpop.permute.xlu0 %2352
        %2354 = vrot.lane.b32.xlu0 %v741, 56
        %v2355 = vpop.permute.xlu0 %2354
        %2356 = vrot.lane.b32.xlu0 %v743, 56
        %v2357 = vpop.permute.xlu0 %2356
        %2358 = vrot.lane.b32.xlu0 %v745, 56
        %v2359 = vpop.permute.xlu0 %2358
        %2360 = vrot.lane.b32.xlu0 %v747, 56
        %v2361 = vpop.permute.xlu0 %2360
        %2362 = vrot.lane.b32.xlu0 %v749, 56
        %v2363 = vpop.permute.xlu0 %2362
        %2372 = vrot.lane.b32.xlu0 %v778, 60
        %v2373 = vpop.permute.xlu0 %2372
        %2374 = vrot.lane.b32.xlu0 %v781, 60
        %v2375 = vpop.permute.xlu0 %2374
        %2376 = vrot.lane.b32.xlu0 %v784, 60
        %v2377 = vpop.permute.xlu0 %2376
        %2378 = vrot.lane.b32.xlu0 %v787, 60
        %v2379 = vpop.permute.xlu0 %2378
        %2380 = vrot.lane.b32.xlu0 %v790, 60
        %v2381 = vpop.permute.xlu0 %2380
        %2382 = vrot.lane.b32.xlu0 %v793, 60
        %v2383 = vpop.permute.xlu0 %2382
        %2384 = vrot.lane.b32.xlu0 %v796, 60
        %v2385 = vpop.permute.xlu0 %2384
        %2386 = vrot.lane.b32.xlu0 %v873, 60
        %v2387 = vpop.permute.xlu0 %2386
        %v2396 = vsel %vm1901, %v581, %v2037
        %v2397 = vsel %vm1901, %v584, %v2039
        %v2398 = vsel %vm1901, %v587, %v2041
        %v2399 = vsel %vm1901, %v590, %v2043
        %v2400 = vsel %vm1901, %v593, %v2045
        %v2401 = vsel %vm1901, %v673, %v2047
        %v2402 = vsel %vm1901, %v687, %v2049
        %v2403 = vsel %vm1901, %v701, %v2051
        %v2404 = vsel %vm1910, %v2396, %v2061
        %v2405 = vsel %vm1910, %v2397, %v2063
        %v2406 = vsel %vm1910, %v2398, %v2065
        %v2407 = vsel %vm1910, %v2399, %v2067
        %v2408 = vsel %vm1910, %v2400, %v2069
        %v2409 = vsel %vm1910, %v2401, %v2071
        %v2410 = vsel %vm1910, %v2402, %v2073
        %v2411 = vsel %vm1910, %v2403, %v2075
        %v2412 = vsel %vm1919, %v2404, %v2085
        %v2413 = vsel %vm1919, %v2405, %v2087
        %v2414 = vsel %vm1919, %v2406, %v2089
        %v2415 = vsel %vm1919, %v2407, %v2091
        %v2416 = vsel %vm1919, %v2408, %v2093
        %v2417 = vsel %vm1919, %v2409, %v2095
        %v2418 = vsel %vm1919, %v2410, %v2097
        %v2419 = vsel %vm1919, %v2411, %v2099
        %v2420 = vsel %vm1928, %v2412, %v2109
        %v2421 = vsel %vm1928, %v2413, %v2111
        %v2422 = vsel %vm1928, %v2414, %v2113
        %v2423 = vsel %vm1928, %v2415, %v2115
        %v2424 = vsel %vm1928, %v2416, %v2117
        %v2425 = vsel %vm1928, %v2417, %v2119
        %v2426 = vsel %vm1928, %v2418, %v2121
        %v2427 = vsel %vm1928, %v2419, %v2123
        %v2428 = vsel %vm1937, %v2420, %v2133
        %v2429 = vsel %vm1937, %v2421, %v2135
        %v2430 = vsel %vm1937, %v2422, %v2137
        %v2431 = vsel %vm1937, %v2423, %v2139
        %v2432 = vsel %vm1937, %v2424, %v2141
        %v2433 = vsel %vm1937, %v2425, %v2143
        %v2434 = vsel %vm1937, %v2426, %v2145
        %v2435 = vsel %vm1937, %v2427, %v2147
        %v2436 = vsel %vm1946, %v2428, %v2157
        %v2437 = vsel %vm1946, %v2429, %v2159
        %v2438 = vsel %vm1946, %v2430, %v2161
        %v2439 = vsel %vm1946, %v2431, %v2163
        %v2440 = vsel %vm1946, %v2432, %v2165
        %v2441 = vsel %vm1946, %v2433, %v2167
        %v2442 = vsel %vm1946, %v2434, %v2169
        %v2443 = vsel %vm1946, %v2435, %v2171
        %v2444 = vsel %vm1955, %v2436, %v2181
        %v2445 = vsel %vm1955, %v2437, %v2183
        %v2446 = vsel %vm1955, %v2438, %v2185
        %v2447 = vsel %vm1955, %v2439, %v2187
        %v2448 = vsel %vm1955, %v2440, %v2189
        %v2449 = vsel %vm1955, %v2441, %v2191
        %v2450 = vsel %vm1955, %v2442, %v2193
        %v2451 = vsel %vm1955, %v2443, %v2195
        %v2452 = vsel %vm1964, %v2444, %v2205
        %v2453 = vsel %vm1964, %v2445, %v2207
        %v2454 = vsel %vm1964, %v2446, %v2209
        %v2455 = vsel %vm1964, %v2447, %v2211
        %v2456 = vsel %vm1964, %v2448, %v2213
        %v2457 = vsel %vm1964, %v2449, %v2215
        %v2458 = vsel %vm1964, %v2450, %v2217
        %v2459 = vsel %vm1964, %v2451, %v2219
        %v2460 = vsel %vm1973, %v2452, %v2229
        %v2461 = vsel %vm1973, %v2453, %v2231
        %v2462 = vsel %vm1973, %v2454, %v2233
        %v2463 = vsel %vm1973, %v2455, %v2235
        %v2464 = vsel %vm1973, %v2456, %v2237
        %v2465 = vsel %vm1973, %v2457, %v2239
        %v2466 = vsel %vm1973, %v2458, %v2241
        %v2467 = vsel %vm1973, %v2459, %v2243
        %v2468 = vsel %vm1982, %v2460, %v2253
        %v2469 = vsel %vm1982, %v2461, %v2255
        %v2470 = vsel %vm1982, %v2462, %v2257
        %v2471 = vsel %vm1982, %v2463, %v2259
        %v2472 = vsel %vm1982, %v2464, %v2261
        %v2473 = vsel %vm1982, %v2465, %v2263
        %v2474 = vsel %vm1982, %v2466, %v2265
        %v2475 = vsel %vm1982, %v2467, %v2267
        %v2476 = vsel %vm1991, %v2468, %v2277
        %v2477 = vsel %vm1991, %v2469, %v2279
        %v2478 = vsel %vm1991, %v2470, %v2281
        %v2479 = vsel %vm1991, %v2471, %v2283
        %v2480 = vsel %vm1991, %v2472, %v2285
        %v2481 = vsel %vm1991, %v2473, %v2287
        %v2482 = vsel %vm1991, %v2474, %v2289
        %v2483 = vsel %vm1991, %v2475, %v2291
        %v2484 = vsel %vm2000, %v2476, %v2301
        %v2485 = vsel %vm2000, %v2477, %v2303
        %v2486 = vsel %vm2000, %v2478, %v2305
        %v2487 = vsel %vm2000, %v2479, %v2307
        %v2488 = vsel %vm2000, %v2480, %v2309
        %v2489 = vsel %vm2000, %v2481, %v2311
        %v2490 = vsel %vm2000, %v2482, %v2313
        %v2491 = vsel %vm2000, %v2483, %v2315
        %v2492 = vsel %vm2009, %v2484, %v2325
        %v2493 = vsel %vm2009, %v2485, %v2327
        %v2494 = vsel %vm2009, %v2486, %v2329
        %v2495 = vsel %vm2009, %v2487, %v2331
        %v2496 = vsel %vm2009, %v2488, %v2333
        %v2497 = vsel %vm2009, %v2489, %v2335
        %v2498 = vsel %vm2009, %v2490, %v2337
        %v2499 = vsel %vm2009, %v2491, %v2339
        %v2500 = vsel %vm2018, %v2492, %v2349
        %v2501 = vsel %vm2018, %v2493, %v2351
        %v2502 = vsel %vm2018, %v2494, %v2353
        %v2503 = vsel %vm2018, %v2495, %v2355
        %v2504 = vsel %vm2018, %v2496, %v2357
        %v2505 = vsel %vm2018, %v2497, %v2359
        %v2506 = vsel %vm2018, %v2498, %v2361
        %v2507 = vsel %vm2018, %v2499, %v2363
        %v2508 = vsel %vm2027, %v2500, %v2373
        %v2509 = vsel %vm2027, %v2501, %v2375
        %v2510 = vsel %vm2027, %v2502, %v2377
        %v2511 = vsel %vm2027, %v2503, %v2379
        %v2512 = vsel %vm2027, %v2504, %v2381
        %v2513 = vsel %vm2027, %v2505, %v2383
        %v2514 = vsel %vm2027, %v2506, %v2385
        %v2515 = vsel %vm2027, %v2507, %v2387
        %2516 = vrot.lane.b32.xlu0 %v826, 4
        %v2517 = vpop.permute.xlu0 %2516
        %2518 = vrot.lane.b32.xlu0 %v829, 4
        %v2519 = vpop.permute.xlu0 %2518
        %2520 = vrot.lane.b32.xlu0 %v832, 4
        %v2521 = vpop.permute.xlu0 %2520
        %2522 = vrot.lane.b32.xlu0 %v835, 4
        %v2523 = vpop.permute.xlu0 %2522
        %2524 = vrot.lane.b32.xlu0 %v838, 4
        %v2525 = vpop.permute.xlu0 %2524
        %2526 = vrot.lane.b32.xlu0 %v841, 4
        %v2527 = vpop.permute.xlu0 %2526
        %2528 = vrot.lane.b32.xlu0 %v844, 4
        %v2529 = vpop.permute.xlu0 %2528
        %2530 = vrot.lane.b32.xlu0 %v887, 4
        %v2531 = vpop.permute.xlu0 %2530
        %2540 = vrot.lane.b32.xlu0 %v850, 8
        %v2541 = vpop.permute.xlu0 %2540
        %2542 = vrot.lane.b32.xlu0 %v853, 8
        %v2543 = vpop.permute.xlu0 %2542
        %2544 = vrot.lane.b32.xlu0 %v856, 8
        %v2545 = vpop.permute.xlu0 %2544
        %2546 = vrot.lane.b32.xlu0 %v859, 8
        %v2547 = vpop.permute.xlu0 %2546
        %2548 = vrot.lane.b32.xlu0 %v862, 8
        %v2549 = vpop.permute.xlu0 %2548
        %2550 = vrot.lane.b32.xlu0 %v865, 8
        %v2551 = vpop.permute.xlu0 %2550
        %2552 = vrot.lane.b32.xlu0 %v868, 8
        %v2553 = vpop.permute.xlu0 %2552
        %2554 = vrot.lane.b32.xlu0 %v890, 8
        %v2555 = vpop.permute.xlu0 %2554
        %2564 = vrot.lane.b32.xlu0 %v737, 12
        %v2565 = vpop.permute.xlu0 %2564
        %2566 = vrot.lane.b32.xlu0 %v739, 12
        %v2567 = vpop.permute.xlu0 %2566
        %2568 = vrot.lane.b32.xlu0 %v741, 12
        %v2569 = vpop.permute.xlu0 %2568
        %2570 = vrot.lane.b32.xlu0 %v743, 12
        %v2571 = vpop.permute.xlu0 %2570
        %2572 = vrot.lane.b32.xlu0 %v745, 12
        %v2573 = vpop.permute.xlu0 %2572
        %2574 = vrot.lane.b32.xlu0 %v747, 12
        %v2575 = vpop.permute.xlu0 %2574
        %2576 = vrot.lane.b32.xlu0 %v749, 12
        %v2577 = vpop.permute.xlu0 %2576
        %2578 = vrot.lane.b32.xlu0 %v751, 12
        %v2579 = vpop.permute.xlu0 %2578
        %2588 = vrot.lane.b32.xlu0 %v781, 16
        %v2589 = vpop.permute.xlu0 %2588
        %2590 = vrot.lane.b32.xlu0 %v784, 16
        %v2591 = vpop.permute.xlu0 %2590
        %2592 = vrot.lane.b32.xlu0 %v787, 16
        %v2593 = vpop.permute.xlu0 %2592
        %2594 = vrot.lane.b32.xlu0 %v790, 16
        %v2595 = vpop.permute.xlu0 %2594
        %2596 = vrot.lane.b32.xlu0 %v793, 16
        %v2597 = vpop.permute.xlu0 %2596
        %2598 = vrot.lane.b32.xlu0 %v796, 16
        %v2599 = vpop.permute.xlu0 %2598
        %2600 = vrot.lane.b32.xlu0 %v873, 16
        %v2601 = vpop.permute.xlu0 %2600
        %2602 = vrot.lane.b32.xlu0 %v895, 16
        %v2603 = vpop.permute.xlu0 %2602
        %2612 = vrot.lane.b32.xlu0 %v805, 20
        %v2613 = vpop.permute.xlu0 %2612
        %2614 = vrot.lane.b32.xlu0 %v808, 20
        %v2615 = vpop.permute.xlu0 %2614
        %2616 = vrot.lane.b32.xlu0 %v811, 20
        %v2617 = vpop.permute.xlu0 %2616
        %2618 = vrot.lane.b32.xlu0 %v814, 20
        %v2619 = vpop.permute.xlu0 %2618
        %2620 = vrot.lane.b32.xlu0 %v817, 20
        %v2621 = vpop.permute.xlu0 %2620
        %2622 = vrot.lane.b32.xlu0 %v820, 20
        %v2623 = vpop.permute.xlu0 %2622
        %2624 = vrot.lane.b32.xlu0 %v876, 20
        %v2625 = vpop.permute.xlu0 %2624
        %2626 = vrot.lane.b32.xlu0 %v898, 20
        %v2627 = vpop.permute.xlu0 %2626
        %2636 = vrot.lane.b32.xlu0 %v829, 24
        %v2637 = vpop.permute.xlu0 %2636
        %2638 = vrot.lane.b32.xlu0 %v832, 24
        %v2639 = vpop.permute.xlu0 %2638
        %2640 = vrot.lane.b32.xlu0 %v835, 24
        %v2641 = vpop.permute.xlu0 %2640
        %2642 = vrot.lane.b32.xlu0 %v838, 24
        %v2643 = vpop.permute.xlu0 %2642
        %2644 = vrot.lane.b32.xlu0 %v841, 24
        %v2645 = vpop.permute.xlu0 %2644
        %2646 = vrot.lane.b32.xlu0 %v844, 24
        %v2647 = vpop.permute.xlu0 %2646
        %2648 = vrot.lane.b32.xlu0 %v887, 24
        %v2649 = vpop.permute.xlu0 %2648
        %2650 = vrot.lane.b32.xlu0 %v901, 24
        %v2651 = vpop.permute.xlu0 %2650
        %2660 = vrot.lane.b32.xlu0 %v853, 28
        %v2661 = vpop.permute.xlu0 %2660
        %2662 = vrot.lane.b32.xlu0 %v856, 28
        %v2663 = vpop.permute.xlu0 %2662
        %2664 = vrot.lane.b32.xlu0 %v859, 28
        %v2665 = vpop.permute.xlu0 %2664
        %2666 = vrot.lane.b32.xlu0 %v862, 28
        %v2667 = vpop.permute.xlu0 %2666
        %2668 = vrot.lane.b32.xlu0 %v865, 28
        %v2669 = vpop.permute.xlu0 %2668
        %2670 = vrot.lane.b32.xlu0 %v868, 28
        %v2671 = vpop.permute.xlu0 %2670
        %2672 = vrot.lane.b32.xlu0 %v890, 28
        %v2673 = vpop.permute.xlu0 %2672
        %2674 = vrot.lane.b32.xlu0 %v904, 28
        %v2675 = vpop.permute.xlu0 %2674
        %2684 = vrot.lane.b32.xlu0 %v739, 32
        %v2685 = vpop.permute.xlu0 %2684
        %2686 = vrot.lane.b32.xlu0 %v741, 32
        %v2687 = vpop.permute.xlu0 %2686
        %2688 = vrot.lane.b32.xlu0 %v743, 32
        %v2689 = vpop.permute.xlu0 %2688
        %2690 = vrot.lane.b32.xlu0 %v745, 32
        %v2691 = vpop.permute.xlu0 %2690
        %2692 = vrot.lane.b32.xlu0 %v747, 32
        %v2693 = vpop.permute.xlu0 %2692
        %2694 = vrot.lane.b32.xlu0 %v749, 32
        %v2695 = vpop.permute.xlu0 %2694
        %2696 = vrot.lane.b32.xlu0 %v751, 32
        %v2697 = vpop.permute.xlu0 %2696
        %2698 = vrot.lane.b32.xlu0 %v753, 32
        %v2699 = vpop.permute.xlu0 %2698
        %2708 = vrot.lane.b32.xlu0 %v784, 36
        %v2709 = vpop.permute.xlu0 %2708
        %2710 = vrot.lane.b32.xlu0 %v787, 36
        %v2711 = vpop.permute.xlu0 %2710
        %2712 = vrot.lane.b32.xlu0 %v790, 36
        %v2713 = vpop.permute.xlu0 %2712
        %2714 = vrot.lane.b32.xlu0 %v793, 36
        %v2715 = vpop.permute.xlu0 %2714
        %2716 = vrot.lane.b32.xlu0 %v796, 36
        %v2717 = vpop.permute.xlu0 %2716
        %2718 = vrot.lane.b32.xlu0 %v873, 36
        %v2719 = vpop.permute.xlu0 %2718
        %2720 = vrot.lane.b32.xlu0 %v895, 36
        %v2721 = vpop.permute.xlu0 %2720
        %2722 = vrot.lane.b32.xlu0 %v909, 36
        %v2723 = vpop.permute.xlu0 %2722
        %2732 = vrot.lane.b32.xlu0 %v808, 40
        %v2733 = vpop.permute.xlu0 %2732
        %2734 = vrot.lane.b32.xlu0 %v811, 40
        %v2735 = vpop.permute.xlu0 %2734
        %2736 = vrot.lane.b32.xlu0 %v814, 40
        %v2737 = vpop.permute.xlu0 %2736
        %2738 = vrot.lane.b32.xlu0 %v817, 40
        %v2739 = vpop.permute.xlu0 %2738
        %2740 = vrot.lane.b32.xlu0 %v820, 40
        %v2741 = vpop.permute.xlu0 %2740
        %2742 = vrot.lane.b32.xlu0 %v876, 40
        %v2743 = vpop.permute.xlu0 %2742
        %2744 = vrot.lane.b32.xlu0 %v898, 40
        %v2745 = vpop.permute.xlu0 %2744
        %2746 = vrot.lane.b32.xlu0 %v912, 40
        %v2747 = vpop.permute.xlu0 %2746
        %2756 = vrot.lane.b32.xlu0 %v832, 44
        %v2757 = vpop.permute.xlu0 %2756
        %2758 = vrot.lane.b32.xlu0 %v835, 44
        %v2759 = vpop.permute.xlu0 %2758
        %2760 = vrot.lane.b32.xlu0 %v838, 44
        %v2761 = vpop.permute.xlu0 %2760
        %2762 = vrot.lane.b32.xlu0 %v841, 44
        %v2763 = vpop.permute.xlu0 %2762
        %2764 = vrot.lane.b32.xlu0 %v844, 44
        %v2765 = vpop.permute.xlu0 %2764
        %2766 = vrot.lane.b32.xlu0 %v887, 44
        %v2767 = vpop.permute.xlu0 %2766
        %2768 = vrot.lane.b32.xlu0 %v901, 44
        %v2769 = vpop.permute.xlu0 %2768
        %2770 = vrot.lane.b32.xlu0 %v915, 44
        %v2771 = vpop.permute.xlu0 %2770
        %2780 = vrot.lane.b32.xlu0 %v856, 48
        %v2781 = vpop.permute.xlu0 %2780
        %2782 = vrot.lane.b32.xlu0 %v859, 48
        %v2783 = vpop.permute.xlu0 %2782
        %2784 = vrot.lane.b32.xlu0 %v862, 48
        %v2785 = vpop.permute.xlu0 %2784
        %2786 = vrot.lane.b32.xlu0 %v865, 48
        %v2787 = vpop.permute.xlu0 %2786
        %2788 = vrot.lane.b32.xlu0 %v868, 48
        %v2789 = vpop.permute.xlu0 %2788
        %2790 = vrot.lane.b32.xlu0 %v890, 48
        %v2791 = vpop.permute.xlu0 %2790
        %2792 = vrot.lane.b32.xlu0 %v904, 48
        %v2793 = vpop.permute.xlu0 %2792
        %2794 = vrot.lane.b32.xlu0 %v918, 48
        %v2795 = vpop.permute.xlu0 %2794
        %2804 = vrot.lane.b32.xlu0 %v741, 52
        %v2805 = vpop.permute.xlu0 %2804
        %2806 = vrot.lane.b32.xlu0 %v743, 52
        %v2807 = vpop.permute.xlu0 %2806
        %2808 = vrot.lane.b32.xlu0 %v745, 52
        %v2809 = vpop.permute.xlu0 %2808
        %2810 = vrot.lane.b32.xlu0 %v747, 52
        %v2811 = vpop.permute.xlu0 %2810
        %2812 = vrot.lane.b32.xlu0 %v749, 52
        %v2813 = vpop.permute.xlu0 %2812
        %2814 = vrot.lane.b32.xlu0 %v751, 52
        %v2815 = vpop.permute.xlu0 %2814
        %2816 = vrot.lane.b32.xlu0 %v753, 52
        %v2817 = vpop.permute.xlu0 %2816
        %2818 = vrot.lane.b32.xlu0 %v755, 52
        %v2819 = vpop.permute.xlu0 %2818
        %2828 = vrot.lane.b32.xlu0 %v787, 56
        %v2829 = vpop.permute.xlu0 %2828
        %2830 = vrot.lane.b32.xlu0 %v790, 56
        %v2831 = vpop.permute.xlu0 %2830
        %2832 = vrot.lane.b32.xlu0 %v793, 56
        %v2833 = vpop.permute.xlu0 %2832
        %2834 = vrot.lane.b32.xlu0 %v796, 56
        %v2835 = vpop.permute.xlu0 %2834
        %2836 = vrot.lane.b32.xlu0 %v873, 56
        %v2837 = vpop.permute.xlu0 %2836
        %2838 = vrot.lane.b32.xlu0 %v895, 56
        %v2839 = vpop.permute.xlu0 %2838
        %2840 = vrot.lane.b32.xlu0 %v909, 56
        %v2841 = vpop.permute.xlu0 %2840
        %2842 = vrot.lane.b32.xlu0 %v923, 56
        %v2843 = vpop.permute.xlu0 %2842
        %2852 = vrot.lane.b32.xlu0 %v811, 60
        %v2853 = vpop.permute.xlu0 %2852
        %2854 = vrot.lane.b32.xlu0 %v814, 60
        %v2855 = vpop.permute.xlu0 %2854
        %2856 = vrot.lane.b32.xlu0 %v817, 60
        %v2857 = vpop.permute.xlu0 %2856
        %2858 = vrot.lane.b32.xlu0 %v820, 60
        %v2859 = vpop.permute.xlu0 %2858
        %2860 = vrot.lane.b32.xlu0 %v876, 60
        %v2861 = vpop.permute.xlu0 %2860
        %2862 = vrot.lane.b32.xlu0 %v898, 60
        %v2863 = vpop.permute.xlu0 %2862
        %2864 = vrot.lane.b32.xlu0 %v912, 60
        %v2865 = vpop.permute.xlu0 %2864
        %2866 = vrot.lane.b32.xlu0 %v926, 60
        %v2867 = vpop.permute.xlu0 %2866
        %v2876 = vsel %vm1901, %v802, %v2517
        %v2877 = vsel %vm1901, %v805, %v2519
        %v2878 = vsel %vm1901, %v808, %v2521
        %v2879 = vsel %vm1901, %v811, %v2523
        %v2880 = vsel %vm1901, %v814, %v2525
        %v2881 = vsel %vm1901, %v817, %v2527
        %v2882 = vsel %vm1901, %v820, %v2529
        %v2883 = vsel %vm1901, %v876, %v2531
        %v2884 = vsel %vm1910, %v2876, %v2541
        %v2885 = vsel %vm1910, %v2877, %v2543
        %v2886 = vsel %vm1910, %v2878, %v2545
        %v2887 = vsel %vm1910, %v2879, %v2547
        %v2888 = vsel %vm1910, %v2880, %v2549
        %v2889 = vsel %vm1910, %v2881, %v2551
        %v2890 = vsel %vm1910, %v2882, %v2553
        %v2891 = vsel %vm1910, %v2883, %v2555
        %v2892 = vsel %vm1919, %v2884, %v2565
        %v2893 = vsel %vm1919, %v2885, %v2567
        %v2894 = vsel %vm1919, %v2886, %v2569
        %v2895 = vsel %vm1919, %v2887, %v2571
        %v2896 = vsel %vm1919, %v2888, %v2573
        %v2897 = vsel %vm1919, %v2889, %v2575
        %v2898 = vsel %vm1919, %v2890, %v2577
        %v2899 = vsel %vm1919, %v2891, %v2579
        %v2900 = vsel %vm1928, %v2892, %v2589
        %v2901 = vsel %vm1928, %v2893, %v2591
        %v2902 = vsel %vm1928, %v2894, %v2593
        %v2903 = vsel %vm1928, %v2895, %v2595
        %v2904 = vsel %vm1928, %v2896, %v2597
        %v2905 = vsel %vm1928, %v2897, %v2599
        %v2906 = vsel %vm1928, %v2898, %v2601
        %v2907 = vsel %vm1928, %v2899, %v2603
        %v2908 = vsel %vm1937, %v2900, %v2613
        %v2909 = vsel %vm1937, %v2901, %v2615
        %v2910 = vsel %vm1937, %v2902, %v2617
        %v2911 = vsel %vm1937, %v2903, %v2619
        %v2912 = vsel %vm1937, %v2904, %v2621
        %v2913 = vsel %vm1937, %v2905, %v2623
        %v2914 = vsel %vm1937, %v2906, %v2625
        %v2915 = vsel %vm1937, %v2907, %v2627
        %v2916 = vsel %vm1946, %v2908, %v2637
        %v2917 = vsel %vm1946, %v2909, %v2639
        %v2918 = vsel %vm1946, %v2910, %v2641
        %v2919 = vsel %vm1946, %v2911, %v2643
        %v2920 = vsel %vm1946, %v2912, %v2645
        %v2921 = vsel %vm1946, %v2913, %v2647
        %v2922 = vsel %vm1946, %v2914, %v2649
        %v2923 = vsel %vm1946, %v2915, %v2651
        %v2924 = vsel %vm1955, %v2916, %v2661
        %v2925 = vsel %vm1955, %v2917, %v2663
        %v2926 = vsel %vm1955, %v2918, %v2665
        %v2927 = vsel %vm1955, %v2919, %v2667
        %v2928 = vsel %vm1955, %v2920, %v2669
        %v2929 = vsel %vm1955, %v2921, %v2671
        %v2930 = vsel %vm1955, %v2922, %v2673
        %v2931 = vsel %vm1955, %v2923, %v2675
        %v2932 = vsel %vm1964, %v2924, %v2685
        %v2933 = vsel %vm1964, %v2925, %v2687
        %v2934 = vsel %vm1964, %v2926, %v2689
        %v2935 = vsel %vm1964, %v2927, %v2691
        %v2936 = vsel %vm1964, %v2928, %v2693
        %v2937 = vsel %vm1964, %v2929, %v2695
        %v2938 = vsel %vm1964, %v2930, %v2697
        %v2939 = vsel %vm1964, %v2931, %v2699
        %v2940 = vsel %vm1973, %v2932, %v2709
        %v2941 = vsel %vm1973, %v2933, %v2711
        %v2942 = vsel %vm1973, %v2934, %v2713
        %v2943 = vsel %vm1973, %v2935, %v2715
        %v2944 = vsel %vm1973, %v2936, %v2717
        %v2945 = vsel %vm1973, %v2937, %v2719
        %v2946 = vsel %vm1973, %v2938, %v2721
        %v2947 = vsel %vm1973, %v2939, %v2723
        %v2948 = vsel %vm1982, %v2940, %v2733
        %v2949 = vsel %vm1982, %v2941, %v2735
        %v2950 = vsel %vm1982, %v2942, %v2737
        %v2951 = vsel %vm1982, %v2943, %v2739
        %v2952 = vsel %vm1982, %v2944, %v2741
        %v2953 = vsel %vm1982, %v2945, %v2743
        %v2954 = vsel %vm1982, %v2946, %v2745
        %v2955 = vsel %vm1982, %v2947, %v2747
        %v2956 = vsel %vm1991, %v2948, %v2757
        %v2957 = vsel %vm1991, %v2949, %v2759
        %v2958 = vsel %vm1991, %v2950, %v2761
        %v2959 = vsel %vm1991, %v2951, %v2763
        %v2960 = vsel %vm1991, %v2952, %v2765
        %v2961 = vsel %vm1991, %v2953, %v2767
        %v2962 = vsel %vm1991, %v2954, %v2769
        %v2963 = vsel %vm1991, %v2955, %v2771
        %v2964 = vsel %vm2000, %v2956, %v2781
        %v2965 = vsel %vm2000, %v2957, %v2783
        %v2966 = vsel %vm2000, %v2958, %v2785
        %v2967 = vsel %vm2000, %v2959, %v2787
        %v2968 = vsel %vm2000, %v2960, %v2789
        %v2969 = vsel %vm2000, %v2961, %v2791
        %v2970 = vsel %vm2000, %v2962, %v2793
        %v2971 = vsel %vm2000, %v2963, %v2795
        %v2972 = vsel %vm2009, %v2964, %v2805
        %v2973 = vsel %vm2009, %v2965, %v2807
        %v2974 = vsel %vm2009, %v2966, %v2809
        %v2975 = vsel %vm2009, %v2967, %v2811
        %v2976 = vsel %vm2009, %v2968, %v2813
        %v2977 = vsel %vm2009, %v2969, %v2815
        %v2978 = vsel %vm2009, %v2970, %v2817
        %v2979 = vsel %vm2009, %v2971, %v2819
        %v2980 = vsel %vm2018, %v2972, %v2829
        %v2981 = vsel %vm2018, %v2973, %v2831
        %v2982 = vsel %vm2018, %v2974, %v2833
        %v2983 = vsel %vm2018, %v2975, %v2835
        %v2984 = vsel %vm2018, %v2976, %v2837
        %v2985 = vsel %vm2018, %v2977, %v2839
        %v2986 = vsel %vm2018, %v2978, %v2841
        %v2987 = vsel %vm2018, %v2979, %v2843
        %v2988 = vsel %vm2027, %v2980, %v2853
        %v2989 = vsel %vm2027, %v2981, %v2855
        %v2990 = vsel %vm2027, %v2982, %v2857
        %v2991 = vsel %vm2027, %v2983, %v2859
        %v2992 = vsel %vm2027, %v2984, %v2861
        %v2993 = vsel %vm2027, %v2985, %v2863
        %v2994 = vsel %vm2027, %v2986, %v2865
        %v2995 = vsel %vm2027, %v2987, %v2867
        %2996 = vrot.lane.b32.xlu0 %v859, 4
        %v2997 = vpop.permute.xlu0 %2996
        %2998 = vrot.lane.b32.xlu0 %v862, 4
        %v2999 = vpop.permute.xlu0 %2998
        %3000 = vrot.lane.b32.xlu0 %v865, 4
        %v3001 = vpop.permute.xlu0 %3000
        %3002 = vrot.lane.b32.xlu0 %v868, 4
        %v3003 = vpop.permute.xlu0 %3002
        %3004 = vrot.lane.b32.xlu0 %v890, 4
        %v3005 = vpop.permute.xlu0 %3004
        %3006 = vrot.lane.b32.xlu0 %v904, 4
        %v3007 = vpop.permute.xlu0 %3006
        %3008 = vrot.lane.b32.xlu0 %v918, 4
        %v3009 = vpop.permute.xlu0 %3008
        %3010 = vrot.lane.b32.xlu0 %v940, 4
        %v3011 = vpop.permute.xlu0 %3010
        %3020 = vrot.lane.b32.xlu0 %v941, 8
        %v3021 = vpop.permute.xlu0 %3020
        %3022 = vrot.lane.b32.xlu0 %v943, 8
        %v3023 = vpop.permute.xlu0 %3022
        %3024 = vrot.lane.b32.xlu0 %v945, 8
        %v3025 = vpop.permute.xlu0 %3024
        %3026 = vrot.lane.b32.xlu0 %v947, 8
        %v3027 = vpop.permute.xlu0 %3026
        %3028 = vrot.lane.b32.xlu0 %v949, 8
        %v3029 = vpop.permute.xlu0 %3028
        %3030 = vrot.lane.b32.xlu0 %v951, 8
        %v3031 = vpop.permute.xlu0 %3030
        %3032 = vrot.lane.b32.xlu0 %v953, 8
        %v3033 = vpop.permute.xlu0 %3032
        %3034 = vrot.lane.b32.xlu0 %v955, 8
        %v3035 = vpop.permute.xlu0 %3034
        %3044 = vrot.lane.b32.xlu0 %v983, 12
        %v3045 = vpop.permute.xlu0 %3044
        %3046 = vrot.lane.b32.xlu0 %v986, 12
        %v3047 = vpop.permute.xlu0 %3046
        %3048 = vrot.lane.b32.xlu0 %v989, 12
        %v3049 = vpop.permute.xlu0 %3048
        %3050 = vrot.lane.b32.xlu0 %v992, 12
        %v3051 = vpop.permute.xlu0 %3050
        %3052 = vrot.lane.b32.xlu0 %v995, 12
        %v3053 = vpop.permute.xlu0 %3052
        %3054 = vrot.lane.b32.xlu0 %v998, 12
        %v3055 = vpop.permute.xlu0 %3054
        %3056 = vrot.lane.b32.xlu0 %v1001, 12
        %v3057 = vpop.permute.xlu0 %3056
        %3058 = vrot.lane.b32.xlu0 %v1004, 12
        %v3059 = vpop.permute.xlu0 %3058
        %3068 = vrot.lane.b32.xlu0 %v1007, 16
        %v3069 = vpop.permute.xlu0 %3068
        %3070 = vrot.lane.b32.xlu0 %v1010, 16
        %v3071 = vpop.permute.xlu0 %3070
        %3072 = vrot.lane.b32.xlu0 %v1013, 16
        %v3073 = vpop.permute.xlu0 %3072
        %3074 = vrot.lane.b32.xlu0 %v1016, 16
        %v3075 = vpop.permute.xlu0 %3074
        %3076 = vrot.lane.b32.xlu0 %v1019, 16
        %v3077 = vpop.permute.xlu0 %3076
        %3078 = vrot.lane.b32.xlu0 %v1022, 16
        %v3079 = vpop.permute.xlu0 %3078
        %3080 = vrot.lane.b32.xlu0 %v1025, 16
        %v3081 = vpop.permute.xlu0 %3080
        %3082 = vrot.lane.b32.xlu0 %v1028, 16
        %v3083 = vpop.permute.xlu0 %3082
        %3092 = vrot.lane.b32.xlu0 %v1031, 20
        %v3093 = vpop.permute.xlu0 %3092
        %3094 = vrot.lane.b32.xlu0 %v1034, 20
        %v3095 = vpop.permute.xlu0 %3094
        %3096 = vrot.lane.b32.xlu0 %v1037, 20
        %v3097 = vpop.permute.xlu0 %3096
        %3098 = vrot.lane.b32.xlu0 %v1040, 20
        %v3099 = vpop.permute.xlu0 %3098
        %3100 = vrot.lane.b32.xlu0 %v1043, 20
        %v3101 = vpop.permute.xlu0 %3100
        %3102 = vrot.lane.b32.xlu0 %v1046, 20
        %v3103 = vpop.permute.xlu0 %3102
        %3104 = vrot.lane.b32.xlu0 %v1049, 20
        %v3105 = vpop.permute.xlu0 %3104
        %3106 = vrot.lane.b32.xlu0 %v1052, 20
        %v3107 = vpop.permute.xlu0 %3106
        %3116 = vrot.lane.b32.xlu0 %v1055, 24
        %v3117 = vpop.permute.xlu0 %3116
        %3118 = vrot.lane.b32.xlu0 %v1058, 24
        %v3119 = vpop.permute.xlu0 %3118
        %3120 = vrot.lane.b32.xlu0 %v1061, 24
        %v3121 = vpop.permute.xlu0 %3120
        %3122 = vrot.lane.b32.xlu0 %v1064, 24
        %v3123 = vpop.permute.xlu0 %3122
        %3124 = vrot.lane.b32.xlu0 %v1067, 24
        %v3125 = vpop.permute.xlu0 %3124
        %3126 = vrot.lane.b32.xlu0 %v1070, 24
        %v3127 = vpop.permute.xlu0 %3126
        %3128 = vrot.lane.b32.xlu0 %v1073, 24
        %v3129 = vpop.permute.xlu0 %3128
        %3130 = vrot.lane.b32.xlu0 %v1076, 24
        %v3131 = vpop.permute.xlu0 %3130
        %3140 = vrot.lane.b32.xlu0 %v943, 28
        %v3141 = vpop.permute.xlu0 %3140
        %3142 = vrot.lane.b32.xlu0 %v945, 28
        %v3143 = vpop.permute.xlu0 %3142
        %3144 = vrot.lane.b32.xlu0 %v947, 28
        %v3145 = vpop.permute.xlu0 %3144
        %3146 = vrot.lane.b32.xlu0 %v949, 28
        %v3147 = vpop.permute.xlu0 %3146
        %3148 = vrot.lane.b32.xlu0 %v951, 28
        %v3149 = vpop.permute.xlu0 %3148
        %3150 = vrot.lane.b32.xlu0 %v953, 28
        %v3151 = vpop.permute.xlu0 %3150
        %3152 = vrot.lane.b32.xlu0 %v955, 28
        %v3153 = vpop.permute.xlu0 %3152
        %3154 = vrot.lane.b32.xlu0 %v957, 28
        %v3155 = vpop.permute.xlu0 %3154
        %3164 = vrot.lane.b32.xlu0 %v986, 32
        %v3165 = vpop.permute.xlu0 %3164
        %3166 = vrot.lane.b32.xlu0 %v989, 32
        %v3167 = vpop.permute.xlu0 %3166
        %3168 = vrot.lane.b32.xlu0 %v992, 32
        %v3169 = vpop.permute.xlu0 %3168
        %3170 = vrot.lane.b32.xlu0 %v995, 32
        %v3171 = vpop.permute.xlu0 %3170
        %3172 = vrot.lane.b32.xlu0 %v998, 32
        %v3173 = vpop.permute.xlu0 %3172
        %3174 = vrot.lane.b32.xlu0 %v1001, 32
        %v3175 = vpop.permute.xlu0 %3174
        %3176 = vrot.lane.b32.xlu0 %v1004, 32
        %v3177 = vpop.permute.xlu0 %3176
        %3178 = vrot.lane.b32.xlu0 %v1081, 32
        %v3179 = vpop.permute.xlu0 %3178
        %3188 = vrot.lane.b32.xlu0 %v1010, 36
        %v3189 = vpop.permute.xlu0 %3188
        %3190 = vrot.lane.b32.xlu0 %v1013, 36
        %v3191 = vpop.permute.xlu0 %3190
        %3192 = vrot.lane.b32.xlu0 %v1016, 36
        %v3193 = vpop.permute.xlu0 %3192
        %3194 = vrot.lane.b32.xlu0 %v1019, 36
        %v3195 = vpop.permute.xlu0 %3194
        %3196 = vrot.lane.b32.xlu0 %v1022, 36
        %v3197 = vpop.permute.xlu0 %3196
        %3198 = vrot.lane.b32.xlu0 %v1025, 36
        %v3199 = vpop.permute.xlu0 %3198
        %3200 = vrot.lane.b32.xlu0 %v1028, 36
        %v3201 = vpop.permute.xlu0 %3200
        %3202 = vrot.lane.b32.xlu0 %v1084, 36
        %v3203 = vpop.permute.xlu0 %3202
        %3212 = vrot.lane.b32.xlu0 %v1034, 40
        %v3213 = vpop.permute.xlu0 %3212
        %3214 = vrot.lane.b32.xlu0 %v1037, 40
        %v3215 = vpop.permute.xlu0 %3214
        %3216 = vrot.lane.b32.xlu0 %v1040, 40
        %v3217 = vpop.permute.xlu0 %3216
        %3218 = vrot.lane.b32.xlu0 %v1043, 40
        %v3219 = vpop.permute.xlu0 %3218
        %3220 = vrot.lane.b32.xlu0 %v1046, 40
        %v3221 = vpop.permute.xlu0 %3220
        %3222 = vrot.lane.b32.xlu0 %v1049, 40
        %v3223 = vpop.permute.xlu0 %3222
        %3224 = vrot.lane.b32.xlu0 %v1052, 40
        %v3225 = vpop.permute.xlu0 %3224
        %3226 = vrot.lane.b32.xlu0 %v1087, 40
        %v3227 = vpop.permute.xlu0 %3226
        %3236 = vrot.lane.b32.xlu0 %v1058, 44
        %v3237 = vpop.permute.xlu0 %3236
        %3238 = vrot.lane.b32.xlu0 %v1061, 44
        %v3239 = vpop.permute.xlu0 %3238
        %3240 = vrot.lane.b32.xlu0 %v1064, 44
        %v3241 = vpop.permute.xlu0 %3240
        %3242 = vrot.lane.b32.xlu0 %v1067, 44
        %v3243 = vpop.permute.xlu0 %3242
        %3244 = vrot.lane.b32.xlu0 %v1070, 44
        %v3245 = vpop.permute.xlu0 %3244
        %3246 = vrot.lane.b32.xlu0 %v1073, 44
        %v3247 = vpop.permute.xlu0 %3246
        %3248 = vrot.lane.b32.xlu0 %v1076, 44
        %v3249 = vpop.permute.xlu0 %3248
        %3250 = vrot.lane.b32.xlu0 %v1090, 44
        %v3251 = vpop.permute.xlu0 %3250
        %3260 = vrot.lane.b32.xlu0 %v945, 48
        %v3261 = vpop.permute.xlu0 %3260
        %3262 = vrot.lane.b32.xlu0 %v947, 48
        %v3263 = vpop.permute.xlu0 %3262
        %3264 = vrot.lane.b32.xlu0 %v949, 48
        %v3265 = vpop.permute.xlu0 %3264
        %3266 = vrot.lane.b32.xlu0 %v951, 48
        %v3267 = vpop.permute.xlu0 %3266
        %3268 = vrot.lane.b32.xlu0 %v953, 48
        %v3269 = vpop.permute.xlu0 %3268
        %3270 = vrot.lane.b32.xlu0 %v955, 48
        %v3271 = vpop.permute.xlu0 %3270
        %3272 = vrot.lane.b32.xlu0 %v957, 48
        %v3273 = vpop.permute.xlu0 %3272
        %3274 = vrot.lane.b32.xlu0 %v959, 48
        %v3275 = vpop.permute.xlu0 %3274
        %3284 = vrot.lane.b32.xlu0 %v989, 52
        %v3285 = vpop.permute.xlu0 %3284
        %3286 = vrot.lane.b32.xlu0 %v992, 52
        %v3287 = vpop.permute.xlu0 %3286
        %3288 = vrot.lane.b32.xlu0 %v995, 52
        %v3289 = vpop.permute.xlu0 %3288
        %3290 = vrot.lane.b32.xlu0 %v998, 52
        %v3291 = vpop.permute.xlu0 %3290
        %3292 = vrot.lane.b32.xlu0 %v1001, 52
        %v3293 = vpop.permute.xlu0 %3292
        %3294 = vrot.lane.b32.xlu0 %v1004, 52
        %v3295 = vpop.permute.xlu0 %3294
        %3296 = vrot.lane.b32.xlu0 %v1081, 52
        %v3297 = vpop.permute.xlu0 %3296
        %3298 = vrot.lane.b32.xlu0 %v1095, 52
        %v3299 = vpop.permute.xlu0 %3298
        %3308 = vrot.lane.b32.xlu0 %v1013, 56
        %v3309 = vpop.permute.xlu0 %3308
        %3310 = vrot.lane.b32.xlu0 %v1016, 56
        %v3311 = vpop.permute.xlu0 %3310
        %3312 = vrot.lane.b32.xlu0 %v1019, 56
        %v3313 = vpop.permute.xlu0 %3312
        %3314 = vrot.lane.b32.xlu0 %v1022, 56
        %v3315 = vpop.permute.xlu0 %3314
        %3316 = vrot.lane.b32.xlu0 %v1025, 56
        %v3317 = vpop.permute.xlu0 %3316
        %3318 = vrot.lane.b32.xlu0 %v1028, 56
        %v3319 = vpop.permute.xlu0 %3318
        %3320 = vrot.lane.b32.xlu0 %v1084, 56
        %v3321 = vpop.permute.xlu0 %3320
        %3322 = vrot.lane.b32.xlu0 %v1098, 56
        %v3323 = vpop.permute.xlu0 %3322
        %3332 = vrot.lane.b32.xlu0 %v1037, 60
        %v3333 = vpop.permute.xlu0 %3332
        %3334 = vrot.lane.b32.xlu0 %v1040, 60
        %v3335 = vpop.permute.xlu0 %3334
        %3336 = vrot.lane.b32.xlu0 %v1043, 60
        %v3337 = vpop.permute.xlu0 %3336
        %3338 = vrot.lane.b32.xlu0 %v1046, 60
        %v3339 = vpop.permute.xlu0 %3338
        %3340 = vrot.lane.b32.xlu0 %v1049, 60
        %v3341 = vpop.permute.xlu0 %3340
        %3342 = vrot.lane.b32.xlu0 %v1052, 60
        %v3343 = vpop.permute.xlu0 %3342
        %3344 = vrot.lane.b32.xlu0 %v1087, 60
        %v3345 = vpop.permute.xlu0 %3344
        %3346 = vrot.lane.b32.xlu0 %v1101, 60
        %v3347 = vpop.permute.xlu0 %3346
        %v3356 = vsel %vm1901, %v835, %v2997
        %v3357 = vsel %vm1901, %v838, %v2999
        %v3358 = vsel %vm1901, %v841, %v3001
        %v3359 = vsel %vm1901, %v844, %v3003
        %v3360 = vsel %vm1901, %v887, %v3005
        %v3361 = vsel %vm1901, %v901, %v3007
        %v3362 = vsel %vm1901, %v915, %v3009
        %v3363 = vsel %vm1901, %v929, %v3011
        %v3364 = vsel %vm1910, %v3356, %v3021
        %v3365 = vsel %vm1910, %v3357, %v3023
        %v3366 = vsel %vm1910, %v3358, %v3025
        %v3367 = vsel %vm1910, %v3359, %v3027
        %v3368 = vsel %vm1910, %v3360, %v3029
        %v3369 = vsel %vm1910, %v3361, %v3031
        %v3370 = vsel %vm1910, %v3362, %v3033
        %v3371 = vsel %vm1910, %v3363, %v3035
        %v3372 = vsel %vm1919, %v3364, %v3045
        %v3373 = vsel %vm1919, %v3365, %v3047
        %v3374 = vsel %vm1919, %v3366, %v3049
        %v3375 = vsel %vm1919, %v3367, %v3051
        %v3376 = vsel %vm1919, %v3368, %v3053
        %v3377 = vsel %vm1919, %v3369, %v3055
        %v3378 = vsel %vm1919, %v3370, %v3057
        %v3379 = vsel %vm1919, %v3371, %v3059
        %v3380 = vsel %vm1928, %v3372, %v3069
        %v3381 = vsel %vm1928, %v3373, %v3071
        %v3382 = vsel %vm1928, %v3374, %v3073
        %v3383 = vsel %vm1928, %v3375, %v3075
        %v3384 = vsel %vm1928, %v3376, %v3077
        %v3385 = vsel %vm1928, %v3377, %v3079
        %v3386 = vsel %vm1928, %v3378, %v3081
        %v3387 = vsel %vm1928, %v3379, %v3083
        %v3388 = vsel %vm1937, %v3380, %v3093
        %v3389 = vsel %vm1937, %v3381, %v3095
        %v3390 = vsel %vm1937, %v3382, %v3097
        %v3391 = vsel %vm1937, %v3383, %v3099
        %v3392 = vsel %vm1937, %v3384, %v3101
        %v3393 = vsel %vm1937, %v3385, %v3103
        %v3394 = vsel %vm1937, %v3386, %v3105
        %v3395 = vsel %vm1937, %v3387, %v3107
        %v3396 = vsel %vm1946, %v3388, %v3117
        %v3397 = vsel %vm1946, %v3389, %v3119
        %v3398 = vsel %vm1946, %v3390, %v3121
        %v3399 = vsel %vm1946, %v3391, %v3123
        %v3400 = vsel %vm1946, %v3392, %v3125
        %v3401 = vsel %vm1946, %v3393, %v3127
        %v3402 = vsel %vm1946, %v3394, %v3129
        %v3403 = vsel %vm1946, %v3395, %v3131
        %v3404 = vsel %vm1955, %v3396, %v3141
        %v3405 = vsel %vm1955, %v3397, %v3143
        %v3406 = vsel %vm1955, %v3398, %v3145
        %v3407 = vsel %vm1955, %v3399, %v3147
        %v3408 = vsel %vm1955, %v3400, %v3149
        %v3409 = vsel %vm1955, %v3401, %v3151
        %v3410 = vsel %vm1955, %v3402, %v3153
        %v3411 = vsel %vm1955, %v3403, %v3155
        %v3412 = vsel %vm1964, %v3404, %v3165
        %v3413 = vsel %vm1964, %v3405, %v3167
        %v3414 = vsel %vm1964, %v3406, %v3169
        %v3415 = vsel %vm1964, %v3407, %v3171
        %v3416 = vsel %vm1964, %v3408, %v3173
        %v3417 = vsel %vm1964, %v3409, %v3175
        %v3418 = vsel %vm1964, %v3410, %v3177
        %v3419 = vsel %vm1964, %v3411, %v3179
        %v3420 = vsel %vm1973, %v3412, %v3189
        %v3421 = vsel %vm1973, %v3413, %v3191
        %v3422 = vsel %vm1973, %v3414, %v3193
        %v3423 = vsel %vm1973, %v3415, %v3195
        %v3424 = vsel %vm1973, %v3416, %v3197
        %v3425 = vsel %vm1973, %v3417, %v3199
        %v3426 = vsel %vm1973, %v3418, %v3201
        %v3427 = vsel %vm1973, %v3419, %v3203
        %v3428 = vsel %vm1982, %v3420, %v3213
        %v3429 = vsel %vm1982, %v3421, %v3215
        %v3430 = vsel %vm1982, %v3422, %v3217
        %v3431 = vsel %vm1982, %v3423, %v3219
        %v3432 = vsel %vm1982, %v3424, %v3221
        %v3433 = vsel %vm1982, %v3425, %v3223
        %v3434 = vsel %vm1982, %v3426, %v3225
        %v3435 = vsel %vm1982, %v3427, %v3227
        %v3436 = vsel %vm1991, %v3428, %v3237
        %v3437 = vsel %vm1991, %v3429, %v3239
        %v3438 = vsel %vm1991, %v3430, %v3241
        %v3439 = vsel %vm1991, %v3431, %v3243
        %v3440 = vsel %vm1991, %v3432, %v3245
        %v3441 = vsel %vm1991, %v3433, %v3247
        %v3442 = vsel %vm1991, %v3434, %v3249
        %v3443 = vsel %vm1991, %v3435, %v3251
        %v3444 = vsel %vm2000, %v3436, %v3261
        %v3445 = vsel %vm2000, %v3437, %v3263
        %v3446 = vsel %vm2000, %v3438, %v3265
        %v3447 = vsel %vm2000, %v3439, %v3267
        %v3448 = vsel %vm2000, %v3440, %v3269
        %v3449 = vsel %vm2000, %v3441, %v3271
        %v3450 = vsel %vm2000, %v3442, %v3273
        %v3451 = vsel %vm2000, %v3443, %v3275
        %v3452 = vsel %vm2009, %v3444, %v3285
        %v3453 = vsel %vm2009, %v3445, %v3287
        %v3454 = vsel %vm2009, %v3446, %v3289
        %v3455 = vsel %vm2009, %v3447, %v3291
        %v3456 = vsel %vm2009, %v3448, %v3293
        %v3457 = vsel %vm2009, %v3449, %v3295
        %v3458 = vsel %vm2009, %v3450, %v3297
        %v3459 = vsel %vm2009, %v3451, %v3299
        %v3460 = vsel %vm2018, %v3452, %v3309
        %v3461 = vsel %vm2018, %v3453, %v3311
        %v3462 = vsel %vm2018, %v3454, %v3313
        %v3463 = vsel %vm2018, %v3455, %v3315
        %v3464 = vsel %vm2018, %v3456, %v3317
        %v3465 = vsel %vm2018, %v3457, %v3319
        %v3466 = vsel %vm2018, %v3458, %v3321
        %v3467 = vsel %vm2018, %v3459, %v3323
        %v3468 = vsel %vm2027, %v3460, %v3333
        %v3469 = vsel %vm2027, %v3461, %v3335
        %v3470 = vsel %vm2027, %v3462, %v3337
        %v3471 = vsel %vm2027, %v3463, %v3339
        %v3472 = vsel %vm2027, %v3464, %v3341
        %v3473 = vsel %vm2027, %v3465, %v3343
        %v3474 = vsel %vm2027, %v3466, %v3345
        %v3475 = vsel %vm2027, %v3467, %v3347
        %3476 = vrot.lane.b32.xlu0 %v947, 4
        %v3477 = vpop.permute.xlu0 %3476
        %3478 = vrot.lane.b32.xlu0 %v949, 4
        %v3479 = vpop.permute.xlu0 %3478
        %3480 = vrot.lane.b32.xlu0 %v951, 4
        %v3481 = vpop.permute.xlu0 %3480
        %3482 = vrot.lane.b32.xlu0 %v953, 4
        %v3483 = vpop.permute.xlu0 %3482
        %3484 = vrot.lane.b32.xlu0 %v955, 4
        %v3485 = vpop.permute.xlu0 %3484
        %3486 = vrot.lane.b32.xlu0 %v957, 4
        %v3487 = vpop.permute.xlu0 %3486
        %3488 = vrot.lane.b32.xlu0 %v959, 4
        %v3489 = vpop.permute.xlu0 %3488
        %3490 = vrot.lane.b32.xlu0 %v961, 4
        %v3491 = vpop.permute.xlu0 %3490
        %3500 = vrot.lane.b32.xlu0 %v992, 8
        %v3501 = vpop.permute.xlu0 %3500
        %3502 = vrot.lane.b32.xlu0 %v995, 8
        %v3503 = vpop.permute.xlu0 %3502
        %3504 = vrot.lane.b32.xlu0 %v998, 8
        %v3505 = vpop.permute.xlu0 %3504
        %3506 = vrot.lane.b32.xlu0 %v1001, 8
        %v3507 = vpop.permute.xlu0 %3506
        %3508 = vrot.lane.b32.xlu0 %v1004, 8
        %v3509 = vpop.permute.xlu0 %3508
        %3510 = vrot.lane.b32.xlu0 %v1081, 8
        %v3511 = vpop.permute.xlu0 %3510
        %3512 = vrot.lane.b32.xlu0 %v1095, 8
        %v3513 = vpop.permute.xlu0 %3512
        %3514 = vrot.lane.b32.xlu0 %v1117, 8
        %v3515 = vpop.permute.xlu0 %3514
        %3524 = vrot.lane.b32.xlu0 %v1016, 12
        %v3525 = vpop.permute.xlu0 %3524
        %3526 = vrot.lane.b32.xlu0 %v1019, 12
        %v3527 = vpop.permute.xlu0 %3526
        %3528 = vrot.lane.b32.xlu0 %v1022, 12
        %v3529 = vpop.permute.xlu0 %3528
        %3530 = vrot.lane.b32.xlu0 %v1025, 12
        %v3531 = vpop.permute.xlu0 %3530
        %3532 = vrot.lane.b32.xlu0 %v1028, 12
        %v3533 = vpop.permute.xlu0 %3532
        %3534 = vrot.lane.b32.xlu0 %v1084, 12
        %v3535 = vpop.permute.xlu0 %3534
        %3536 = vrot.lane.b32.xlu0 %v1098, 12
        %v3537 = vpop.permute.xlu0 %3536
        %3538 = vrot.lane.b32.xlu0 %v1120, 12
        %v3539 = vpop.permute.xlu0 %3538
        %3548 = vrot.lane.b32.xlu0 %v1040, 16
        %v3549 = vpop.permute.xlu0 %3548
        %3550 = vrot.lane.b32.xlu0 %v1043, 16
        %v3551 = vpop.permute.xlu0 %3550
        %3552 = vrot.lane.b32.xlu0 %v1046, 16
        %v3553 = vpop.permute.xlu0 %3552
        %3554 = vrot.lane.b32.xlu0 %v1049, 16
        %v3555 = vpop.permute.xlu0 %3554
        %3556 = vrot.lane.b32.xlu0 %v1052, 16
        %v3557 = vpop.permute.xlu0 %3556
        %3558 = vrot.lane.b32.xlu0 %v1087, 16
        %v3559 = vpop.permute.xlu0 %3558
        %3560 = vrot.lane.b32.xlu0 %v1101, 16
        %v3561 = vpop.permute.xlu0 %3560
        %3562 = vrot.lane.b32.xlu0 %v1123, 16
        %v3563 = vpop.permute.xlu0 %3562
        %3572 = vrot.lane.b32.xlu0 %v1064, 20
        %v3573 = vpop.permute.xlu0 %3572
        %3574 = vrot.lane.b32.xlu0 %v1067, 20
        %v3575 = vpop.permute.xlu0 %3574
        %3576 = vrot.lane.b32.xlu0 %v1070, 20
        %v3577 = vpop.permute.xlu0 %3576
        %3578 = vrot.lane.b32.xlu0 %v1073, 20
        %v3579 = vpop.permute.xlu0 %3578
        %3580 = vrot.lane.b32.xlu0 %v1076, 20
        %v3581 = vpop.permute.xlu0 %3580
        %3582 = vrot.lane.b32.xlu0 %v1090, 20
        %v3583 = vpop.permute.xlu0 %3582
        %3584 = vrot.lane.b32.xlu0 %v1104, 20
        %v3585 = vpop.permute.xlu0 %3584
        %3586 = vrot.lane.b32.xlu0 %v1126, 20
        %v3587 = vpop.permute.xlu0 %3586
        %3596 = vrot.lane.b32.xlu0 %v949, 24
        %v3597 = vpop.permute.xlu0 %3596
        %3598 = vrot.lane.b32.xlu0 %v951, 24
        %v3599 = vpop.permute.xlu0 %3598
        %3600 = vrot.lane.b32.xlu0 %v953, 24
        %v3601 = vpop.permute.xlu0 %3600
        %3602 = vrot.lane.b32.xlu0 %v955, 24
        %v3603 = vpop.permute.xlu0 %3602
        %3604 = vrot.lane.b32.xlu0 %v957, 24
        %v3605 = vpop.permute.xlu0 %3604
        %3606 = vrot.lane.b32.xlu0 %v959, 24
        %v3607 = vpop.permute.xlu0 %3606
        %3608 = vrot.lane.b32.xlu0 %v961, 24
        %v3609 = vpop.permute.xlu0 %3608
        %3610 = vrot.lane.b32.xlu0 %v963, 24
        %v3611 = vpop.permute.xlu0 %3610
        %3620 = vrot.lane.b32.xlu0 %v995, 28
        %v3621 = vpop.permute.xlu0 %3620
        %3622 = vrot.lane.b32.xlu0 %v998, 28
        %v3623 = vpop.permute.xlu0 %3622
        %3624 = vrot.lane.b32.xlu0 %v1001, 28
        %v3625 = vpop.permute.xlu0 %3624
        %3626 = vrot.lane.b32.xlu0 %v1004, 28
        %v3627 = vpop.permute.xlu0 %3626
        %3628 = vrot.lane.b32.xlu0 %v1081, 28
        %v3629 = vpop.permute.xlu0 %3628
        %3630 = vrot.lane.b32.xlu0 %v1095, 28
        %v3631 = vpop.permute.xlu0 %3630
        %3632 = vrot.lane.b32.xlu0 %v1117, 28
        %v3633 = vpop.permute.xlu0 %3632
        %3634 = vrot.lane.b32.xlu0 %v1131, 28
        %v3635 = vpop.permute.xlu0 %3634
        %3644 = vrot.lane.b32.xlu0 %v1019, 32
        %v3645 = vpop.permute.xlu0 %3644
        %3646 = vrot.lane.b32.xlu0 %v1022, 32
        %v3647 = vpop.permute.xlu0 %3646
        %3648 = vrot.lane.b32.xlu0 %v1025, 32
        %v3649 = vpop.permute.xlu0 %3648
        %3650 = vrot.lane.b32.xlu0 %v1028, 32
        %v3651 = vpop.permute.xlu0 %3650
        %3652 = vrot.lane.b32.xlu0 %v1084, 32
        %v3653 = vpop.permute.xlu0 %3652
        %3654 = vrot.lane.b32.xlu0 %v1098, 32
        %v3655 = vpop.permute.xlu0 %3654
        %3656 = vrot.lane.b32.xlu0 %v1120, 32
        %v3657 = vpop.permute.xlu0 %3656
        %3658 = vrot.lane.b32.xlu0 %v1134, 32
        %v3659 = vpop.permute.xlu0 %3658
        %3668 = vrot.lane.b32.xlu0 %v1043, 36
        %v3669 = vpop.permute.xlu0 %3668
        %3670 = vrot.lane.b32.xlu0 %v1046, 36
        %v3671 = vpop.permute.xlu0 %3670
        %3672 = vrot.lane.b32.xlu0 %v1049, 36
        %v3673 = vpop.permute.xlu0 %3672
        %3674 = vrot.lane.b32.xlu0 %v1052, 36
        %v3675 = vpop.permute.xlu0 %3674
        %3676 = vrot.lane.b32.xlu0 %v1087, 36
        %v3677 = vpop.permute.xlu0 %3676
        %3678 = vrot.lane.b32.xlu0 %v1101, 36
        %v3679 = vpop.permute.xlu0 %3678
        %3680 = vrot.lane.b32.xlu0 %v1123, 36
        %v3681 = vpop.permute.xlu0 %3680
        %3682 = vrot.lane.b32.xlu0 %v1137, 36
        %v3683 = vpop.permute.xlu0 %3682
        %3692 = vrot.lane.b32.xlu0 %v1067, 40
        %v3693 = vpop.permute.xlu0 %3692
        %3694 = vrot.lane.b32.xlu0 %v1070, 40
        %v3695 = vpop.permute.xlu0 %3694
        %3696 = vrot.lane.b32.xlu0 %v1073, 40
        %v3697 = vpop.permute.xlu0 %3696
        %3698 = vrot.lane.b32.xlu0 %v1076, 40
        %v3699 = vpop.permute.xlu0 %3698
        %3700 = vrot.lane.b32.xlu0 %v1090, 40
        %v3701 = vpop.permute.xlu0 %3700
        %3702 = vrot.lane.b32.xlu0 %v1104, 40
        %v3703 = vpop.permute.xlu0 %3702
        %3704 = vrot.lane.b32.xlu0 %v1126, 40
        %v3705 = vpop.permute.xlu0 %3704
        %3706 = vrot.lane.b32.xlu0 %v1140, 40
        %v3707 = vpop.permute.xlu0 %3706
        %3716 = vrot.lane.b32.xlu0 %v1141, 44
        %v3717 = vpop.permute.xlu0 %3716
        %3718 = vrot.lane.b32.xlu0 %v1143, 44
        %v3719 = vpop.permute.xlu0 %3718
        %3720 = vrot.lane.b32.xlu0 %v1145, 44
        %v3721 = vpop.permute.xlu0 %3720
        %3722 = vrot.lane.b32.xlu0 %v1147, 44
        %v3723 = vpop.permute.xlu0 %3722
        %3724 = vrot.lane.b32.xlu0 %v1149, 44
        %v3725 = vpop.permute.xlu0 %3724
        %3726 = vrot.lane.b32.xlu0 %v1151, 44
        %v3727 = vpop.permute.xlu0 %3726
        %3728 = vrot.lane.b32.xlu0 %v1153, 44
        %v3729 = vpop.permute.xlu0 %3728
        %3730 = vrot.lane.b32.xlu0 %v1155, 44
        %v3731 = vpop.permute.xlu0 %3730
        %3740 = vrot.lane.b32.xlu0 %v1183, 48
        %v3741 = vpop.permute.xlu0 %3740
        %3742 = vrot.lane.b32.xlu0 %v1186, 48
        %v3743 = vpop.permute.xlu0 %3742
        %3744 = vrot.lane.b32.xlu0 %v1189, 48
        %v3745 = vpop.permute.xlu0 %3744
        %3746 = vrot.lane.b32.xlu0 %v1192, 48
        %v3747 = vpop.permute.xlu0 %3746
        %3748 = vrot.lane.b32.xlu0 %v1195, 48
        %v3749 = vpop.permute.xlu0 %3748
        %3750 = vrot.lane.b32.xlu0 %v1198, 48
        %v3751 = vpop.permute.xlu0 %3750
        %3752 = vrot.lane.b32.xlu0 %v1201, 48
        %v3753 = vpop.permute.xlu0 %3752
        %3754 = vrot.lane.b32.xlu0 %v1204, 48
        %v3755 = vpop.permute.xlu0 %3754
        %3764 = vrot.lane.b32.xlu0 %v1207, 52
        %v3765 = vpop.permute.xlu0 %3764
        %3766 = vrot.lane.b32.xlu0 %v1210, 52
        %v3767 = vpop.permute.xlu0 %3766
        %3768 = vrot.lane.b32.xlu0 %v1213, 52
        %v3769 = vpop.permute.xlu0 %3768
        %3770 = vrot.lane.b32.xlu0 %v1216, 52
        %v3771 = vpop.permute.xlu0 %3770
        %3772 = vrot.lane.b32.xlu0 %v1219, 52
        %v3773 = vpop.permute.xlu0 %3772
        %3774 = vrot.lane.b32.xlu0 %v1222, 52
        %v3775 = vpop.permute.xlu0 %3774
        %3776 = vrot.lane.b32.xlu0 %v1225, 52
        %v3777 = vpop.permute.xlu0 %3776
        %3778 = vrot.lane.b32.xlu0 %v1228, 52
        %v3779 = vpop.permute.xlu0 %3778
        %3788 = vrot.lane.b32.xlu0 %v1231, 56
        %v3789 = vpop.permute.xlu0 %3788
        %3790 = vrot.lane.b32.xlu0 %v1234, 56
        %v3791 = vpop.permute.xlu0 %3790
        %3792 = vrot.lane.b32.xlu0 %v1237, 56
        %v3793 = vpop.permute.xlu0 %3792
        %3794 = vrot.lane.b32.xlu0 %v1240, 56
        %v3795 = vpop.permute.xlu0 %3794
        %3796 = vrot.lane.b32.xlu0 %v1243, 56
        %v3797 = vpop.permute.xlu0 %3796
        %3798 = vrot.lane.b32.xlu0 %v1246, 56
        %v3799 = vpop.permute.xlu0 %3798
        %3800 = vrot.lane.b32.xlu0 %v1249, 56
        %v3801 = vpop.permute.xlu0 %3800
        %3802 = vrot.lane.b32.xlu0 %v1252, 56
        %v3803 = vpop.permute.xlu0 %3802
        %3812 = vrot.lane.b32.xlu0 %v1255, 60
        %v3813 = vpop.permute.xlu0 %3812
        %3814 = vrot.lane.b32.xlu0 %v1258, 60
        %v3815 = vpop.permute.xlu0 %3814
        %3816 = vrot.lane.b32.xlu0 %v1261, 60
        %v3817 = vpop.permute.xlu0 %3816
        %3818 = vrot.lane.b32.xlu0 %v1264, 60
        %v3819 = vpop.permute.xlu0 %3818
        %3820 = vrot.lane.b32.xlu0 %v1267, 60
        %v3821 = vpop.permute.xlu0 %3820
        %3822 = vrot.lane.b32.xlu0 %v1270, 60
        %v3823 = vpop.permute.xlu0 %3822
        %3824 = vrot.lane.b32.xlu0 %v1273, 60
        %v3825 = vpop.permute.xlu0 %3824
        %3826 = vrot.lane.b32.xlu0 %v1276, 60
        %v3827 = vpop.permute.xlu0 %3826
        %v3836 = vsel %vm1901, %v1061, %v3477
        %v3837 = vsel %vm1901, %v1064, %v3479
        %v3838 = vsel %vm1901, %v1067, %v3481
        %v3839 = vsel %vm1901, %v1070, %v3483
        %v3840 = vsel %vm1901, %v1073, %v3485
        %v3841 = vsel %vm1901, %v1076, %v3487
        %v3842 = vsel %vm1901, %v1090, %v3489
        %v3843 = vsel %vm1901, %v1104, %v3491
        %v3844 = vsel %vm1910, %v3836, %v3501
        %v3845 = vsel %vm1910, %v3837, %v3503
        %v3846 = vsel %vm1910, %v3838, %v3505
        %v3847 = vsel %vm1910, %v3839, %v3507
        %v3848 = vsel %vm1910, %v3840, %v3509
        %v3849 = vsel %vm1910, %v3841, %v3511
        %v3850 = vsel %vm1910, %v3842, %v3513
        %v3851 = vsel %vm1910, %v3843, %v3515
        %v3852 = vsel %vm1919, %v3844, %v3525
        %v3853 = vsel %vm1919, %v3845, %v3527
        %v3854 = vsel %vm1919, %v3846, %v3529
        %v3855 = vsel %vm1919, %v3847, %v3531
        %v3856 = vsel %vm1919, %v3848, %v3533
        %v3857 = vsel %vm1919, %v3849, %v3535
        %v3858 = vsel %vm1919, %v3850, %v3537
        %v3859 = vsel %vm1919, %v3851, %v3539
        %v3860 = vsel %vm1928, %v3852, %v3549
        %v3861 = vsel %vm1928, %v3853, %v3551
        %v3862 = vsel %vm1928, %v3854, %v3553
        %v3863 = vsel %vm1928, %v3855, %v3555
        %v3864 = vsel %vm1928, %v3856, %v3557
        %v3865 = vsel %vm1928, %v3857, %v3559
        %v3866 = vsel %vm1928, %v3858, %v3561
        %v3867 = vsel %vm1928, %v3859, %v3563
        %v3868 = vsel %vm1937, %v3860, %v3573
        %v3869 = vsel %vm1937, %v3861, %v3575
        %v3870 = vsel %vm1937, %v3862, %v3577
        %v3871 = vsel %vm1937, %v3863, %v3579
        %v3872 = vsel %vm1937, %v3864, %v3581
        %v3873 = vsel %vm1937, %v3865, %v3583
        %v3874 = vsel %vm1937, %v3866, %v3585
        %v3875 = vsel %vm1937, %v3867, %v3587
        %v3876 = vsel %vm1946, %v3868, %v3597
        %v3877 = vsel %vm1946, %v3869, %v3599
        %v3878 = vsel %vm1946, %v3870, %v3601
        %v3879 = vsel %vm1946, %v3871, %v3603
        %v3880 = vsel %vm1946, %v3872, %v3605
        %v3881 = vsel %vm1946, %v3873, %v3607
        %v3882 = vsel %vm1946, %v3874, %v3609
        %v3883 = vsel %vm1946, %v3875, %v3611
        %v3884 = vsel %vm1955, %v3876, %v3621
        %v3885 = vsel %vm1955, %v3877, %v3623
        %v3886 = vsel %vm1955, %v3878, %v3625
        %v3887 = vsel %vm1955, %v3879, %v3627
        %v3888 = vsel %vm1955, %v3880, %v3629
        %v3889 = vsel %vm1955, %v3881, %v3631
        %v3890 = vsel %vm1955, %v3882, %v3633
        %v3891 = vsel %vm1955, %v3883, %v3635
        %v3892 = vsel %vm1964, %v3884, %v3645
        %v3893 = vsel %vm1964, %v3885, %v3647
        %v3894 = vsel %vm1964, %v3886, %v3649
        %v3895 = vsel %vm1964, %v3887, %v3651
        %v3896 = vsel %vm1964, %v3888, %v3653
        %v3897 = vsel %vm1964, %v3889, %v3655
        %v3898 = vsel %vm1964, %v3890, %v3657
        %v3899 = vsel %vm1964, %v3891, %v3659
        %v3900 = vsel %vm1973, %v3892, %v3669
        %v3901 = vsel %vm1973, %v3893, %v3671
        %v3902 = vsel %vm1973, %v3894, %v3673
        %v3903 = vsel %vm1973, %v3895, %v3675
        %v3904 = vsel %vm1973, %v3896, %v3677
        %v3905 = vsel %vm1973, %v3897, %v3679
        %v3906 = vsel %vm1973, %v3898, %v3681
        %v3907 = vsel %vm1973, %v3899, %v3683
        %v3908 = vsel %vm1982, %v3900, %v3693
        %v3909 = vsel %vm1982, %v3901, %v3695
        %v3910 = vsel %vm1982, %v3902, %v3697
        %v3911 = vsel %vm1982, %v3903, %v3699
        %v3912 = vsel %vm1982, %v3904, %v3701
        %v3913 = vsel %vm1982, %v3905, %v3703
        %v3914 = vsel %vm1982, %v3906, %v3705
        %v3915 = vsel %vm1982, %v3907, %v3707
        %v3916 = vsel %vm1991, %v3908, %v3717
        %v3917 = vsel %vm1991, %v3909, %v3719
        %v3918 = vsel %vm1991, %v3910, %v3721
        %v3919 = vsel %vm1991, %v3911, %v3723
        %v3920 = vsel %vm1991, %v3912, %v3725
        %v3921 = vsel %vm1991, %v3913, %v3727
        %v3922 = vsel %vm1991, %v3914, %v3729
        %v3923 = vsel %vm1991, %v3915, %v3731
        %v3924 = vsel %vm2000, %v3916, %v3741
        %v3925 = vsel %vm2000, %v3917, %v3743
        %v3926 = vsel %vm2000, %v3918, %v3745
        %v3927 = vsel %vm2000, %v3919, %v3747
        %v3928 = vsel %vm2000, %v3920, %v3749
        %v3929 = vsel %vm2000, %v3921, %v3751
        %v3930 = vsel %vm2000, %v3922, %v3753
        %v3931 = vsel %vm2000, %v3923, %v3755
        %v3932 = vsel %vm2009, %v3924, %v3765
        %v3933 = vsel %vm2009, %v3925, %v3767
        %v3934 = vsel %vm2009, %v3926, %v3769
        %v3935 = vsel %vm2009, %v3927, %v3771
        %v3936 = vsel %vm2009, %v3928, %v3773
        %v3937 = vsel %vm2009, %v3929, %v3775
        %v3938 = vsel %vm2009, %v3930, %v3777
        %v3939 = vsel %vm2009, %v3931, %v3779
        %v3940 = vsel %vm2018, %v3932, %v3789
        %v3941 = vsel %vm2018, %v3933, %v3791
        %v3942 = vsel %vm2018, %v3934, %v3793
        %v3943 = vsel %vm2018, %v3935, %v3795
        %v3944 = vsel %vm2018, %v3936, %v3797
        %v3945 = vsel %vm2018, %v3937, %v3799
        %v3946 = vsel %vm2018, %v3938, %v3801
        %v3947 = vsel %vm2018, %v3939, %v3803
        %v3948 = vsel %vm2027, %v3940, %v3813
        %v3949 = vsel %vm2027, %v3941, %v3815
        %v3950 = vsel %vm2027, %v3942, %v3817
        %v3951 = vsel %vm2027, %v3943, %v3819
        %v3952 = vsel %vm2027, %v3944, %v3821
        %v3953 = vsel %vm2027, %v3945, %v3823
        %v3954 = vsel %vm2027, %v3946, %v3825
        %v3955 = vsel %vm2027, %v3947, %v3827
        %3956 = vrot.lane.b32.xlu0 %v1186, 4
        %v3957 = vpop.permute.xlu0 %3956
        %3958 = vrot.lane.b32.xlu0 %v1189, 4
        %v3959 = vpop.permute.xlu0 %3958
        %3960 = vrot.lane.b32.xlu0 %v1192, 4
        %v3961 = vpop.permute.xlu0 %3960
        %3962 = vrot.lane.b32.xlu0 %v1195, 4
        %v3963 = vpop.permute.xlu0 %3962
        %3964 = vrot.lane.b32.xlu0 %v1198, 4
        %v3965 = vpop.permute.xlu0 %3964
        %3966 = vrot.lane.b32.xlu0 %v1201, 4
        %v3967 = vpop.permute.xlu0 %3966
        %3968 = vrot.lane.b32.xlu0 %v1204, 4
        %v3969 = vpop.permute.xlu0 %3968
        %3970 = vrot.lane.b32.xlu0 %v1281, 4
        %v3971 = vpop.permute.xlu0 %3970
        %3980 = vrot.lane.b32.xlu0 %v1210, 8
        %v3981 = vpop.permute.xlu0 %3980
        %3982 = vrot.lane.b32.xlu0 %v1213, 8
        %v3983 = vpop.permute.xlu0 %3982
        %3984 = vrot.lane.b32.xlu0 %v1216, 8
        %v3985 = vpop.permute.xlu0 %3984
        %3986 = vrot.lane.b32.xlu0 %v1219, 8
        %v3987 = vpop.permute.xlu0 %3986
        %3988 = vrot.lane.b32.xlu0 %v1222, 8
        %v3989 = vpop.permute.xlu0 %3988
        %3990 = vrot.lane.b32.xlu0 %v1225, 8
        %v3991 = vpop.permute.xlu0 %3990
        %3992 = vrot.lane.b32.xlu0 %v1228, 8
        %v3993 = vpop.permute.xlu0 %3992
        %3994 = vrot.lane.b32.xlu0 %v1284, 8
        %v3995 = vpop.permute.xlu0 %3994
        %4004 = vrot.lane.b32.xlu0 %v1234, 12
        %v4005 = vpop.permute.xlu0 %4004
        %4006 = vrot.lane.b32.xlu0 %v1237, 12
        %v4007 = vpop.permute.xlu0 %4006
        %4008 = vrot.lane.b32.xlu0 %v1240, 12
        %v4009 = vpop.permute.xlu0 %4008
        %4010 = vrot.lane.b32.xlu0 %v1243, 12
        %v4011 = vpop.permute.xlu0 %4010
        %4012 = vrot.lane.b32.xlu0 %v1246, 12
        %v4013 = vpop.permute.xlu0 %4012
        %4014 = vrot.lane.b32.xlu0 %v1249, 12
        %v4015 = vpop.permute.xlu0 %4014
        %4016 = vrot.lane.b32.xlu0 %v1252, 12
        %v4017 = vpop.permute.xlu0 %4016
        %4018 = vrot.lane.b32.xlu0 %v1287, 12
        %v4019 = vpop.permute.xlu0 %4018
        %4028 = vrot.lane.b32.xlu0 %v1258, 16
        %v4029 = vpop.permute.xlu0 %4028
        %4030 = vrot.lane.b32.xlu0 %v1261, 16
        %v4031 = vpop.permute.xlu0 %4030
        %4032 = vrot.lane.b32.xlu0 %v1264, 16
        %v4033 = vpop.permute.xlu0 %4032
        %4034 = vrot.lane.b32.xlu0 %v1267, 16
        %v4035 = vpop.permute.xlu0 %4034
        %4036 = vrot.lane.b32.xlu0 %v1270, 16
        %v4037 = vpop.permute.xlu0 %4036
        %4038 = vrot.lane.b32.xlu0 %v1273, 16
        %v4039 = vpop.permute.xlu0 %4038
        %4040 = vrot.lane.b32.xlu0 %v1276, 16
        %v4041 = vpop.permute.xlu0 %4040
        %4042 = vrot.lane.b32.xlu0 %v1290, 16
        %v4043 = vpop.permute.xlu0 %4042
        %4052 = vrot.lane.b32.xlu0 %v1145, 20
        %v4053 = vpop.permute.xlu0 %4052
        %4054 = vrot.lane.b32.xlu0 %v1147, 20
        %v4055 = vpop.permute.xlu0 %4054
        %4056 = vrot.lane.b32.xlu0 %v1149, 20
        %v4057 = vpop.permute.xlu0 %4056
        %4058 = vrot.lane.b32.xlu0 %v1151, 20
        %v4059 = vpop.permute.xlu0 %4058
        %4060 = vrot.lane.b32.xlu0 %v1153, 20
        %v4061 = vpop.permute.xlu0 %4060
        %4062 = vrot.lane.b32.xlu0 %v1155, 20
        %v4063 = vpop.permute.xlu0 %4062
        %4064 = vrot.lane.b32.xlu0 %v1157, 20
        %v4065 = vpop.permute.xlu0 %4064
        %4066 = vrot.lane.b32.xlu0 %v1159, 20
        %v4067 = vpop.permute.xlu0 %4066
        %4076 = vrot.lane.b32.xlu0 %v1189, 24
        %v4077 = vpop.permute.xlu0 %4076
        %4078 = vrot.lane.b32.xlu0 %v1192, 24
        %v4079 = vpop.permute.xlu0 %4078
        %4080 = vrot.lane.b32.xlu0 %v1195, 24
        %v4081 = vpop.permute.xlu0 %4080
        %4082 = vrot.lane.b32.xlu0 %v1198, 24
        %v4083 = vpop.permute.xlu0 %4082
        %4084 = vrot.lane.b32.xlu0 %v1201, 24
        %v4085 = vpop.permute.xlu0 %4084
        %4086 = vrot.lane.b32.xlu0 %v1204, 24
        %v4087 = vpop.permute.xlu0 %4086
        %4088 = vrot.lane.b32.xlu0 %v1281, 24
        %v4089 = vpop.permute.xlu0 %4088
        %4090 = vrot.lane.b32.xlu0 %v1295, 24
        %v4091 = vpop.permute.xlu0 %4090
        %4100 = vrot.lane.b32.xlu0 %v1213, 28
        %v4101 = vpop.permute.xlu0 %4100
        %4102 = vrot.lane.b32.xlu0 %v1216, 28
        %v4103 = vpop.permute.xlu0 %4102
        %4104 = vrot.lane.b32.xlu0 %v1219, 28
        %v4105 = vpop.permute.xlu0 %4104
        %4106 = vrot.lane.b32.xlu0 %v1222, 28
        %v4107 = vpop.permute.xlu0 %4106
        %4108 = vrot.lane.b32.xlu0 %v1225, 28
        %v4109 = vpop.permute.xlu0 %4108
        %4110 = vrot.lane.b32.xlu0 %v1228, 28
        %v4111 = vpop.permute.xlu0 %4110
        %4112 = vrot.lane.b32.xlu0 %v1284, 28
        %v4113 = vpop.permute.xlu0 %4112
        %4114 = vrot.lane.b32.xlu0 %v1298, 28
        %v4115 = vpop.permute.xlu0 %4114
        %4124 = vrot.lane.b32.xlu0 %v1237, 32
        %v4125 = vpop.permute.xlu0 %4124
        %4126 = vrot.lane.b32.xlu0 %v1240, 32
        %v4127 = vpop.permute.xlu0 %4126
        %4128 = vrot.lane.b32.xlu0 %v1243, 32
        %v4129 = vpop.permute.xlu0 %4128
        %4130 = vrot.lane.b32.xlu0 %v1246, 32
        %v4131 = vpop.permute.xlu0 %4130
        %4132 = vrot.lane.b32.xlu0 %v1249, 32
        %v4133 = vpop.permute.xlu0 %4132
        %4134 = vrot.lane.b32.xlu0 %v1252, 32
        %v4135 = vpop.permute.xlu0 %4134
        %4136 = vrot.lane.b32.xlu0 %v1287, 32
        %v4137 = vpop.permute.xlu0 %4136
        %4138 = vrot.lane.b32.xlu0 %v1301, 32
        %v4139 = vpop.permute.xlu0 %4138
        %4148 = vrot.lane.b32.xlu0 %v1261, 36
        %v4149 = vpop.permute.xlu0 %4148
        %4150 = vrot.lane.b32.xlu0 %v1264, 36
        %v4151 = vpop.permute.xlu0 %4150
        %4152 = vrot.lane.b32.xlu0 %v1267, 36
        %v4153 = vpop.permute.xlu0 %4152
        %4154 = vrot.lane.b32.xlu0 %v1270, 36
        %v4155 = vpop.permute.xlu0 %4154
        %4156 = vrot.lane.b32.xlu0 %v1273, 36
        %v4157 = vpop.permute.xlu0 %4156
        %4158 = vrot.lane.b32.xlu0 %v1276, 36
        %v4159 = vpop.permute.xlu0 %4158
        %4160 = vrot.lane.b32.xlu0 %v1290, 36
        %v4161 = vpop.permute.xlu0 %4160
        %4162 = vrot.lane.b32.xlu0 %v1304, 36
        %v4163 = vpop.permute.xlu0 %4162
        %4172 = vrot.lane.b32.xlu0 %v1147, 40
        %v4173 = vpop.permute.xlu0 %4172
        %4174 = vrot.lane.b32.xlu0 %v1149, 40
        %v4175 = vpop.permute.xlu0 %4174
        %4176 = vrot.lane.b32.xlu0 %v1151, 40
        %v4177 = vpop.permute.xlu0 %4176
        %4178 = vrot.lane.b32.xlu0 %v1153, 40
        %v4179 = vpop.permute.xlu0 %4178
        %4180 = vrot.lane.b32.xlu0 %v1155, 40
        %v4181 = vpop.permute.xlu0 %4180
        %4182 = vrot.lane.b32.xlu0 %v1157, 40
        %v4183 = vpop.permute.xlu0 %4182
        %4184 = vrot.lane.b32.xlu0 %v1159, 40
        %v4185 = vpop.permute.xlu0 %4184
        %4186 = vrot.lane.b32.xlu0 %v1161, 40
        %v4187 = vpop.permute.xlu0 %4186
        %4196 = vrot.lane.b32.xlu0 %v1192, 44
        %v4197 = vpop.permute.xlu0 %4196
        %4198 = vrot.lane.b32.xlu0 %v1195, 44
        %v4199 = vpop.permute.xlu0 %4198
        %4200 = vrot.lane.b32.xlu0 %v1198, 44
        %v4201 = vpop.permute.xlu0 %4200
        %4202 = vrot.lane.b32.xlu0 %v1201, 44
        %v4203 = vpop.permute.xlu0 %4202
        %4204 = vrot.lane.b32.xlu0 %v1204, 44
        %v4205 = vpop.permute.xlu0 %4204
        %4206 = vrot.lane.b32.xlu0 %v1281, 44
        %v4207 = vpop.permute.xlu0 %4206
        %4208 = vrot.lane.b32.xlu0 %v1295, 44
        %v4209 = vpop.permute.xlu0 %4208
        %4210 = vrot.lane.b32.xlu0 %v1309, 44
        %v4211 = vpop.permute.xlu0 %4210
        %4220 = vrot.lane.b32.xlu0 %v1216, 48
        %v4221 = vpop.permute.xlu0 %4220
        %4222 = vrot.lane.b32.xlu0 %v1219, 48
        %v4223 = vpop.permute.xlu0 %4222
        %4224 = vrot.lane.b32.xlu0 %v1222, 48
        %v4225 = vpop.permute.xlu0 %4224
        %4226 = vrot.lane.b32.xlu0 %v1225, 48
        %v4227 = vpop.permute.xlu0 %4226
        %4228 = vrot.lane.b32.xlu0 %v1228, 48
        %v4229 = vpop.permute.xlu0 %4228
        %4230 = vrot.lane.b32.xlu0 %v1284, 48
        %v4231 = vpop.permute.xlu0 %4230
        %4232 = vrot.lane.b32.xlu0 %v1298, 48
        %v4233 = vpop.permute.xlu0 %4232
        %4234 = vrot.lane.b32.xlu0 %v1312, 48
        %v4235 = vpop.permute.xlu0 %4234
        %4244 = vrot.lane.b32.xlu0 %v1240, 52
        %v4245 = vpop.permute.xlu0 %4244
        %4246 = vrot.lane.b32.xlu0 %v1243, 52
        %v4247 = vpop.permute.xlu0 %4246
        %4248 = vrot.lane.b32.xlu0 %v1246, 52
        %v4249 = vpop.permute.xlu0 %4248
        %4250 = vrot.lane.b32.xlu0 %v1249, 52
        %v4251 = vpop.permute.xlu0 %4250
        %4252 = vrot.lane.b32.xlu0 %v1252, 52
        %v4253 = vpop.permute.xlu0 %4252
        %4254 = vrot.lane.b32.xlu0 %v1287, 52
        %v4255 = vpop.permute.xlu0 %4254
        %4256 = vrot.lane.b32.xlu0 %v1301, 52
        %v4257 = vpop.permute.xlu0 %4256
        %4258 = vrot.lane.b32.xlu0 %v1315, 52
        %v4259 = vpop.permute.xlu0 %4258
        %4268 = vrot.lane.b32.xlu0 %v1264, 56
        %v4269 = vpop.permute.xlu0 %4268
        %4270 = vrot.lane.b32.xlu0 %v1267, 56
        %v4271 = vpop.permute.xlu0 %4270
        %4272 = vrot.lane.b32.xlu0 %v1270, 56
        %v4273 = vpop.permute.xlu0 %4272
        %4274 = vrot.lane.b32.xlu0 %v1273, 56
        %v4275 = vpop.permute.xlu0 %4274
        %4276 = vrot.lane.b32.xlu0 %v1276, 56
        %v4277 = vpop.permute.xlu0 %4276
        %4278 = vrot.lane.b32.xlu0 %v1290, 56
        %v4279 = vpop.permute.xlu0 %4278
        %4280 = vrot.lane.b32.xlu0 %v1304, 56
        %v4281 = vpop.permute.xlu0 %4280
        %4282 = vrot.lane.b32.xlu0 %v1318, 56
        %v4283 = vpop.permute.xlu0 %4282
        %4292 = vrot.lane.b32.xlu0 %v1149, 60
        %v4293 = vpop.permute.xlu0 %4292
        %4294 = vrot.lane.b32.xlu0 %v1151, 60
        %v4295 = vpop.permute.xlu0 %4294
        %4296 = vrot.lane.b32.xlu0 %v1153, 60
        %v4297 = vpop.permute.xlu0 %4296
        %4298 = vrot.lane.b32.xlu0 %v1155, 60
        %v4299 = vpop.permute.xlu0 %4298
        %4300 = vrot.lane.b32.xlu0 %v1157, 60
        %v4301 = vpop.permute.xlu0 %4300
        %4302 = vrot.lane.b32.xlu0 %v1159, 60
        %v4303 = vpop.permute.xlu0 %4302
        %4304 = vrot.lane.b32.xlu0 %v1161, 60
        %v4305 = vpop.permute.xlu0 %4304
        %4306 = vrot.lane.b32.xlu0 %v1163, 60
        %v4307 = vpop.permute.xlu0 %4306
        %v4316 = vsel %vm1901, %v1143, %v3957
        %v4317 = vsel %vm1901, %v1145, %v3959
        %v4318 = vsel %vm1901, %v1147, %v3961
        %v4319 = vsel %vm1901, %v1149, %v3963
        %v4320 = vsel %vm1901, %v1151, %v3965
        %v4321 = vsel %vm1901, %v1153, %v3967
        %v4322 = vsel %vm1901, %v1155, %v3969
        %v4323 = vsel %vm1901, %v1157, %v3971
        %v4324 = vsel %vm1910, %v4316, %v3981
        %v4325 = vsel %vm1910, %v4317, %v3983
        %v4326 = vsel %vm1910, %v4318, %v3985
        %v4327 = vsel %vm1910, %v4319, %v3987
        %v4328 = vsel %vm1910, %v4320, %v3989
        %v4329 = vsel %vm1910, %v4321, %v3991
        %v4330 = vsel %vm1910, %v4322, %v3993
        %v4331 = vsel %vm1910, %v4323, %v3995
        %v4332 = vsel %vm1919, %v4324, %v4005
        %v4333 = vsel %vm1919, %v4325, %v4007
        %v4334 = vsel %vm1919, %v4326, %v4009
        %v4335 = vsel %vm1919, %v4327, %v4011
        %v4336 = vsel %vm1919, %v4328, %v4013
        %v4337 = vsel %vm1919, %v4329, %v4015
        %v4338 = vsel %vm1919, %v4330, %v4017
        %v4339 = vsel %vm1919, %v4331, %v4019
        %v4340 = vsel %vm1928, %v4332, %v4029
        %v4341 = vsel %vm1928, %v4333, %v4031
        %v4342 = vsel %vm1928, %v4334, %v4033
        %v4343 = vsel %vm1928, %v4335, %v4035
        %v4344 = vsel %vm1928, %v4336, %v4037
        %v4345 = vsel %vm1928, %v4337, %v4039
        %v4346 = vsel %vm1928, %v4338, %v4041
        %v4347 = vsel %vm1928, %v4339, %v4043
        %v4348 = vsel %vm1937, %v4340, %v4053
        %v4349 = vsel %vm1937, %v4341, %v4055
        %v4350 = vsel %vm1937, %v4342, %v4057
        %v4351 = vsel %vm1937, %v4343, %v4059
        %v4352 = vsel %vm1937, %v4344, %v4061
        %v4353 = vsel %vm1937, %v4345, %v4063
        %v4354 = vsel %vm1937, %v4346, %v4065
        %v4355 = vsel %vm1937, %v4347, %v4067
        %v4356 = vsel %vm1946, %v4348, %v4077
        %v4357 = vsel %vm1946, %v4349, %v4079
        %v4358 = vsel %vm1946, %v4350, %v4081
        %v4359 = vsel %vm1946, %v4351, %v4083
        %v4360 = vsel %vm1946, %v4352, %v4085
        %v4361 = vsel %vm1946, %v4353, %v4087
        %v4362 = vsel %vm1946, %v4354, %v4089
        %v4363 = vsel %vm1946, %v4355, %v4091
        %v4364 = vsel %vm1955, %v4356, %v4101
        %v4365 = vsel %vm1955, %v4357, %v4103
        %v4366 = vsel %vm1955, %v4358, %v4105
        %v4367 = vsel %vm1955, %v4359, %v4107
        %v4368 = vsel %vm1955, %v4360, %v4109
        %v4369 = vsel %vm1955, %v4361, %v4111
        %v4370 = vsel %vm1955, %v4362, %v4113
        %v4371 = vsel %vm1955, %v4363, %v4115
        %v4372 = vsel %vm1964, %v4364, %v4125
        %v4373 = vsel %vm1964, %v4365, %v4127
        %v4374 = vsel %vm1964, %v4366, %v4129
        %v4375 = vsel %vm1964, %v4367, %v4131
        %v4376 = vsel %vm1964, %v4368, %v4133
        %v4377 = vsel %vm1964, %v4369, %v4135
        %v4378 = vsel %vm1964, %v4370, %v4137
        %v4379 = vsel %vm1964, %v4371, %v4139
        %v4380 = vsel %vm1973, %v4372, %v4149
        %v4381 = vsel %vm1973, %v4373, %v4151
        %v4382 = vsel %vm1973, %v4374, %v4153
        %v4383 = vsel %vm1973, %v4375, %v4155
        %v4384 = vsel %vm1973, %v4376, %v4157
        %v4385 = vsel %vm1973, %v4377, %v4159
        %v4386 = vsel %vm1973, %v4378, %v4161
        %v4387 = vsel %vm1973, %v4379, %v4163
        %v4388 = vsel %vm1982, %v4380, %v4173
        %v4389 = vsel %vm1982, %v4381, %v4175
        %v4390 = vsel %vm1982, %v4382, %v4177
        %v4391 = vsel %vm1982, %v4383, %v4179
        %v4392 = vsel %vm1982, %v4384, %v4181
        %v4393 = vsel %vm1982, %v4385, %v4183
        %v4394 = vsel %vm1982, %v4386, %v4185
        %v4395 = vsel %vm1982, %v4387, %v4187
        %v4396 = vsel %vm1991, %v4388, %v4197
        %v4397 = vsel %vm1991, %v4389, %v4199
        %v4398 = vsel %vm1991, %v4390, %v4201
        %v4399 = vsel %vm1991, %v4391, %v4203
        %v4400 = vsel %vm1991, %v4392, %v4205
        %v4401 = vsel %vm1991, %v4393, %v4207
        %v4402 = vsel %vm1991, %v4394, %v4209
        %v4403 = vsel %vm1991, %v4395, %v4211
        %v4404 = vsel %vm2000, %v4396, %v4221
        %v4405 = vsel %vm2000, %v4397, %v4223
        %v4406 = vsel %vm2000, %v4398, %v4225
        %v4407 = vsel %vm2000, %v4399, %v4227
        %v4408 = vsel %vm2000, %v4400, %v4229
        %v4409 = vsel %vm2000, %v4401, %v4231
        %v4410 = vsel %vm2000, %v4402, %v4233
        %v4411 = vsel %vm2000, %v4403, %v4235
        %v4412 = vsel %vm2009, %v4404, %v4245
        %v4413 = vsel %vm2009, %v4405, %v4247
        %v4414 = vsel %vm2009, %v4406, %v4249
        %v4415 = vsel %vm2009, %v4407, %v4251
        %v4416 = vsel %vm2009, %v4408, %v4253
        %v4417 = vsel %vm2009, %v4409, %v4255
        %v4418 = vsel %vm2009, %v4410, %v4257
        %v4419 = vsel %vm2009, %v4411, %v4259
        %v4420 = vsel %vm2018, %v4412, %v4269
        %v4421 = vsel %vm2018, %v4413, %v4271
        %v4422 = vsel %vm2018, %v4414, %v4273
        %v4423 = vsel %vm2018, %v4415, %v4275
        %v4424 = vsel %vm2018, %v4416, %v4277
        %v4425 = vsel %vm2018, %v4417, %v4279
        %v4426 = vsel %vm2018, %v4418, %v4281
        %v4427 = vsel %vm2018, %v4419, %v4283
        %v4428 = vsel %vm2027, %v4420, %v4293
        %v4429 = vsel %vm2027, %v4421, %v4295
        %v4430 = vsel %vm2027, %v4422, %v4297
        %v4431 = vsel %vm2027, %v4423, %v4299
        %v4432 = vsel %vm2027, %v4424, %v4301
        %v4433 = vsel %vm2027, %v4425, %v4303
        %v4434 = vsel %vm2027, %v4426, %v4305
        %v4435 = vsel %vm2027, %v4427, %v4307
        %4436 = vrot.lane.b32.xlu0 %v1219, 4
        %v4437 = vpop.permute.xlu0 %4436
        %4438 = vrot.lane.b32.xlu0 %v1222, 4
        %v4439 = vpop.permute.xlu0 %4438
        %4440 = vrot.lane.b32.xlu0 %v1225, 4
        %v4441 = vpop.permute.xlu0 %4440
        %4442 = vrot.lane.b32.xlu0 %v1228, 4
        %v4443 = vpop.permute.xlu0 %4442
        %4444 = vrot.lane.b32.xlu0 %v1284, 4
        %v4445 = vpop.permute.xlu0 %4444
        %4446 = vrot.lane.b32.xlu0 %v1298, 4
        %v4447 = vpop.permute.xlu0 %4446
        %4448 = vrot.lane.b32.xlu0 %v1312, 4
        %v4449 = vpop.permute.xlu0 %4448
        %4450 = vrot.lane.b32.xlu0 %v1334, 4
        %v4451 = vpop.permute.xlu0 %4450
        %4460 = vrot.lane.b32.xlu0 %v1243, 8
        %v4461 = vpop.permute.xlu0 %4460
        %4462 = vrot.lane.b32.xlu0 %v1246, 8
        %v4463 = vpop.permute.xlu0 %4462
        %4464 = vrot.lane.b32.xlu0 %v1249, 8
        %v4465 = vpop.permute.xlu0 %4464
        %4466 = vrot.lane.b32.xlu0 %v1252, 8
        %v4467 = vpop.permute.xlu0 %4466
        %4468 = vrot.lane.b32.xlu0 %v1287, 8
        %v4469 = vpop.permute.xlu0 %4468
        %4470 = vrot.lane.b32.xlu0 %v1301, 8
        %v4471 = vpop.permute.xlu0 %4470
        %4472 = vrot.lane.b32.xlu0 %v1315, 8
        %v4473 = vpop.permute.xlu0 %4472
        %4474 = vrot.lane.b32.xlu0 %v1337, 8
        %v4475 = vpop.permute.xlu0 %4474
        %4484 = vrot.lane.b32.xlu0 %v1267, 12
        %v4485 = vpop.permute.xlu0 %4484
        %4486 = vrot.lane.b32.xlu0 %v1270, 12
        %v4487 = vpop.permute.xlu0 %4486
        %4488 = vrot.lane.b32.xlu0 %v1273, 12
        %v4489 = vpop.permute.xlu0 %4488
        %4490 = vrot.lane.b32.xlu0 %v1276, 12
        %v4491 = vpop.permute.xlu0 %4490
        %4492 = vrot.lane.b32.xlu0 %v1290, 12
        %v4493 = vpop.permute.xlu0 %4492
        %4494 = vrot.lane.b32.xlu0 %v1304, 12
        %v4495 = vpop.permute.xlu0 %4494
        %4496 = vrot.lane.b32.xlu0 %v1318, 12
        %v4497 = vpop.permute.xlu0 %4496
        %4498 = vrot.lane.b32.xlu0 %v1340, 12
        %v4499 = vpop.permute.xlu0 %4498
        %4508 = vrot.lane.b32.xlu0 %v1341, 16
        %v4509 = vpop.permute.xlu0 %4508
        %4510 = vrot.lane.b32.xlu0 %v1343, 16
        %v4511 = vpop.permute.xlu0 %4510
        %4512 = vrot.lane.b32.xlu0 %v1345, 16
        %v4513 = vpop.permute.xlu0 %4512
        %4514 = vrot.lane.b32.xlu0 %v1347, 16
        %v4515 = vpop.permute.xlu0 %4514
        %4516 = vrot.lane.b32.xlu0 %v1349, 16
        %v4517 = vpop.permute.xlu0 %4516
        %4518 = vrot.lane.b32.xlu0 %v1351, 16
        %v4519 = vpop.permute.xlu0 %4518
        %4520 = vrot.lane.b32.xlu0 %v1353, 16
        %v4521 = vpop.permute.xlu0 %4520
        %4522 = vrot.lane.b32.xlu0 %v1355, 16
        %v4523 = vpop.permute.xlu0 %4522
        %4532 = vrot.lane.b32.xlu0 %v1383, 20
        %v4533 = vpop.permute.xlu0 %4532
        %4534 = vrot.lane.b32.xlu0 %v1386, 20
        %v4535 = vpop.permute.xlu0 %4534
        %4536 = vrot.lane.b32.xlu0 %v1389, 20
        %v4537 = vpop.permute.xlu0 %4536
        %4538 = vrot.lane.b32.xlu0 %v1392, 20
        %v4539 = vpop.permute.xlu0 %4538
        %4540 = vrot.lane.b32.xlu0 %v1395, 20
        %v4541 = vpop.permute.xlu0 %4540
        %4542 = vrot.lane.b32.xlu0 %v1398, 20
        %v4543 = vpop.permute.xlu0 %4542
        %4544 = vrot.lane.b32.xlu0 %v1401, 20
        %v4545 = vpop.permute.xlu0 %4544
        %4546 = vrot.lane.b32.xlu0 %v1404, 20
        %v4547 = vpop.permute.xlu0 %4546
        %4556 = vrot.lane.b32.xlu0 %v1407, 24
        %v4557 = vpop.permute.xlu0 %4556
        %4558 = vrot.lane.b32.xlu0 %v1410, 24
        %v4559 = vpop.permute.xlu0 %4558
        %4560 = vrot.lane.b32.xlu0 %v1413, 24
        %v4561 = vpop.permute.xlu0 %4560
        %4562 = vrot.lane.b32.xlu0 %v1416, 24
        %v4563 = vpop.permute.xlu0 %4562
        %4564 = vrot.lane.b32.xlu0 %v1419, 24
        %v4565 = vpop.permute.xlu0 %4564
        %4566 = vrot.lane.b32.xlu0 %v1422, 24
        %v4567 = vpop.permute.xlu0 %4566
        %4568 = vrot.lane.b32.xlu0 %v1425, 24
        %v4569 = vpop.permute.xlu0 %4568
        %4570 = vrot.lane.b32.xlu0 %v1428, 24
        %v4571 = vpop.permute.xlu0 %4570
        %4580 = vrot.lane.b32.xlu0 %v1431, 28
        %v4581 = vpop.permute.xlu0 %4580
        %4582 = vrot.lane.b32.xlu0 %v1434, 28
        %v4583 = vpop.permute.xlu0 %4582
        %4584 = vrot.lane.b32.xlu0 %v1437, 28
        %v4585 = vpop.permute.xlu0 %4584
        %4586 = vrot.lane.b32.xlu0 %v1440, 28
        %v4587 = vpop.permute.xlu0 %4586
        %4588 = vrot.lane.b32.xlu0 %v1443, 28
        %v4589 = vpop.permute.xlu0 %4588
        %4590 = vrot.lane.b32.xlu0 %v1446, 28
        %v4591 = vpop.permute.xlu0 %4590
        %4592 = vrot.lane.b32.xlu0 %v1449, 28
        %v4593 = vpop.permute.xlu0 %4592
        %4594 = vrot.lane.b32.xlu0 %v1452, 28
        %v4595 = vpop.permute.xlu0 %4594
        %4604 = vrot.lane.b32.xlu0 %v1455, 32
        %v4605 = vpop.permute.xlu0 %4604
        %4606 = vrot.lane.b32.xlu0 %v1458, 32
        %v4607 = vpop.permute.xlu0 %4606
        %4608 = vrot.lane.b32.xlu0 %v1461, 32
        %v4609 = vpop.permute.xlu0 %4608
        %4610 = vrot.lane.b32.xlu0 %v1464, 32
        %v4611 = vpop.permute.xlu0 %4610
        %4612 = vrot.lane.b32.xlu0 %v1467, 32
        %v4613 = vpop.permute.xlu0 %4612
        %4614 = vrot.lane.b32.xlu0 %v1470, 32
        %v4615 = vpop.permute.xlu0 %4614
        %4616 = vrot.lane.b32.xlu0 %v1473, 32
        %v4617 = vpop.permute.xlu0 %4616
        %4618 = vrot.lane.b32.xlu0 %v1476, 32
        %v4619 = vpop.permute.xlu0 %4618
        %4628 = vrot.lane.b32.xlu0 %v1343, 36
        %v4629 = vpop.permute.xlu0 %4628
        %4630 = vrot.lane.b32.xlu0 %v1345, 36
        %v4631 = vpop.permute.xlu0 %4630
        %4632 = vrot.lane.b32.xlu0 %v1347, 36
        %v4633 = vpop.permute.xlu0 %4632
        %4634 = vrot.lane.b32.xlu0 %v1349, 36
        %v4635 = vpop.permute.xlu0 %4634
        %4636 = vrot.lane.b32.xlu0 %v1351, 36
        %v4637 = vpop.permute.xlu0 %4636
        %4638 = vrot.lane.b32.xlu0 %v1353, 36
        %v4639 = vpop.permute.xlu0 %4638
        %4640 = vrot.lane.b32.xlu0 %v1355, 36
        %v4641 = vpop.permute.xlu0 %4640
        %4642 = vrot.lane.b32.xlu0 %v1357, 36
        %v4643 = vpop.permute.xlu0 %4642
        %4652 = vrot.lane.b32.xlu0 %v1386, 40
        %v4653 = vpop.permute.xlu0 %4652
        %4654 = vrot.lane.b32.xlu0 %v1389, 40
        %v4655 = vpop.permute.xlu0 %4654
        %4656 = vrot.lane.b32.xlu0 %v1392, 40
        %v4657 = vpop.permute.xlu0 %4656
        %4658 = vrot.lane.b32.xlu0 %v1395, 40
        %v4659 = vpop.permute.xlu0 %4658
        %4660 = vrot.lane.b32.xlu0 %v1398, 40
        %v4661 = vpop.permute.xlu0 %4660
        %4662 = vrot.lane.b32.xlu0 %v1401, 40
        %v4663 = vpop.permute.xlu0 %4662
        %4664 = vrot.lane.b32.xlu0 %v1404, 40
        %v4665 = vpop.permute.xlu0 %4664
        %4666 = vrot.lane.b32.xlu0 %v1481, 40
        %v4667 = vpop.permute.xlu0 %4666
        %4676 = vrot.lane.b32.xlu0 %v1410, 44
        %v4677 = vpop.permute.xlu0 %4676
        %4678 = vrot.lane.b32.xlu0 %v1413, 44
        %v4679 = vpop.permute.xlu0 %4678
        %4680 = vrot.lane.b32.xlu0 %v1416, 44
        %v4681 = vpop.permute.xlu0 %4680
        %4682 = vrot.lane.b32.xlu0 %v1419, 44
        %v4683 = vpop.permute.xlu0 %4682
        %4684 = vrot.lane.b32.xlu0 %v1422, 44
        %v4685 = vpop.permute.xlu0 %4684
        %4686 = vrot.lane.b32.xlu0 %v1425, 44
        %v4687 = vpop.permute.xlu0 %4686
        %4688 = vrot.lane.b32.xlu0 %v1428, 44
        %v4689 = vpop.permute.xlu0 %4688
        %4690 = vrot.lane.b32.xlu0 %v1484, 44
        %v4691 = vpop.permute.xlu0 %4690
        %4700 = vrot.lane.b32.xlu0 %v1434, 48
        %v4701 = vpop.permute.xlu0 %4700
        %4702 = vrot.lane.b32.xlu0 %v1437, 48
        %v4703 = vpop.permute.xlu0 %4702
        %4704 = vrot.lane.b32.xlu0 %v1440, 48
        %v4705 = vpop.permute.xlu0 %4704
        %4706 = vrot.lane.b32.xlu0 %v1443, 48
        %v4707 = vpop.permute.xlu0 %4706
        %4708 = vrot.lane.b32.xlu0 %v1446, 48
        %v4709 = vpop.permute.xlu0 %4708
        %4710 = vrot.lane.b32.xlu0 %v1449, 48
        %v4711 = vpop.permute.xlu0 %4710
        %4712 = vrot.lane.b32.xlu0 %v1452, 48
        %v4713 = vpop.permute.xlu0 %4712
        %4714 = vrot.lane.b32.xlu0 %v1487, 48
        %v4715 = vpop.permute.xlu0 %4714
        %4724 = vrot.lane.b32.xlu0 %v1458, 52
        %v4725 = vpop.permute.xlu0 %4724
        %4726 = vrot.lane.b32.xlu0 %v1461, 52
        %v4727 = vpop.permute.xlu0 %4726
        %4728 = vrot.lane.b32.xlu0 %v1464, 52
        %v4729 = vpop.permute.xlu0 %4728
        %4730 = vrot.lane.b32.xlu0 %v1467, 52
        %v4731 = vpop.permute.xlu0 %4730
        %4732 = vrot.lane.b32.xlu0 %v1470, 52
        %v4733 = vpop.permute.xlu0 %4732
        %4734 = vrot.lane.b32.xlu0 %v1473, 52
        %v4735 = vpop.permute.xlu0 %4734
        %4736 = vrot.lane.b32.xlu0 %v1476, 52
        %v4737 = vpop.permute.xlu0 %4736
        %4738 = vrot.lane.b32.xlu0 %v1490, 52
        %v4739 = vpop.permute.xlu0 %4738
        %4748 = vrot.lane.b32.xlu0 %v1345, 56
        %v4749 = vpop.permute.xlu0 %4748
        %4750 = vrot.lane.b32.xlu0 %v1347, 56
        %v4751 = vpop.permute.xlu0 %4750
        %4752 = vrot.lane.b32.xlu0 %v1349, 56
        %v4753 = vpop.permute.xlu0 %4752
        %4754 = vrot.lane.b32.xlu0 %v1351, 56
        %v4755 = vpop.permute.xlu0 %4754
        %4756 = vrot.lane.b32.xlu0 %v1353, 56
        %v4757 = vpop.permute.xlu0 %4756
        %4758 = vrot.lane.b32.xlu0 %v1355, 56
        %v4759 = vpop.permute.xlu0 %4758
        %4760 = vrot.lane.b32.xlu0 %v1357, 56
        %v4761 = vpop.permute.xlu0 %4760
        %4762 = vrot.lane.b32.xlu0 %v1359, 56
        %v4763 = vpop.permute.xlu0 %4762
        %4772 = vrot.lane.b32.xlu0 %v1389, 60
        %v4773 = vpop.permute.xlu0 %4772
        %4774 = vrot.lane.b32.xlu0 %v1392, 60
        %v4775 = vpop.permute.xlu0 %4774
        %4776 = vrot.lane.b32.xlu0 %v1395, 60
        %v4777 = vpop.permute.xlu0 %4776
        %4778 = vrot.lane.b32.xlu0 %v1398, 60
        %v4779 = vpop.permute.xlu0 %4778
        %4780 = vrot.lane.b32.xlu0 %v1401, 60
        %v4781 = vpop.permute.xlu0 %4780
        %4782 = vrot.lane.b32.xlu0 %v1404, 60
        %v4783 = vpop.permute.xlu0 %4782
        %4784 = vrot.lane.b32.xlu0 %v1481, 60
        %v4785 = vpop.permute.xlu0 %4784
        %4786 = vrot.lane.b32.xlu0 %v1495, 60
        %v4787 = vpop.permute.xlu0 %4786
        %v4796 = vsel %vm1901, %v1195, %v4437
        %v4797 = vsel %vm1901, %v1198, %v4439
        %v4798 = vsel %vm1901, %v1201, %v4441
        %v4799 = vsel %vm1901, %v1204, %v4443
        %v4800 = vsel %vm1901, %v1281, %v4445
        %v4801 = vsel %vm1901, %v1295, %v4447
        %v4802 = vsel %vm1901, %v1309, %v4449
        %v4803 = vsel %vm1901, %v1323, %v4451
        %v4804 = vsel %vm1910, %v4796, %v4461
        %v4805 = vsel %vm1910, %v4797, %v4463
        %v4806 = vsel %vm1910, %v4798, %v4465
        %v4807 = vsel %vm1910, %v4799, %v4467
        %v4808 = vsel %vm1910, %v4800, %v4469
        %v4809 = vsel %vm1910, %v4801, %v4471
        %v4810 = vsel %vm1910, %v4802, %v4473
        %v4811 = vsel %vm1910, %v4803, %v4475
        %v4812 = vsel %vm1919, %v4804, %v4485
        %v4813 = vsel %vm1919, %v4805, %v4487
        %v4814 = vsel %vm1919, %v4806, %v4489
        %v4815 = vsel %vm1919, %v4807, %v4491
        %v4816 = vsel %vm1919, %v4808, %v4493
        %v4817 = vsel %vm1919, %v4809, %v4495
        %v4818 = vsel %vm1919, %v4810, %v4497
        %v4819 = vsel %vm1919, %v4811, %v4499
        %v4820 = vsel %vm1928, %v4812, %v4509
        %v4821 = vsel %vm1928, %v4813, %v4511
        %v4822 = vsel %vm1928, %v4814, %v4513
        %v4823 = vsel %vm1928, %v4815, %v4515
        %v4824 = vsel %vm1928, %v4816, %v4517
        %v4825 = vsel %vm1928, %v4817, %v4519
        %v4826 = vsel %vm1928, %v4818, %v4521
        %v4827 = vsel %vm1928, %v4819, %v4523
        %v4828 = vsel %vm1937, %v4820, %v4533
        %v4829 = vsel %vm1937, %v4821, %v4535
        %v4830 = vsel %vm1937, %v4822, %v4537
        %v4831 = vsel %vm1937, %v4823, %v4539
        %v4832 = vsel %vm1937, %v4824, %v4541
        %v4833 = vsel %vm1937, %v4825, %v4543
        %v4834 = vsel %vm1937, %v4826, %v4545
        %v4835 = vsel %vm1937, %v4827, %v4547
        %v4836 = vsel %vm1946, %v4828, %v4557
        %v4837 = vsel %vm1946, %v4829, %v4559
        %v4838 = vsel %vm1946, %v4830, %v4561
        %v4839 = vsel %vm1946, %v4831, %v4563
        %v4840 = vsel %vm1946, %v4832, %v4565
        %v4841 = vsel %vm1946, %v4833, %v4567
        %v4842 = vsel %vm1946, %v4834, %v4569
        %v4843 = vsel %vm1946, %v4835, %v4571
        %v4844 = vsel %vm1955, %v4836, %v4581
        %v4845 = vsel %vm1955, %v4837, %v4583
        %v4846 = vsel %vm1955, %v4838, %v4585
        %v4847 = vsel %vm1955, %v4839, %v4587
        %v4848 = vsel %vm1955, %v4840, %v4589
        %v4849 = vsel %vm1955, %v4841, %v4591
        %v4850 = vsel %vm1955, %v4842, %v4593
        %v4851 = vsel %vm1955, %v4843, %v4595
        %v4852 = vsel %vm1964, %v4844, %v4605
        %v4853 = vsel %vm1964, %v4845, %v4607
        %v4854 = vsel %vm1964, %v4846, %v4609
        %v4855 = vsel %vm1964, %v4847, %v4611
        %v4856 = vsel %vm1964, %v4848, %v4613
        %v4857 = vsel %vm1964, %v4849, %v4615
        %v4858 = vsel %vm1964, %v4850, %v4617
        %v4859 = vsel %vm1964, %v4851, %v4619
        %v4860 = vsel %vm1973, %v4852, %v4629
        %v4861 = vsel %vm1973, %v4853, %v4631
        %v4862 = vsel %vm1973, %v4854, %v4633
        %v4863 = vsel %vm1973, %v4855, %v4635
        %v4864 = vsel %vm1973, %v4856, %v4637
        %v4865 = vsel %vm1973, %v4857, %v4639
        %v4866 = vsel %vm1973, %v4858, %v4641
        %v4867 = vsel %vm1973, %v4859, %v4643
        %v4868 = vsel %vm1982, %v4860, %v4653
        %v4869 = vsel %vm1982, %v4861, %v4655
        %v4870 = vsel %vm1982, %v4862, %v4657
        %v4871 = vsel %vm1982, %v4863, %v4659
        %v4872 = vsel %vm1982, %v4864, %v4661
        %v4873 = vsel %vm1982, %v4865, %v4663
        %v4874 = vsel %vm1982, %v4866, %v4665
        %v4875 = vsel %vm1982, %v4867, %v4667
        %v4876 = vsel %vm1991, %v4868, %v4677
        %v4877 = vsel %vm1991, %v4869, %v4679
        %v4878 = vsel %vm1991, %v4870, %v4681
        %v4879 = vsel %vm1991, %v4871, %v4683
        %v4880 = vsel %vm1991, %v4872, %v4685
        %v4881 = vsel %vm1991, %v4873, %v4687
        %v4882 = vsel %vm1991, %v4874, %v4689
        %v4883 = vsel %vm1991, %v4875, %v4691
        %v4884 = vsel %vm2000, %v4876, %v4701
        %v4885 = vsel %vm2000, %v4877, %v4703
        %v4886 = vsel %vm2000, %v4878, %v4705
        %v4887 = vsel %vm2000, %v4879, %v4707
        %v4888 = vsel %vm2000, %v4880, %v4709
        %v4889 = vsel %vm2000, %v4881, %v4711
        %v4890 = vsel %vm2000, %v4882, %v4713
        %v4891 = vsel %vm2000, %v4883, %v4715
        %v4892 = vsel %vm2009, %v4884, %v4725
        %v4893 = vsel %vm2009, %v4885, %v4727
        %v4894 = vsel %vm2009, %v4886, %v4729
        %v4895 = vsel %vm2009, %v4887, %v4731
        %v4896 = vsel %vm2009, %v4888, %v4733
        %v4897 = vsel %vm2009, %v4889, %v4735
        %v4898 = vsel %vm2009, %v4890, %v4737
        %v4899 = vsel %vm2009, %v4891, %v4739
        %v4900 = vsel %vm2018, %v4892, %v4749
        %v4901 = vsel %vm2018, %v4893, %v4751
        %v4902 = vsel %vm2018, %v4894, %v4753
        %v4903 = vsel %vm2018, %v4895, %v4755
        %v4904 = vsel %vm2018, %v4896, %v4757
        %v4905 = vsel %vm2018, %v4897, %v4759
        %v4906 = vsel %vm2018, %v4898, %v4761
        %v4907 = vsel %vm2018, %v4899, %v4763
        %v4908 = vsel %vm2027, %v4900, %v4773
        %v4909 = vsel %vm2027, %v4901, %v4775
        %v4910 = vsel %vm2027, %v4902, %v4777
        %v4911 = vsel %vm2027, %v4903, %v4779
        %v4912 = vsel %vm2027, %v4904, %v4781
        %v4913 = vsel %vm2027, %v4905, %v4783
        %v4914 = vsel %vm2027, %v4906, %v4785
        %v4915 = vsel %vm2027, %v4907, %v4787
        %4916 = vrot.lane.b32.xlu0 %v1437, 4
        %v4917 = vpop.permute.xlu0 %4916
        %4918 = vrot.lane.b32.xlu0 %v1440, 4
        %v4919 = vpop.permute.xlu0 %4918
        %4920 = vrot.lane.b32.xlu0 %v1443, 4
        %v4921 = vpop.permute.xlu0 %4920
        %4922 = vrot.lane.b32.xlu0 %v1446, 4
        %v4923 = vpop.permute.xlu0 %4922
        %4924 = vrot.lane.b32.xlu0 %v1449, 4
        %v4925 = vpop.permute.xlu0 %4924
        %4926 = vrot.lane.b32.xlu0 %v1452, 4
        %v4927 = vpop.permute.xlu0 %4926
        %4928 = vrot.lane.b32.xlu0 %v1487, 4
        %v4929 = vpop.permute.xlu0 %4928
        %4930 = vrot.lane.b32.xlu0 %v1509, 4
        %v4931 = vpop.permute.xlu0 %4930
        %4940 = vrot.lane.b32.xlu0 %v1461, 8
        %v4941 = vpop.permute.xlu0 %4940
        %4942 = vrot.lane.b32.xlu0 %v1464, 8
        %v4943 = vpop.permute.xlu0 %4942
        %4944 = vrot.lane.b32.xlu0 %v1467, 8
        %v4945 = vpop.permute.xlu0 %4944
        %4946 = vrot.lane.b32.xlu0 %v1470, 8
        %v4947 = vpop.permute.xlu0 %4946
        %4948 = vrot.lane.b32.xlu0 %v1473, 8
        %v4949 = vpop.permute.xlu0 %4948
        %4950 = vrot.lane.b32.xlu0 %v1476, 8
        %v4951 = vpop.permute.xlu0 %4950
        %4952 = vrot.lane.b32.xlu0 %v1490, 8
        %v4953 = vpop.permute.xlu0 %4952
        %4954 = vrot.lane.b32.xlu0 %v1512, 8
        %v4955 = vpop.permute.xlu0 %4954
        %4964 = vrot.lane.b32.xlu0 %v1347, 12
        %v4965 = vpop.permute.xlu0 %4964
        %4966 = vrot.lane.b32.xlu0 %v1349, 12
        %v4967 = vpop.permute.xlu0 %4966
        %4968 = vrot.lane.b32.xlu0 %v1351, 12
        %v4969 = vpop.permute.xlu0 %4968
        %4970 = vrot.lane.b32.xlu0 %v1353, 12
        %v4971 = vpop.permute.xlu0 %4970
        %4972 = vrot.lane.b32.xlu0 %v1355, 12
        %v4973 = vpop.permute.xlu0 %4972
        %4974 = vrot.lane.b32.xlu0 %v1357, 12
        %v4975 = vpop.permute.xlu0 %4974
        %4976 = vrot.lane.b32.xlu0 %v1359, 12
        %v4977 = vpop.permute.xlu0 %4976
        %4978 = vrot.lane.b32.xlu0 %v1361, 12
        %v4979 = vpop.permute.xlu0 %4978
        %4988 = vrot.lane.b32.xlu0 %v1392, 16
        %v4989 = vpop.permute.xlu0 %4988
        %4990 = vrot.lane.b32.xlu0 %v1395, 16
        %v4991 = vpop.permute.xlu0 %4990
        %4992 = vrot.lane.b32.xlu0 %v1398, 16
        %v4993 = vpop.permute.xlu0 %4992
        %4994 = vrot.lane.b32.xlu0 %v1401, 16
        %v4995 = vpop.permute.xlu0 %4994
        %4996 = vrot.lane.b32.xlu0 %v1404, 16
        %v4997 = vpop.permute.xlu0 %4996
        %4998 = vrot.lane.b32.xlu0 %v1481, 16
        %v4999 = vpop.permute.xlu0 %4998
        %5000 = vrot.lane.b32.xlu0 %v1495, 16
        %v5001 = vpop.permute.xlu0 %5000
        %5002 = vrot.lane.b32.xlu0 %v1517, 16
        %v5003 = vpop.permute.xlu0 %5002
        %5012 = vrot.lane.b32.xlu0 %v1416, 20
        %v5013 = vpop.permute.xlu0 %5012
        %5014 = vrot.lane.b32.xlu0 %v1419, 20
        %v5015 = vpop.permute.xlu0 %5014
        %5016 = vrot.lane.b32.xlu0 %v1422, 20
        %v5017 = vpop.permute.xlu0 %5016
        %5018 = vrot.lane.b32.xlu0 %v1425, 20
        %v5019 = vpop.permute.xlu0 %5018
        %5020 = vrot.lane.b32.xlu0 %v1428, 20
        %v5021 = vpop.permute.xlu0 %5020
        %5022 = vrot.lane.b32.xlu0 %v1484, 20
        %v5023 = vpop.permute.xlu0 %5022
        %5024 = vrot.lane.b32.xlu0 %v1498, 20
        %v5025 = vpop.permute.xlu0 %5024
        %5026 = vrot.lane.b32.xlu0 %v1520, 20
        %v5027 = vpop.permute.xlu0 %5026
        %5036 = vrot.lane.b32.xlu0 %v1440, 24
        %v5037 = vpop.permute.xlu0 %5036
        %5038 = vrot.lane.b32.xlu0 %v1443, 24
        %v5039 = vpop.permute.xlu0 %5038
        %5040 = vrot.lane.b32.xlu0 %v1446, 24
        %v5041 = vpop.permute.xlu0 %5040
        %5042 = vrot.lane.b32.xlu0 %v1449, 24
        %v5043 = vpop.permute.xlu0 %5042
        %5044 = vrot.lane.b32.xlu0 %v1452, 24
        %v5045 = vpop.permute.xlu0 %5044
        %5046 = vrot.lane.b32.xlu0 %v1487, 24
        %v5047 = vpop.permute.xlu0 %5046
        %5048 = vrot.lane.b32.xlu0 %v1509, 24
        %v5049 = vpop.permute.xlu0 %5048
        %5050 = vrot.lane.b32.xlu0 %v1523, 24
        %v5051 = vpop.permute.xlu0 %5050
        %5060 = vrot.lane.b32.xlu0 %v1464, 28
        %v5061 = vpop.permute.xlu0 %5060
        %5062 = vrot.lane.b32.xlu0 %v1467, 28
        %v5063 = vpop.permute.xlu0 %5062
        %5064 = vrot.lane.b32.xlu0 %v1470, 28
        %v5065 = vpop.permute.xlu0 %5064
        %5066 = vrot.lane.b32.xlu0 %v1473, 28
        %v5067 = vpop.permute.xlu0 %5066
        %5068 = vrot.lane.b32.xlu0 %v1476, 28
        %v5069 = vpop.permute.xlu0 %5068
        %5070 = vrot.lane.b32.xlu0 %v1490, 28
        %v5071 = vpop.permute.xlu0 %5070
        %5072 = vrot.lane.b32.xlu0 %v1512, 28
        %v5073 = vpop.permute.xlu0 %5072
        %5074 = vrot.lane.b32.xlu0 %v1526, 28
        %v5075 = vpop.permute.xlu0 %5074
        %5084 = vrot.lane.b32.xlu0 %v1349, 32
        %v5085 = vpop.permute.xlu0 %5084
        %5086 = vrot.lane.b32.xlu0 %v1351, 32
        %v5087 = vpop.permute.xlu0 %5086
        %5088 = vrot.lane.b32.xlu0 %v1353, 32
        %v5089 = vpop.permute.xlu0 %5088
        %5090 = vrot.lane.b32.xlu0 %v1355, 32
        %v5091 = vpop.permute.xlu0 %5090
        %5092 = vrot.lane.b32.xlu0 %v1357, 32
        %v5093 = vpop.permute.xlu0 %5092
        %5094 = vrot.lane.b32.xlu0 %v1359, 32
        %v5095 = vpop.permute.xlu0 %5094
        %5096 = vrot.lane.b32.xlu0 %v1361, 32
        %v5097 = vpop.permute.xlu0 %5096
        %5098 = vrot.lane.b32.xlu0 %v1363, 32
        %v5099 = vpop.permute.xlu0 %5098
        %5108 = vrot.lane.b32.xlu0 %v1395, 36
        %v5109 = vpop.permute.xlu0 %5108
        %5110 = vrot.lane.b32.xlu0 %v1398, 36
        %v5111 = vpop.permute.xlu0 %5110
        %5112 = vrot.lane.b32.xlu0 %v1401, 36
        %v5113 = vpop.permute.xlu0 %5112
        %5114 = vrot.lane.b32.xlu0 %v1404, 36
        %v5115 = vpop.permute.xlu0 %5114
        %5116 = vrot.lane.b32.xlu0 %v1481, 36
        %v5117 = vpop.permute.xlu0 %5116
        %5118 = vrot.lane.b32.xlu0 %v1495, 36
        %v5119 = vpop.permute.xlu0 %5118
        %5120 = vrot.lane.b32.xlu0 %v1517, 36
        %v5121 = vpop.permute.xlu0 %5120
        %5122 = vrot.lane.b32.xlu0 %v1531, 36
        %v5123 = vpop.permute.xlu0 %5122
        %5132 = vrot.lane.b32.xlu0 %v1419, 40
        %v5133 = vpop.permute.xlu0 %5132
        %5134 = vrot.lane.b32.xlu0 %v1422, 40
        %v5135 = vpop.permute.xlu0 %5134
        %5136 = vrot.lane.b32.xlu0 %v1425, 40
        %v5137 = vpop.permute.xlu0 %5136
        %5138 = vrot.lane.b32.xlu0 %v1428, 40
        %v5139 = vpop.permute.xlu0 %5138
        %5140 = vrot.lane.b32.xlu0 %v1484, 40
        %v5141 = vpop.permute.xlu0 %5140
        %5142 = vrot.lane.b32.xlu0 %v1498, 40
        %v5143 = vpop.permute.xlu0 %5142
        %5144 = vrot.lane.b32.xlu0 %v1520, 40
        %v5145 = vpop.permute.xlu0 %5144
        %5146 = vrot.lane.b32.xlu0 %v1534, 40
        %v5147 = vpop.permute.xlu0 %5146
        %5156 = vrot.lane.b32.xlu0 %v1443, 44
        %v5157 = vpop.permute.xlu0 %5156
        %5158 = vrot.lane.b32.xlu0 %v1446, 44
        %v5159 = vpop.permute.xlu0 %5158
        %5160 = vrot.lane.b32.xlu0 %v1449, 44
        %v5161 = vpop.permute.xlu0 %5160
        %5162 = vrot.lane.b32.xlu0 %v1452, 44
        %v5163 = vpop.permute.xlu0 %5162
        %5164 = vrot.lane.b32.xlu0 %v1487, 44
        %v5165 = vpop.permute.xlu0 %5164
        %5166 = vrot.lane.b32.xlu0 %v1509, 44
        %v5167 = vpop.permute.xlu0 %5166
        %5168 = vrot.lane.b32.xlu0 %v1523, 44
        %v5169 = vpop.permute.xlu0 %5168
        %5170 = vrot.lane.b32.xlu0 %v1537, 44
        %v5171 = vpop.permute.xlu0 %5170
        %5180 = vrot.lane.b32.xlu0 %v1467, 48
        %v5181 = vpop.permute.xlu0 %5180
        %5182 = vrot.lane.b32.xlu0 %v1470, 48
        %v5183 = vpop.permute.xlu0 %5182
        %5184 = vrot.lane.b32.xlu0 %v1473, 48
        %v5185 = vpop.permute.xlu0 %5184
        %5186 = vrot.lane.b32.xlu0 %v1476, 48
        %v5187 = vpop.permute.xlu0 %5186
        %5188 = vrot.lane.b32.xlu0 %v1490, 48
        %v5189 = vpop.permute.xlu0 %5188
        %5190 = vrot.lane.b32.xlu0 %v1512, 48
        %v5191 = vpop.permute.xlu0 %5190
        %5192 = vrot.lane.b32.xlu0 %v1526, 48
        %v5193 = vpop.permute.xlu0 %5192
        %5194 = vrot.lane.b32.xlu0 %v1540, 48
        %v5195 = vpop.permute.xlu0 %5194
        %v5204 = vsel %vm1901, %v1413, %v4917
        %v5205 = vsel %vm1901, %v1416, %v4919
        %v5206 = vsel %vm1901, %v1419, %v4921
        %v5207 = vsel %vm1901, %v1422, %v4923
        %v5208 = vsel %vm1901, %v1425, %v4925
        %v5209 = vsel %vm1901, %v1428, %v4927
        %v5210 = vsel %vm1901, %v1484, %v4929
        %v5211 = vsel %vm1901, %v1498, %v4931
        %v5212 = vsel %vm1910, %v5204, %v4941
        %v5213 = vsel %vm1910, %v5205, %v4943
        %v5214 = vsel %vm1910, %v5206, %v4945
        %v5215 = vsel %vm1910, %v5207, %v4947
        %v5216 = vsel %vm1910, %v5208, %v4949
        %v5217 = vsel %vm1910, %v5209, %v4951
        %v5218 = vsel %vm1910, %v5210, %v4953
        %v5219 = vsel %vm1910, %v5211, %v4955
        %v5220 = vsel %vm1919, %v5212, %v4965
        %v5221 = vsel %vm1919, %v5213, %v4967
        %v5222 = vsel %vm1919, %v5214, %v4969
        %v5223 = vsel %vm1919, %v5215, %v4971
        %v5224 = vsel %vm1919, %v5216, %v4973
        %v5225 = vsel %vm1919, %v5217, %v4975
        %v5226 = vsel %vm1919, %v5218, %v4977
        %v5227 = vsel %vm1919, %v5219, %v4979
        %v5228 = vsel %vm1928, %v5220, %v4989
        %v5229 = vsel %vm1928, %v5221, %v4991
        %v5230 = vsel %vm1928, %v5222, %v4993
        %v5231 = vsel %vm1928, %v5223, %v4995
        %v5232 = vsel %vm1928, %v5224, %v4997
        %v5233 = vsel %vm1928, %v5225, %v4999
        %v5234 = vsel %vm1928, %v5226, %v5001
        %v5235 = vsel %vm1928, %v5227, %v5003
        %v5236 = vsel %vm1937, %v5228, %v5013
        %v5237 = vsel %vm1937, %v5229, %v5015
        %v5238 = vsel %vm1937, %v5230, %v5017
        %v5239 = vsel %vm1937, %v5231, %v5019
        %v5240 = vsel %vm1937, %v5232, %v5021
        %v5241 = vsel %vm1937, %v5233, %v5023
        %v5242 = vsel %vm1937, %v5234, %v5025
        %v5243 = vsel %vm1937, %v5235, %v5027
        %v5244 = vsel %vm1946, %v5236, %v5037
        %v5245 = vsel %vm1946, %v5237, %v5039
        %v5246 = vsel %vm1946, %v5238, %v5041
        %v5247 = vsel %vm1946, %v5239, %v5043
        %v5248 = vsel %vm1946, %v5240, %v5045
        %v5249 = vsel %vm1946, %v5241, %v5047
        %v5250 = vsel %vm1946, %v5242, %v5049
        %v5251 = vsel %vm1946, %v5243, %v5051
        %v5252 = vsel %vm1955, %v5244, %v5061
        %v5253 = vsel %vm1955, %v5245, %v5063
        %v5254 = vsel %vm1955, %v5246, %v5065
        %v5255 = vsel %vm1955, %v5247, %v5067
        %v5256 = vsel %vm1955, %v5248, %v5069
        %v5257 = vsel %vm1955, %v5249, %v5071
        %v5258 = vsel %vm1955, %v5250, %v5073
        %v5259 = vsel %vm1955, %v5251, %v5075
        %v5260 = vsel %vm1964, %v5252, %v5085
        %v5261 = vsel %vm1964, %v5253, %v5087
        %v5262 = vsel %vm1964, %v5254, %v5089
        %v5263 = vsel %vm1964, %v5255, %v5091
        %v5264 = vsel %vm1964, %v5256, %v5093
        %v5265 = vsel %vm1964, %v5257, %v5095
        %v5266 = vsel %vm1964, %v5258, %v5097
        %v5267 = vsel %vm1964, %v5259, %v5099
        %v5268 = vsel %vm1973, %v5260, %v5109
        %v5269 = vsel %vm1973, %v5261, %v5111
        %v5270 = vsel %vm1973, %v5262, %v5113
        %v5271 = vsel %vm1973, %v5263, %v5115
        %v5272 = vsel %vm1973, %v5264, %v5117
        %v5273 = vsel %vm1973, %v5265, %v5119
        %v5274 = vsel %vm1973, %v5266, %v5121
        %v5275 = vsel %vm1973, %v5267, %v5123
        %v5276 = vsel %vm1982, %v5268, %v5133
        %v5277 = vsel %vm1982, %v5269, %v5135
        %v5278 = vsel %vm1982, %v5270, %v5137
        %v5279 = vsel %vm1982, %v5271, %v5139
        %v5280 = vsel %vm1982, %v5272, %v5141
        %v5281 = vsel %vm1982, %v5273, %v5143
        %v5282 = vsel %vm1982, %v5274, %v5145
        %v5283 = vsel %vm1982, %v5275, %v5147
        %v5284 = vsel %vm1991, %v5276, %v5157
        %v5285 = vsel %vm1991, %v5277, %v5159
        %v5286 = vsel %vm1991, %v5278, %v5161
        %v5287 = vsel %vm1991, %v5279, %v5163
        %v5288 = vsel %vm1991, %v5280, %v5165
        %v5289 = vsel %vm1991, %v5281, %v5167
        %v5290 = vsel %vm1991, %v5282, %v5169
        %v5291 = vsel %vm1991, %v5283, %v5171
        %v5292 = vsel %vm2000, %v5284, %v5181
        %v5293 = vsel %vm2000, %v5285, %v5183
        %v5294 = vsel %vm2000, %v5286, %v5185
        %v5295 = vsel %vm2000, %v5287, %v5187
        %v5296 = vsel %vm2000, %v5288, %v5189
        %v5297 = vsel %vm2000, %v5289, %v5191
        %v5298 = vsel %vm2000, %v5290, %v5193
        %v5299 = vsel %vm2000, %v5291, %v5195
        %v5300 = vsel %vm2009, %v5292, 0.0
        %v5301 = vsel %vm2009, %v5293, 0.0
        %v5302 = vsel %vm2009, %v5294, 0.0
        %v5303 = vsel %vm2009, %v5295, 0.0
        %v5304 = vsel %vm2009, %v5296, 0.0
        %v5305 = vsel %vm2009, %v5297, 0.0
        %v5306 = vsel %vm2009, %v5298, 0.0
        %v5307 = vsel %vm2009, %v5299, 0.0
        %5316 = vrot.lane.b32.xlu0 %v2508, 64
        %v5317 = vpop.permute.xlu0 %5316
        %5318 = vrot.lane.b32.xlu0 %v2509, 64
        %v5319 = vpop.permute.xlu0 %5318
        %5320 = vrot.lane.b32.xlu0 %v2510, 64
        %v5321 = vpop.permute.xlu0 %5320
        %5322 = vrot.lane.b32.xlu0 %v2511, 64
        %v5323 = vpop.permute.xlu0 %5322
        %5324 = vrot.lane.b32.xlu0 %v2512, 64
        %v5325 = vpop.permute.xlu0 %5324
        %5326 = vrot.lane.b32.xlu0 %v2513, 64
        %v5327 = vpop.permute.xlu0 %5326
        %5328 = vrot.lane.b32.xlu0 %v2514, 64
        %v5329 = vpop.permute.xlu0 %5328
        %5330 = vrot.lane.b32.xlu0 %v2515, 64
        %v5331 = vpop.permute.xlu0 %5330
        %5348 = vrot.lane.b32.xlu0 %v3468, 64
        %v5349 = vpop.permute.xlu0 %5348
        %5350 = vrot.lane.b32.xlu0 %v3469, 64
        %v5351 = vpop.permute.xlu0 %5350
        %5352 = vrot.lane.b32.xlu0 %v3470, 64
        %v5353 = vpop.permute.xlu0 %5352
        %5354 = vrot.lane.b32.xlu0 %v3471, 64
        %v5355 = vpop.permute.xlu0 %5354
        %5356 = vrot.lane.b32.xlu0 %v3472, 64
        %v5357 = vpop.permute.xlu0 %5356
        %5358 = vrot.lane.b32.xlu0 %v3473, 64
        %v5359 = vpop.permute.xlu0 %5358
        %5360 = vrot.lane.b32.xlu0 %v3474, 64
        %v5361 = vpop.permute.xlu0 %5360
        %5362 = vrot.lane.b32.xlu0 %v3475, 64
        %v5363 = vpop.permute.xlu0 %5362
        %5380 = vrot.lane.b32.xlu0 %v4428, 64
        %v5381 = vpop.permute.xlu0 %5380
        %5382 = vrot.lane.b32.xlu0 %v4429, 64
        %v5383 = vpop.permute.xlu0 %5382
        %5384 = vrot.lane.b32.xlu0 %v4430, 64
        %v5385 = vpop.permute.xlu0 %5384
        %5386 = vrot.lane.b32.xlu0 %v4431, 64
        %v5387 = vpop.permute.xlu0 %5386
        %5388 = vrot.lane.b32.xlu0 %v4432, 64
        %v5389 = vpop.permute.xlu0 %5388
        %5390 = vrot.lane.b32.xlu0 %v4433, 64
        %v5391 = vpop.permute.xlu0 %5390
        %5392 = vrot.lane.b32.xlu0 %v4434, 64
        %v5393 = vpop.permute.xlu0 %5392
        %5394 = vrot.lane.b32.xlu0 %v4435, 64
        %v5395 = vpop.permute.xlu0 %5394
        %5412 = vrot.lane.b32.xlu0 %v5300, 64
        %v5413 = vpop.permute.xlu0 %5412
        %5414 = vrot.lane.b32.xlu0 %v5301, 64
        %v5415 = vpop.permute.xlu0 %5414
        %5416 = vrot.lane.b32.xlu0 %v5302, 64
        %v5417 = vpop.permute.xlu0 %5416
        %5418 = vrot.lane.b32.xlu0 %v5303, 64
        %v5419 = vpop.permute.xlu0 %5418
        %5420 = vrot.lane.b32.xlu0 %v5304, 64
        %v5421 = vpop.permute.xlu0 %5420
        %5422 = vrot.lane.b32.xlu0 %v5305, 64
        %v5423 = vpop.permute.xlu0 %5422
        %5424 = vrot.lane.b32.xlu0 %v5306, 64
        %v5425 = vpop.permute.xlu0 %5424
        %5426 = vrot.lane.b32.xlu0 %v5307, 64
        %v5427 = vpop.permute.xlu0 %5426
        %vm5436 = vcmask 523264
        %v5437 = vsel %vm5436, %v2028, %v5317
        %v5438 = vsel %vm5436, %v2029, %v5319
        %v5439 = vsel %vm5436, %v2030, %v5321
        %v5440 = vsel %vm5436, %v2031, %v5323
        %v5441 = vsel %vm5436, %v2032, %v5325
        %v5442 = vsel %vm5436, %v2033, %v5327
        %v5443 = vsel %vm5436, %v2034, %v5329
        %v5444 = vsel %vm5436, %v2035, %v5331
        %v5445 = vsel %vm5436, %v2988, %v5349
        %v5446 = vsel %vm5436, %v2989, %v5351
        %v5447 = vsel %vm5436, %v2990, %v5353
        %v5448 = vsel %vm5436, %v2991, %v5355
        %v5449 = vsel %vm5436, %v2992, %v5357
        %v5450 = vsel %vm5436, %v2993, %v5359
        %v5451 = vsel %vm5436, %v2994, %v5361
        %v5452 = vsel %vm5436, %v2995, %v5363
        %v5453 = vsel %vm5436, %v3948, %v5381
        %v5454 = vsel %vm5436, %v3949, %v5383
        %v5455 = vsel %vm5436, %v3950, %v5385
        %v5456 = vsel %vm5436, %v3951, %v5387
        %v5457 = vsel %vm5436, %v3952, %v5389
        %v5458 = vsel %vm5436, %v3953, %v5391
        %v5459 = vsel %vm5436, %v3954, %v5393
        %v5460 = vsel %vm5436, %v3955, %v5395
        %v5461 = vsel %vm5436, %v4908, %v5413
        %v5462 = vsel %vm5436, %v4909, %v5415
        %v5463 = vsel %vm5436, %v4910, %v5417
        %v5464 = vsel %vm5436, %v4911, %v5419
        %v5465 = vsel %vm5436, %v4912, %v5421
        %v5466 = vsel %vm5436, %v4913, %v5423
        %v5467 = vsel %vm5436, %v4914, %v5425
        %v5468 = vsel %vm5436, %v4915, %v5427
        %v5469 = vld [vmem:[%s5] sm:$0xff]
        %v5470 = vld [vmem:[%s5 + $0x8] sm:$0xff]
        %v5471 = vld [vmem:[%s5 + $0x10] sm:$0xff]
        %v5472 = vld [vmem:[%s5 + $0x18] sm:$0xff]
        %v5473 = vld [vmem:[%s5 + $0x20] sm:$0xff]
        %v5474 = vld [vmem:[%s5 + $0x28] sm:$0xff]
        %v5475 = vld [vmem:[%s5 + $0x30] sm:$0xff]
        %v5476 = vld [vmem:[%s5 + $0x38] sm:$0xff]
        %v5477 = vld [vmem:[%s5 + $0x40] sm:$0xff]
        %v5478 = vld [vmem:[%s5 + $0x48] sm:$0xff]
        %v5479 = vld [vmem:[%s5 + $0x50] sm:$0xff]
        %v5480 = vld [vmem:[%s5 + $0x58] sm:$0xff]
        %v5481 = vld [vmem:[%s5 + $0x60] sm:$0xff]
        %v5482 = vld [vmem:[%s5 + $0x68] sm:$0xff]
        %v5483 = vld [vmem:[%s5 + $0x70] sm:$0xff]
        %v5484 = vld [vmem:[%s5 + $0x78] sm:$0xff]
        %v5485 = vld [vmem:[%s5 + $0x80] sm:$0xff]
        %v5486 = vld [vmem:[%s5 + $0x88] sm:$0xff]
        %v5487 = vld [vmem:[%s5 + $0x90] sm:$0xff]
        %v5488 = vld [vmem:[%s5 + $0x98] sm:$0xff]
        %v5489 = vld [vmem:[%s5 + $0xa0] sm:$0xff]
        %v5490 = vld [vmem:[%s5 + $0xa8] sm:$0xff]
        %v5491 = vld [vmem:[%s5 + $0xb0] sm:$0xff]
        %v5492 = vld [vmem:[%s5 + $0xb8] sm:$0xff]
        %v5493 = vld [vmem:[%s5 + $0xc0] sm:$0xff]
        %v5494 = vld [vmem:[%s5 + $0xc8] sm:$0xff]
        %v5495 = vld [vmem:[%s5 + $0xd0] sm:$0xff]
        %v5496 = vld [vmem:[%s5 + $0xd8] sm:$0xff]
        %v5497 = vld [vmem:[%s5 + $0xe0] sm:$0xff]
        %v5498 = vld [vmem:[%s5 + $0xe8] sm:$0xff]
        %v5499 = vld [vmem:[%s5 + $0xf0] sm:$0xff]
        %v5500 = vld [vmem:[%s5 + $0xf8] sm:$0xff]
        %v5501 = vld [vmem:[%s5 + $0x100] sm:$0xff]
        %v5502 = vld [vmem:[%s5 + $0x108] sm:$0xff]
        %v5503 = vld [vmem:[%s5 + $0x110] sm:$0xff]
        %v5504 = vld [vmem:[%s5 + $0x118] sm:$0xff]
        %v5505 = vld [vmem:[%s5 + $0x120] sm:$0xff]
        %v5506 = vld [vmem:[%s5 + $0x128] sm:$0xff]
        %v5507 = vld [vmem:[%s5 + $0x130] sm:$0xff]
        %v5508 = vld [vmem:[%s5 + $0x138] sm:$0xff]
        %v5509 = vld [vmem:[%s5 + $0x140] sm:$0xff]
        %v5510 = vld [vmem:[%s5 + $0x148] sm:$0xff]
        %v5511 = vld [vmem:[%s5 + $0x150] sm:$0xff]
        %v5512 = vld [vmem:[%s5 + $0x158] sm:$0xff]
        %v5513 = vld [vmem:[%s5 + $0x160] sm:$0xff]
        %v5514 = vld [vmem:[%s5 + $0x168] sm:$0xff]
        %v5515 = vld [vmem:[%s5 + $0x170] sm:$0xff]
        %v5516 = vld [vmem:[%s5 + $0x178] sm:$0xff]
        %v5517 = vld [vmem:[%s5 + $0x180] sm:$0xff]
        %v5518 = vld [vmem:[%s5 + $0x188] sm:$0xff]
        %v5519 = vld [vmem:[%s5 + $0x190] sm:$0xff]
        %v5520 = vld [vmem:[%s5 + $0x198] sm:$0xff]
        %v5521 = vld [vmem:[%s5 + $0x1a0] sm:$0xff]
        %v5522 = vld [vmem:[%s5 + $0x1a8] sm:$0xff]
        %v5523 = vld [vmem:[%s5 + $0x1b0] sm:$0xff]
        %v5524 = vld [vmem:[%s5 + $0x1b8] sm:$0xff]
        %v5525 = vld [vmem:[%s5 + $0x1c0] sm:$0xff]
        %v5526 = vld [vmem:[%s5 + $0x1c8] sm:$0xff]
        %v5527 = vld [vmem:[%s5 + $0x1d0] sm:$0xff]
        %v5528 = vld [vmem:[%s5 + $0x1d8] sm:$0xff]
        %v5529 = vld [vmem:[%s5 + $0x1e0] sm:$0xff]
        %v5530 = vld [vmem:[%s5 + $0x1e8] sm:$0xff]
        %v5531 = vld [vmem:[%s5 + $0x1f0] sm:$0xff]
        %v5532 = vld [vmem:[%s5 + $0x1f8] sm:$0xff]
        %5533 = vmatprep.subr.mxu0 0.0
        %5534 = vmatpush1.msra.mxu0 %v5469
        %5535 = vmatprep.subr.mxu0 0.0
        %5536 = vmatpush1.msra.mxu0 %v5470
        %5537 = vmatprep.subr.mxu0 0.0
        %5538 = vmatpush1.msra.mxu0 %v5471
        %5539 = vmatprep.subr.mxu0 0.0
        %5540 = vmatpush1.msra.mxu0 %v5472
        %5541 = vmatprep.subr.mxu0 0.0
        %5542 = vmatpush1.msra.mxu0 %v5473
        %5543 = vmatprep.subr.mxu0 0.0
        %5544 = vmatpush1.msra.mxu0 %v5474
        %5545 = vmatprep.subr.mxu0 0.0
        %5546 = vmatpush1.msra.mxu0 %v5475
        %5547 = vmatprep.subr.mxu0 0.0
        %5548 = vmatpush1.msra.mxu0 %v5476
        %5549 = vmatprep.subr.mxu0 0.0
        %5550 = vmatpush1.msra.mxu0 %v5477
        %5551 = vmatprep.subr.mxu0 0.0
        %5552 = vmatpush1.msra.mxu0 %v5478
        %5553 = vmatprep.subr.mxu0 0.0
        %5554 = vmatpush1.msra.mxu0 %v5479
        %5555 = vmatprep.subr.mxu0 0.0
        %5556 = vmatpush1.msra.mxu0 %v5480
        %5557 = vmatprep.subr.mxu0 0.0
        %5558 = vmatpush1.msra.mxu0 %v5481
        %5559 = vmatprep.subr.mxu0 0.0
        %5560 = vmatpush1.msra.mxu0 %v5482
        %5561 = vmatprep.subr.mxu0 0.0
        %5562 = vmatpush1.msra.mxu0 %v5483
        %5563 = vmatprep.subr.mxu0 0.0
        %5564 = vmatpush1.msra.mxu0 %v5484
        %5565 = vmatprep.subr.mxu0 0.0
        %5566 = vmatpush1.msra.mxu0 %v5485
        %5567 = vmatprep.subr.mxu0 0.0
        %5568 = vmatpush1.msra.mxu0 %v5486
        %5569 = vmatprep.subr.mxu0 0.0
        %5570 = vmatpush1.msra.mxu0 %v5487
        %5571 = vmatprep.subr.mxu0 0.0
        %5572 = vmatpush1.msra.mxu0 %v5488
        %5573 = vmatprep.subr.mxu0 0.0
        %5574 = vmatpush1.msra.mxu0 %v5489
        %5575 = vmatprep.subr.mxu0 0.0
        %5576 = vmatpush1.msra.mxu0 %v5490
        %5577 = vmatprep.subr.mxu0 0.0
        %5578 = vmatpush1.msra.mxu0 %v5491
        %5579 = vmatprep.subr.mxu0 0.0
        %5580 = vmatpush1.msra.mxu0 %v5492
        %5581 = vmatprep.subr.mxu0 0.0
        %5582 = vmatpush1.msra.mxu0 %v5493
        %5583 = vmatprep.subr.mxu0 0.0
        %5584 = vmatpush1.msra.mxu0 %v5494
        %5585 = vmatprep.subr.mxu0 0.0
        %5586 = vmatpush1.msra.mxu0 %v5495
        %5587 = vmatprep.subr.mxu0 0.0
        %5588 = vmatpush1.msra.mxu0 %v5496
        %5589 = vmatprep.subr.mxu0 0.0
        %5590 = vmatpush1.msra.mxu0 %v5497
        %5591 = vmatprep.subr.mxu0 0.0
        %5592 = vmatpush1.msra.mxu0 %v5498
        %5593 = vmatprep.subr.mxu0 0.0
        %5594 = vmatpush1.msra.mxu0 %v5499
        %5595 = vmatprep.subr.mxu0 0.0
        %5596 = vmatpush1.msra.mxu0 %v5500
        %5597 = vmatprep.mubr.f32.mxu0 %v5445
        %5598 = vmatmul.mubr.f32.gmra.mrb[0].mxu0 %v5437
        %v5599 = vpop.f32.mrb[0].mxu0
        %v5600 = vadd.f32 0.0, %v5599
        %v5601 = vpop.f32.mrb[0].mxu0
        %5602 = vmatprep.mubr.f32.mxu0 %v5446
        %5603 = vmatmul.mubr.f32.gmra.mrb[0].mxu0 %v5438
        %v5604 = vpop.f32.mrb[0].mxu0
        %v5605 = vadd.f32 0.0, %v5604
        %v5606 = vpop.f32.mrb[0].mxu0
        %5607 = vmatprep.mubr.f32.mxu0 %v5447
        %5608 = vmatmul.mubr.f32.gmra.mrb[0].mxu0 %v5439
        %v5609 = vpop.f32.mrb[0].mxu0
        %v5610 = vadd.f32 0.0, %v5609
        %v5611 = vpop.f32.mrb[0].mxu0
        %5612 = vmatprep.mubr.f32.mxu0 %v5448
        %5613 = vmatmul.mubr.f32.gmra.mrb[0].mxu0 %v5440
        %v5614 = vpop.f32.mrb[0].mxu0
        %v5615 = vadd.f32 0.0, %v5614
        %v5616 = vpop.f32.mrb[0].mxu0
        %5617 = vmatprep.mubr.f32.mxu0 %v5449
        %5618 = vmatmul.mubr.f32.gmra.mrb[0].mxu0 %v5441
        %v5619 = vpop.f32.mrb[0].mxu0
        %v5620 = vadd.f32 0.0, %v5619
        %v5621 = vpop.f32.mrb[0].mxu0
        %5622 = vmatprep.mubr.f32.mxu0 %v5450
        %5623 = vmatmul.mubr.f32.gmra.mrb[0].mxu0 %v5442
        %v5624 = vpop.f32.mrb[0].mxu0
        %v5625 = vadd.f32 0.0, %v5624
        %v5626 = vpop.f32.mrb[0].mxu0
        %5627 = vmatprep.mubr.f32.mxu0 %v5451
        %5628 = vmatmul.mubr.f32.gmra.mrb[0].mxu0 %v5443
        %v5629 = vpop.f32.mrb[0].mxu0
        %v5630 = vadd.f32 0.0, %v5629
        %v5631 = vpop.f32.mrb[0].mxu0
        %5632 = vmatprep.mubr.f32.mxu0 %v5452
        %5633 = vmatmul.mubr.f32.gmra.mrb[0].mxu0 %v5444
        %v5634 = vpop.f32.mrb[0].mxu0
        %v5635 = vadd.f32 0.0, %v5634
        %v5636 = vpop.f32.mrb[0].mxu0
        %5637 = vdwg.mxu0
        %5638 = vmatprep.subr.mxu0 0.0
        %5639 = vmatpush1.msra.mxu0 %v5501
        %5640 = vmatprep.subr.mxu0 0.0
        %5641 = vmatpush1.msra.mxu0 %v5502
        %5642 = vmatprep.subr.mxu0 0.0
        %5643 = vmatpush1.msra.mxu0 %v5503
        %5644 = vmatprep.subr.mxu0 0.0
        %5645 = vmatpush1.msra.mxu0 %v5504
        %5646 = vmatprep.subr.mxu0 0.0
        %5647 = vmatpush1.msra.mxu0 %v5505
        %5648 = vmatprep.subr.mxu0 0.0
        %5649 = vmatpush1.msra.mxu0 %v5506
        %5650 = vmatprep.subr.mxu0 0.0
        %5651 = vmatpush1.msra.mxu0 %v5507
        %5652 = vmatprep.subr.mxu0 0.0
        %5653 = vmatpush1.msra.mxu0 %v5508
        %5654 = vmatprep.subr.mxu0 0.0
        %5655 = vmatpush1.msra.mxu0 %v5509
        %5656 = vmatprep.subr.mxu0 0.0
        %5657 = vmatpush1.msra.mxu0 %v5510
        %5658 = vmatprep.subr.mxu0 0.0
        %5659 = vmatpush1.msra.mxu0 %v5511
        %5660 = vmatprep.subr.mxu0 0.0
        %5661 = vmatpush1.msra.mxu0 %v5512
        %5662 = vmatprep.subr.mxu0 0.0
        %5663 = vmatpush1.msra.mxu0 %v5513
        %5664 = vmatprep.subr.mxu0 0.0
        %5665 = vmatpush1.msra.mxu0 %v5514
        %5666 = vmatprep.subr.mxu0 0.0
        %5667 = vmatpush1.msra.mxu0 %v5515
        %5668 = vmatprep.subr.mxu0 0.0
        %5669 = vmatpush1.msra.mxu0 %v5516
        %5670 = vmatprep.subr.mxu0 0.0
        %5671 = vmatpush1.msra.mxu0 %v5517
        %5672 = vmatprep.subr.mxu0 0.0
        %5673 = vmatpush1.msra.mxu0 %v5518
        %5674 = vmatprep.subr.mxu0 0.0
        %5675 = vmatpush1.msra.mxu0 %v5519
        %5676 = vmatprep.subr.mxu0 0.0
        %5677 = vmatpush1.msra.mxu0 %v5520
        %5678 = vmatprep.subr.mxu0 0.0
        %5679 = vmatpush1.msra.mxu0 %v5521
        %5680 = vmatprep.subr.mxu0 0.0
        %5681 = vmatpush1.msra.mxu0 %v5522
        %5682 = vmatprep.subr.mxu0 0.0
        %5683 = vmatpush1.msra.mxu0 %v5523
        %5684 = vmatprep.subr.mxu0 0.0
        %5685 = vmatpush1.msra.mxu0 %v5524
        %5686 = vmatprep.subr.mxu0 0.0
        %5687 = vmatpush1.msra.mxu0 %v5525
        %5688 = vmatprep.subr.mxu0 0.0
        %5689 = vmatpush1.msra.mxu0 %v5526
        %5690 = vmatprep.subr.mxu0 0.0
        %5691 = vmatpush1.msra.mxu0 %v5527
        %5692 = vmatprep.subr.mxu0 0.0
        %5693 = vmatpush1.msra.mxu0 %v5528
        %5694 = vmatprep.subr.mxu0 0.0
        %5695 = vmatpush1.msra.mxu0 %v5529
        %5696 = vmatprep.subr.mxu0 0.0
        %5697 = vmatpush1.msra.mxu0 %v5530
        %5698 = vmatprep.subr.mxu0 0.0
        %5699 = vmatpush1.msra.mxu0 %v5531
        %5700 = vmatprep.subr.mxu0 0.0
        %5701 = vmatpush1.msra.mxu0 %v5532
        %5702 = vmatprep.mubr.f32.mxu0 %v5461
        %5703 = vmatmul.mubr.f32.gmra.mrb[0].mxu0 %v5453
        %v5704 = vpop.f32.mrb[0].mxu0
        %v5705 = vadd.f32 %v5600, %v5704
        %v5706 = vpop.f32.mrb[0].mxu0
        %5707 = vmatprep.mubr.f32.mxu0 %v5462
        %5708 = vmatmul.mubr.f32.gmra.mrb[0].mxu0 %v5454
        %v5709 = vpop.f32.mrb[0].mxu0
        %v5710 = vadd.f32 %v5605, %v5709
        %v5711 = vpop.f32.mrb[0].mxu0
        %5712 = vmatprep.mubr.f32.mxu0 %v5463
        %5713 = vmatmul.mubr.f32.gmra.mrb[0].mxu0 %v5455
        %v5714 = vpop.f32.mrb[0].mxu0
        %v5715 = vadd.f32 %v5610, %v5714
        %v5716 = vpop.f32.mrb[0].mxu0
        %5717 = vmatprep.mubr.f32.mxu0 %v5464
        %5718 = vmatmul.mubr.f32.gmra.mrb[0].mxu0 %v5456
        %v5719 = vpop.f32.mrb[0].mxu0
        %v5720 = vadd.f32 %v5615, %v5719
        %v5721 = vpop.f32.mrb[0].mxu0
        %5722 = vmatprep.mubr.f32.mxu0 %v5465
        %5723 = vmatmul.mubr.f32.gmra.mrb[0].mxu0 %v5457
        %v5724 = vpop.f32.mrb[0].mxu0
        %v5725 = vadd.f32 %v5620, %v5724
        %v5726 = vpop.f32.mrb[0].mxu0
        %5727 = vmatprep.mubr.f32.mxu0 %v5466
        %5728 = vmatmul.mubr.f32.gmra.mrb[0].mxu0 %v5458
        %v5729 = vpop.f32.mrb[0].mxu0
        %v5730 = vadd.f32 %v5625, %v5729
        %v5731 = vpop.f32.mrb[0].mxu0
        %5732 = vmatprep.mubr.f32.mxu0 %v5467
        %5733 = vmatmul.mubr.f32.gmra.mrb[0].mxu0 %v5459
        %v5734 = vpop.f32.mrb[0].mxu0
        %v5735 = vadd.f32 %v5630, %v5734
        %v5736 = vpop.f32.mrb[0].mxu0
        %5737 = vmatprep.mubr.f32.mxu0 %v5468
        %5738 = vmatmul.mubr.f32.gmra.mrb[0].mxu0 %v5460
        %v5739 = vpop.f32.mrb[0].mxu0
        %v5740 = vadd.f32 %v5635, %v5739
        %v5741 = vpop.f32.mrb[0].mxu0
        %5742 = vdwg.mxu0
        %5743 = vst.msk [vmem:[%s528] sm:$0xff] %vm1928, %v5705
        %5744 = vst.msk [vmem:[%s528 + $0x8] sm:$0xff] %vm1928, %v5710
        %5745 = vst.msk [vmem:[%s528 + $0x10] sm:$0xff] %vm1928, %v5715
        %5746 = vst.msk [vmem:[%s528 + $0x18] sm:$0xff] %vm1928, %v5720
        %5747 = vst.msk [vmem:[%s528 + $0x20] sm:$0xff] %vm1928, %v5725
        %5748 = vst.msk [vmem:[%s528 + $0x28] sm:$0xff] %vm1928, %v5730
        %5749 = vst.msk [vmem:[%s528 + $0x30] sm:$0xff] %vm1928, %v5735
        %5750 = vst.msk [vmem:[%s528 + $0x38] sm:$0xff] %vm1928, %v5740
        %v5751 = vsel %vm1928, %v5705, 0.0
        %v5752 = vsel %vm1928, %v5710, 0.0
        %v5753 = vadd.f32 %v5751, %v5752
        %v5754 = vsel %vm1928, %v5715, 0.0
        %v5755 = vadd.f32 %v5753, %v5754
        %v5756 = vsel %vm1928, %v5720, 0.0
        %v5757 = vadd.f32 %v5755, %v5756
        %v5758 = vsel %vm1928, %v5725, 0.0
        %v5759 = vadd.f32 %v5757, %v5758
        %v5760 = vsel %vm1928, %v5730, 0.0
        %v5761 = vadd.f32 %v5759, %v5760
        %v5762 = vsel %vm1928, %v5735, 0.0
        %v5763 = vadd.f32 %v5761, %v5762
        %v5764 = vsel %vm1928, %v5740, 0.0
        %v5765 = vadd.f32 %v5763, %v5764
        %v5766 = vrot.slane %v5765, 4
        %v5767 = vadd.f32 %v5765, %v5766
        %v5768 = vrot.slane %v5767, 2
        %v5769 = vadd.f32 %v5767, %v5768
        %v5770 = vrot.slane %v5769, 1
        %v5771 = vadd.f32 %v5769, %v5770
        %vm5772 = vcmask 122880
        %5773 = vst.msk [vmem:[%s460] sm:$0x1] %vm5772, %v5771
        %v5774 = vmul.f32 %v5705, %v5705
        %v5775 = vmul.f32 %v5710, %v5710
        %v5776 = vmul.f32 %v5715, %v5715
        %v5777 = vmul.f32 %v5720, %v5720
        %v5778 = vmul.f32 %v5725, %v5725
        %v5779 = vmul.f32 %v5730, %v5730
        %v5780 = vmul.f32 %v5735, %v5735
        %v5781 = vmul.f32 %v5740, %v5740
        %v5782 = vsel %vm1928, %v5774, 0.0
        %v5783 = vsel %vm1928, %v5775, 0.0
        %v5784 = vadd.f32 %v5782, %v5783
        %v5785 = vsel %vm1928, %v5776, 0.0
        %v5786 = vadd.f32 %v5784, %v5785
        %v5787 = vsel %vm1928, %v5777, 0.0
        %v5788 = vadd.f32 %v5786, %v5787
        %v5789 = vsel %vm1928, %v5778, 0.0
        %v5790 = vadd.f32 %v5788, %v5789
        %v5791 = vsel %vm1928, %v5779, 0.0
        %v5792 = vadd.f32 %v5790, %v5791
        %v5793 = vsel %vm1928, %v5780, 0.0
        %v5794 = vadd.f32 %v5792, %v5793
        %v5795 = vsel %vm1928, %v5781, 0.0
        %v5796 = vadd.f32 %v5794, %v5795
        %v5797 = vrot.slane %v5796, 4
        %v5798 = vadd.f32 %v5796, %v5797
        %v5799 = vrot.slane %v5798, 2
        %v5800 = vadd.f32 %v5798, %v5799
        %v5801 = vrot.slane %v5800, 1
        %v5802 = vadd.f32 %v5800, %v5801
        %5803 = vst.msk [vmem:[%s466] sm:$0x1] %vm5772, %v5802
        %p5804 = scmp.lt.s32.totalorder %s30, 1
        %s5805 = scalar_select %p5804, %s30, 1
        %p5806 = scmp.lt.s32.totalorder %s31, 7
        %s5807 = scalar_select %p5806, %s31, 7
        %s5808 = smul.addr %s5807, 8
        %s5809 = smul.addr %s5805, 64
        %s5810 = sadd.s32 %s5808, %s5809
        %s5811 = smul.addr %s5810, 8
        %s5812 = scalar_lea.vmem %s6, %s5811
        %s5813 = sand.u32 %s245, 1
        %s5814 = scalar_lea.sflag [#allocation3], %s5813
        %s5815 = sand.u32 %s245, 1
        %s5816 = scalar_lea.vmem [#allocation2], %s5815
        %s5817 = sand.u32 %s273, 1
        %s5818 = scalar_lea.sflag [#allocation5], %s5817
        %s5819 = sand.u32 %s273, 1
        %s5820 = scalar_lea.vmem [#allocation4], %s5819
        // Predicated region
        $region45: #{tpu_custom_call.1} parent=43 // pred_check
          %p5821 = pneg %p227
        $region46: #{tpu_custom_call.1} parent=43 // pred_check_branch
          %5823 = sbr.rel (%p5821) target = $region48
        $region47: #{tpu_custom_call.1} parent=43 // pred_region
          _
        $region48: #{tpu_custom_call.1} parent=43 // pred_fallthru
          _
        // Predicated region
        $region49: #{tpu_custom_call.1} parent=43 // pred_check
          %p5824 = pneg %p255
        $region50: #{tpu_custom_call.1} parent=43 // pred_check_branch
          %5826 = sbr.rel (%p5824) target = $region52
        $region51: #{tpu_custom_call.1} parent=43 // pred_region
          %s5828 = ssub.s32 16, 16
          %5829 = vsyncadd %s5814, %s5828
          %s5830 = smul.addr %s30, 8
          %s5831 = sadd.s32 %s31, %s5830
          %s5832 = smul.addr %s5831, 16
          %s5833 = scalar_lea.hbm %s7, %s5832
          %s5835 = sshll.u32 %s5816, 4
          %s5836 = int_to_ptr.vmem [resolvable:$true] %s5835
          %5838 = dma.vmem_to_hbm [thread:$0]  %s5836, 16, %s5833, %s5814
        $region52: #{tpu_custom_call.1} parent=43 // pred_fallthru
          _
        // Predicated region
        $region53: #{tpu_custom_call.1} parent=43 // pred_check
          %p5839 = pneg %p283
        $region54: #{tpu_custom_call.1} parent=43 // pred_check_branch
          %5841 = sbr.rel (%p5839) target = $region56
        $region55: #{tpu_custom_call.1} parent=43 // pred_region
          %s5843 = ssub.s32 16, 16
          %5844 = vsyncadd %s5818, %s5843
          %s5845 = smul.addr %s30, 8
          %s5846 = sadd.s32 %s31, %s5845
          %s5847 = smul.addr %s5846, 16
          %s5848 = scalar_lea.hbm %s8, %s5847
          %s5850 = sshll.u32 %s5820, 4
          %s5851 = int_to_ptr.vmem [resolvable:$true] %s5850
          %5853 = dma.vmem_to_hbm [thread:$0]  %s5851, 16, %s5848, %s5818
        $region56: #{tpu_custom_call.1} parent=43 // pred_fallthru
          _
      $region44: #{tpu_custom_call.1} parent=5 // pred_fallthru
        _
      %p5854 = scmp.le.s32.totalorder 2, %s21
      // Predicated region
      $region57: #{tpu_custom_call.1} parent=5 // pred_check
        %p5855 = pneg %p5854
      $region58: #{tpu_custom_call.1} parent=5 // pred_check_branch
        %5857 = sbr.rel (%p5855) target = $region60
      $region59: #{tpu_custom_call.1} parent=5 // pred_region
        %s5858 = ssub.s32 %s21, 2
        // Predicated region
        $region61: #{tpu_custom_call.1} parent=59 // pred_check
          %p5859 = pneg %p233
        $region62: #{tpu_custom_call.1} parent=59 // pred_check_branch
          %5861 = sbr.rel (%p5859) target = $region64
        $region63: #{tpu_custom_call.1} parent=59 // pred_region
          %p5862 = scmp.lt.s32.totalorder %s32, 1
          %s5863 = scalar_select %p5862, %s32, 1
          %p5864 = scmp.lt.s32.totalorder %s33, 7
          %s5865 = scalar_select %p5864, %s33, 7
          %s5866 = smul.addr %s5865, 8
          %s5867 = smul.addr %s5863, 64
          %s5868 = sadd.s32 %s5866, %s5867
          %s5869 = smul.addr %s5868, 8
          %s5870 = scalar_lea.vmem %s6, %s5869
        $region64: #{tpu_custom_call.1} parent=59 // pred_fallthru
          _
        // Predicated region
        $region65: #{tpu_custom_call.1} parent=59 // pred_check
          %p5871 = pneg %p261
        $region66: #{tpu_custom_call.1} parent=59 // pred_check_branch
          %5873 = sbr.rel (%p5871) target = $region68
        $region67: #{tpu_custom_call.1} parent=59 // pred_region
          %s5874 = sand.u32 %s246, 1
          %s5875 = scalar_lea.sflag [#allocation3], %s5874
          %s5876 = sand.u32 %s246, 1
          %s5877 = scalar_lea.vmem [#allocation2], %s5876
          %5878 = dma.done %s5875, 16
        $region68: #{tpu_custom_call.1} parent=59 // pred_fallthru
          _
        // Predicated region
        $region69: #{tpu_custom_call.1} parent=59 // pred_check
          %p5879 = pneg %p289
        $region70: #{tpu_custom_call.1} parent=59 // pred_check_branch
          %5881 = sbr.rel (%p5879) target = $region72
        $region71: #{tpu_custom_call.1} parent=59 // pred_region
          %s5882 = sand.u32 %s274, 1
          %s5883 = scalar_lea.sflag [#allocation5], %s5882
          %s5884 = sand.u32 %s274, 1
          %s5885 = scalar_lea.vmem [#allocation4], %s5884
          %5886 = dma.done %s5883, 16
        $region72: #{tpu_custom_call.1} parent=59 // pred_fallthru
          _
      $region60: #{tpu_custom_call.1} parent=5 // pred_fallthru
        _
    $region6: #{tpu_custom_call.1} parent=1 // loop_footer
      %s25 = sadd.s32 1, %s21
    $region7: #{tpu_custom_call.1} parent=1 // loop_footer_branch
      %20 = sbr.rel target = $region3
    $region8: #{tpu_custom_call.1} parent=1 // loop_exit
      _
    %5887 = vsyncpa [#allocation3], 1
    %s5888 = scalar_lea.sflag [#allocation3], 1
    %5889 = vsyncpa %s5888, 1
    %5890 = vsyncpa [#allocation5], 1
    %s5891 = scalar_lea.sflag [#allocation5], 1
    %5892 = vsyncpa %s5891, 1

</llo_original>
